<compile_context>
chip_gen: v5e
topology: v5e:2x2
jax: 0.10.0
libtpu: 0.0.40
codegen_flags: <defaults>
</compile_context>

<pallas_src>
import functools

import jax
import jax.numpy as jnp
from jax.experimental import pallas as pl
from jax.experimental.pallas import tpu as pltpu


def _round_up(x, m):
    return (x + m - 1) // m * m


def _largest_divisor_leq(n, cap):
    d = min(n, cap)
    while n % d:
        d -= 1
    return d


# ------------------- Embedding: DMA row gather (HBM -> VMEM) -------------------
def _embed_gather_kernel(ids_ref, table_ref, out_ref, sem, *, chunk):
    """Gather `chunk` embedding rows for this grid step via async DMAs.

    ids_ref:   SMEM (N,) int32 token ids (scalar prefetch)
    table_ref: HBM (V, E) embedding table (memory_space=pl.ANY, never in VMEM)
    out_ref:   VMEM (chunk, E) output block
    """
    base = pl.program_id(0) * chunk

    # Issue every row copy first (all DMAs in flight), then wait for all of
    # them -- the copy descriptors are identical in size, so waiting `chunk`
    # times on the shared semaphore retires them in order of completion.
    @pl.loop(0, chunk)
    def _(r):
        pltpu.make_async_copy(
            table_ref.at[ids_ref[base + r]], out_ref.at[r], sem
        ).start()

    @pl.loop(0, chunk)
    def _(r):
        pltpu.make_async_copy(
            table_ref.at[ids_ref[base + r]], out_ref.at[r], sem
        ).wait()


def embedding_gather(ids_flat, table, *, max_chunk=128):
    n = ids_flat.shape[0]
    e = table.shape[1]
    chunk = _largest_divisor_leq(n, max_chunk)
    return pl.pallas_call(
        functools.partial(_embed_gather_kernel, chunk=chunk),
        out_shape=jax.ShapeDtypeStruct((n, e), table.dtype),
        grid_spec=pltpu.PrefetchScalarGridSpec(
            num_scalar_prefetch=1,
            grid=(n // chunk,),
            in_specs=[pl.BlockSpec(memory_space=pl.ANY)],  # table stays in HBM
            out_specs=pl.BlockSpec((chunk, e), lambda i, ids: (i, 0)),
            scratch_shapes=[pltpu.SemaphoreType.DMA],
        ),
        compiler_params=pltpu.CompilerParams(dimension_semantics=("arbitrary",)),
    )(ids_flat.astype(jnp.int32), table)


# --------------------- Tiled Linear (x @ w + b) on a grid ----------------------
def _linear_kernel(x_ref, w_ref, b_ref, o_ref):
    o_ref[...] = (
        jnp.dot(x_ref[...], w_ref[...], preferred_element_type=jnp.float32)
        + b_ref[...]
    ).astype(o_ref.dtype)


def linear(x, w, b, *, tm=256, tn=512):
    """x: (M, K), w: (K, N), b: (N,). Tiled over (M, N); K kept whole."""
    m, k = x.shape
    n = w.shape[1]
    tm_ = min(tm, _round_up(m, 8))
    tn_ = min(tn, _round_up(n, 128))
    mp = _round_up(m, tm_)
    np_ = _round_up(n, tn_)
    if mp != m:
        x = jnp.pad(x, ((0, mp - m), (0, 0)))
    if np_ != n:
        w = jnp.pad(w, ((0, 0), (0, np_ - n)))
        b = jnp.pad(b, (0, np_ - n))
    out = pl.pallas_call(
        _linear_kernel,
        out_shape=jax.ShapeDtypeStruct((mp, np_), x.dtype),
        grid_spec=pltpu.PrefetchScalarGridSpec(
            num_scalar_prefetch=0,
            grid=(mp // tm_, np_ // tn_),
            in_specs=[
                pl.BlockSpec((tm_, k), lambda i, j: (i, 0)),
                pl.BlockSpec((k, tn_), lambda i, j: (0, j)),
                pl.BlockSpec((1, tn_), lambda i, j: (0, j)),
            ],
            out_specs=pl.BlockSpec((tm_, tn_), lambda i, j: (i, j)),
        ),
        compiler_params=pltpu.CompilerParams(
            dimension_semantics=("parallel", "parallel")),
    )(x, w, b.reshape(1, -1))
    return out[:m, :n]


# ------------------- LSTM recurrence (input projection hoisted) ----------------
def _lstm_recur_kernel(gx_ref, whh_ref, h0_ref, c0_ref,
                       y_ref, hn_ref, cn_ref, h_sc, c_sc, *, hidden, t_chunk):
    """Per grid step: t_chunk timesteps of  h,c = cell(gx[t] + h @ W_hh, c)."""
    j = pl.program_id(0)

    @pl.when(j == 0)
    def _():
        h_sc[...] = h0_ref[...].astype(jnp.float32)
        c_sc[...] = c0_ref[...].astype(jnp.float32)

    def step(t, carry):
        # (Bp, H) @ (H, 4H) on the MXU; gx already holds x@W_ih + (b_ih+b_hh).
        gates = gx_ref[t].astype(jnp.float32) + jnp.dot(
            h_sc[...].astype(whh_ref.dtype), whh_ref[...],
            preferred_element_type=jnp.float32)
        # PyTorch gate order: input, forget, cell(g), output.
        # Static slices; lane-aligned because hidden % 128 == 0.
        i = jax.nn.sigmoid(gates[:, 0:hidden])
        f = jax.nn.sigmoid(gates[:, hidden:2 * hidden])
        g = jnp.tanh(gates[:, 2 * hidden:3 * hidden])
        o = jax.nn.sigmoid(gates[:, 3 * hidden:4 * hidden])
        c = f * c_sc[...] + i * g
        h = o * jnp.tanh(c)
        h_sc[...] = h
        c_sc[...] = c
        y_ref[t] = h.astype(y_ref.dtype)
        return carry

    # Unrolled so the LLO scheduler can overlap the EUP transcendentals of step
    # t with the MXU matmul of step t+1's independent slices.
    jax.lax.fori_loop(0, t_chunk, step, 0, unroll=True)

    # h_n / c_n are resident outputs (constant block index): store once, at the end.
    @pl.when(j == pl.num_programs(0) - 1)
    def _():
        hn_ref[...] = h_sc[...].astype(hn_ref.dtype)
        cn_ref[...] = c_sc[...].astype(cn_ref.dtype)


def lstm_recurrence(gx, w_hh, h0, c0, *, max_t_chunk=16):
    """gx: (S, Bp, 4H) precomputed x @ W_ih + b (time-major); w_hh: (H, 4H)."""
    s, bp, g4 = gx.shape
    hid = w_hh.shape[0]
    t_chunk = _largest_divisor_leq(s, max_t_chunk)
    kernel = functools.partial(_lstm_recur_kernel, hidden=hid, t_chunk=t_chunk)
    y, hn, cn = pl.pallas_call(
        kernel,
        out_shape=(
            jax.ShapeDtypeStruct((s, bp, hid), gx.dtype),
            jax.ShapeDtypeStruct((bp, hid), gx.dtype),
            jax.ShapeDtypeStruct((bp, hid), gx.dtype),
        ),
        grid_spec=pltpu.PrefetchScalarGridSpec(
            num_scalar_prefetch=0,
            grid=(s // t_chunk,),
            in_specs=[
                pl.BlockSpec((t_chunk, bp, g4), lambda j: (j, 0, 0)),
                pl.BlockSpec((hid, g4), lambda j: (0, 0)),   # constant -> stays resident
                pl.BlockSpec((bp, hid), lambda j: (0, 0)),
                pl.BlockSpec((bp, hid), lambda j: (0, 0)),
            ],
            out_specs=[
                pl.BlockSpec((t_chunk, bp, hid), lambda j: (j, 0, 0)),
                pl.BlockSpec((bp, hid), lambda j: (0, 0)),
                pl.BlockSpec((bp, hid), lambda j: (0, 0)),
            ],
            scratch_shapes=[
                pltpu.VMEM((bp, hid), jnp.float32),
                pltpu.VMEM((bp, hid), jnp.float32),
            ],
        ),
        compiler_params=pltpu.CompilerParams(dimension_semantics=("arbitrary",)),
    )(gx, w_hh, h0, c0)
    return y, hn, cn


# --------------------------------- Full forward ---------------------------------
def rnn_forward(x_ids, params):
    """x_ids: (B, S) int32 token ids. Returns (logits (B,S,V), (h_n, c_n))."""
    bsz, seq = x_ids.shape
    bp = _round_up(bsz, 8)                       # pad batch to the sublane count

    # Lay ids out time-major (S, Bp): the whole pipeline stays time-major so no
    # activation transposes through HBM are needed until the final batch_first
    # logits reorder.
    ids_tm = jnp.transpose(x_ids).astype(jnp.int32)             # (S, B)
    if bp != bsz:
        ids_tm = jnp.pad(ids_tm, ((0, 0), (0, bp - bsz)))       # pad with id 0
    ids_flat = ids_tm.reshape(-1)                               # (S*Bp,)

    emb = embedding_gather(ids_flat, params["embedding"])       # (S*Bp, E)

    hid = params["lstm"][0]["w_hh"].shape[0]
    h0 = jnp.zeros((bp, hid), jnp.float32)
    c0 = jnp.zeros((bp, hid), jnp.float32)

    x_flat = emb
    h_list, c_list = [], []
    for p in params["lstm"]:
        # Hoisted input projection: one big MXU matmul for the whole sequence.
        gx = linear(x_flat, p["w_ih"], p["b"])                  # (S*Bp, 4H)
        y, hn, cn = lstm_recurrence(
            gx.reshape(seq, bp, 4 * hid), p["w_hh"], h0, c0)
        x_flat = y.reshape(seq * bp, hid)
        h_list.append(hn)
        c_list.append(cn)

    logits_flat = linear(x_flat, params["lin_w"], params["lin_b"])   # (S*Bp, V)
    vocab = params["lin_w"].shape[1]
    logits = logits_flat.reshape(seq, bp, vocab)[:, :bsz]
    logits = jnp.transpose(logits, (1, 0, 2))                   # batch_first (B,S,V)

    h_n = jnp.stack(h_list)[:, :bsz]
    c_n = jnp.stack(c_list)[:, :bsz]
    return logits, (h_n, c_n)


# ------------------------------ Pure-JAX reference ------------------------------
def rnn_reference(x_ids, params):
    bsz, s = x_ids.shape
    emb = params["embedding"][x_ids]                            # (B, S, E)
    layer_in = jnp.transpose(emb, (1, 0, 2))
    hid = params["lstm"][0]["w_hh"].shape[0]
    hs, cs = [], []
    for p in params["lstm"]:
        h = jnp.zeros((bsz, hid), jnp.float32)
        c = jnp.zeros((bsz, hid), jnp.float32)
        ys = []
        for t in range(s):
            gates = layer_in[t] @ p["w_ih"] + h @ p["w_hh"] + p["b"]
            i = jax.nn.sigmoid(gates[:, 0:hid])
            f = jax.nn.sigmoid(gates[:, hid:2 * hid])
            g = jnp.tanh(gates[:, 2 * hid:3 * hid])
            o = jax.nn.sigmoid(gates[:, 3 * hid:4 * hid])
            c = f * c + i * g
            h = o * jnp.tanh(c)
            ys.append(h)
        layer_in = jnp.stack(ys)
        hs.append(h)
        cs.append(c)
    out = jnp.transpose(layer_in, (1, 0, 2))
    logits = out @ params["lin_w"] + params["lin_b"]
    return logits, (jnp.stack(hs), jnp.stack(cs))


# --------------------------------- Param init -----------------------------------
def init_params(key, vocab, emb_dim, num_layers, hid):
    keys = jax.random.split(key, 3 + 4 * num_layers)
    k = 1.0 / jnp.sqrt(hid)
    params = {
        "embedding": jax.random.normal(keys[0], (vocab, emb_dim), jnp.float32),
        "lstm": [],
        # Linear stored pre-transposed: (H, V)
        "lin_w": jax.random.uniform(keys[1], (hid, vocab), jnp.float32, -k, k),
        "lin_b": jax.random.uniform(keys[2], (vocab,), jnp.float32, -k, k),
    }
    for layer in range(num_layers):
        in_dim = emb_dim if layer == 0 else hid
        kk = keys[3 + 4 * layer: 3 + 4 * (layer + 1)]
        # stored pre-transposed: W_ih (in_dim, 4H), W_hh (H, 4H); b = b_ih + b_hh
        w_ih = jax.random.uniform(kk[0], (in_dim, 4 * hid), jnp.float32, -k, k)
        w_hh = jax.random.uniform(kk[1], (hid, 4 * hid), jnp.float32, -k, k)
        b_ih = jax.random.uniform(kk[2], (4 * hid,), jnp.float32, -k, k)
        b_hh = jax.random.uniform(kk[3], (4 * hid,), jnp.float32, -k, k)
        params["lstm"].append({"w_ih": w_ih, "w_hh": w_hh, "b": b_ih + b_hh})
    return params


if __name__ == "__main__":
    # Small demo shapes; hidden=128 keeps the gate slices lane-aligned.
    VOCAB, EMB, LAYERS, HID = 48, 32, 2, 128
    BATCH, SEQ = 2, 8

    key = jax.random.PRNGKey(0)
    pkey, xkey = jax.random.split(key)
    params = init_params(pkey, VOCAB, EMB, LAYERS, HID)
    x_ids = jax.random.randint(xkey, (BATCH, SEQ), 0, VOCAB, dtype=jnp.int32)

    fwd = jax.jit(rnn_forward)
    logits, (h_n, c_n) = fwd(x_ids, params)
    jax.block_until_ready((logits, h_n, c_n))

    ref_logits, (ref_h, ref_c) = rnn_reference(x_ids, params)
    assert logits.shape == (BATCH, SEQ, VOCAB)
    assert h_n.shape == (LAYERS, BATCH, HID) and c_n.shape == (LAYERS, BATCH, HID)
    assert jnp.allclose(logits, ref_logits, atol=1e-3, rtol=1e-3)
    assert jnp.allclose(h_n, ref_h, atol=1e-3, rtol=1e-3)
    assert jnp.allclose(c_n, ref_c, atol=1e-3, rtol=1e-3)

    print("KERNEL_OK")
</pallas_src>

<mosaic_0001>
module attributes {stable_mosaic.version = 11 : i64} {
  func.func @_linear_kernel(%arg0: i32, %arg1: i32, %arg2: memref<64x32xf32, #tpu.memory_space<vmem>>, %arg3: memref<32x512xf32, #tpu.memory_space<vmem>>, %arg4: memref<1x512xf32, #tpu.memory_space<vmem>>, %arg5: memref<64x512xf32, #tpu.memory_space<vmem>>) attributes {dimension_semantics = [#tpu.dimension_semantics<parallel>, #tpu.dimension_semantics<parallel>], iteration_bounds = array<i64: 1, 1>, scalar_prefetch = 0 : i64, scratch_operands = 0 : i64, tpu.core_type = #tpu.core_type<tc>, window_params = [{transform_indices = @transform_0, window_bounds = array<i64: 64, 32>}, {transform_indices = @transform_1, window_bounds = array<i64: 32, 512>}, {transform_indices = @transform_2, window_bounds = array<i64: 1, 512>}, {transform_indices = @transform_3, window_bounds = array<i64: 64, 512>}]} {
    %c0 = arith.constant 0 : index
    %c0_0 = arith.constant 0 : index
    %0 = vector.load %arg2[%c0, %c0_0] : memref<64x32xf32, #tpu.memory_space<vmem>>, vector<64x32xf32>
    %c0_1 = arith.constant 0 : index
    %c0_2 = arith.constant 0 : index
    %1 = vector.load %arg3[%c0_1, %c0_2] : memref<32x512xf32, #tpu.memory_space<vmem>>, vector<32x512xf32>
    %cst = arith.constant dense<0.000000e+00> : vector<64x512xf32>
    %2 = tpu.matmul %0, %1, %cst {dimension_numbers = #tpu.dot_dimension_numbers<[1], [0], [0], [1], [0, 0, 1, 1], [], []>} : vector<64x32xf32>, vector<32x512xf32>, vector<64x512xf32> -> vector<64x512xf32>
    %c0_3 = arith.constant 0 : index
    %c0_4 = arith.constant 0 : index
    %3 = vector.load %arg4[%c0_3, %c0_4] : memref<1x512xf32, #tpu.memory_space<vmem>>, vector<1x512xf32>
    %4 = vector.broadcast %3 : vector<1x512xf32> to vector<64x512xf32>
    %5 = arith.addf %2, %4 : vector<64x512xf32>
    %c0_5 = arith.constant 0 : index
    %c0_6 = arith.constant 0 : index
    %6 = vector.load %arg5[%c0_5, %c0_6] : memref<64x512xf32, #tpu.memory_space<vmem>>, vector<64x512xf32>
    tpu.vector_store %arg5[%c0_5, %c0_6], %5 {strides = array<i32>} : memref<64x512xf32, #tpu.memory_space<vmem>>, vector<64x512xf32>,
    return
  }
  func.func @transform_0(%arg0: i32, %arg1: i32) -> (i32, i32) {
    %c0_i32 = arith.constant 0 : i32
    %c0_i32_0 = arith.constant 0 : i32
    return %arg0, %c0_i32 : i32, i32
  }
  func.func @transform_1(%arg0: i32, %arg1: i32) -> (i32, i32) {
    %c0_i32 = arith.constant 0 : i32
    %c0_i32_0 = arith.constant 0 : i32
    return %c0_i32, %arg1 : i32, i32
  }
  func.func @transform_2(%arg0: i32, %arg1: i32) -> (i32, i32) {
    %c0_i32 = arith.constant 0 : i32
    %c0_i32_0 = arith.constant 0 : i32
    return %c0_i32, %arg1 : i32, i32
  }
  func.func @transform_3(%arg0: i32, %arg1: i32) -> (i32, i32) {
    %c0_i32 = arith.constant 0 : i32
    return %arg0, %arg1 : i32, i32
  }
}

module attributes {stable_mosaic.version = 11 : i64} {
  func.func @_embed_gather_kernel(%arg0: i32, %arg1: memref<64xi32, #tpu.memory_space<smem>>, %arg2: memref<48x32xf32, #tpu.memory_space<any>>, %arg3: memref<64x32xf32, #tpu.memory_space<vmem>>, %arg4: memref<!tpu.dma_semaphore, #tpu.memory_space<semaphore_mem>>) attributes {dimension_semantics = [#tpu.dimension_semantics<arbitrary>], iteration_bounds = array<i64: 1>, scalar_prefetch = 1 : i64, scratch_operands = 1 : i64, tpu.core_type = #tpu.core_type<tc>, window_params = [{}, {transform_indices = @transform_1, window_bounds = array<i64: 64, 32>}]} {
    %c64_i32 = arith.constant 64 : i32
    %0 = arith.muli %arg0, %c64_i32 : i32
    %c0_i32 = arith.constant 0 : i32
    %c64_i32_0 = arith.constant 64 : i32
    %1 = arith.addi %c0_i32, %c64_i32_0 : i32
    %c1_i32 = arith.constant 1 : i32
    scf.for %arg5 = %c0_i32 to %1 step %c1_i32  : i32 {
      %c1_i32_6 = arith.constant 1 : i32
      %3 = arith.muli %arg5, %c1_i32_6 : i32
      %c0_i32_7 = arith.constant 0 : i32
      %4 = arith.addi %c0_i32_7, %3 : i32
      %5 = arith.addi %0, %4 : i32
      %6 = arith.index_cast %5 : i32 to index
      %7 = memref.load %arg1[%6] : memref<64xi32, #tpu.memory_space<smem>>
      %c0_i32_8 = arith.constant 0 : i32
      %8 = tpu.memref_slice %arg2[%7, %c0_i32_8] : memref<48x32xf32, #tpu.memory_space<any>> -> memref<1x32xf32, #tpu.memory_space<any>>
      %9 = tpu.memref_squeeze %8 : memref<1x32xf32, #tpu.memory_space<any>> -> memref<32xf32, #tpu.memory_space<any>>
      %c0_i32_9 = arith.constant 0 : i32
      %10 = tpu.memref_slice %arg3[%4, %c0_i32_9] : memref<64x32xf32, #tpu.memory_space<vmem>> -> memref<1x32xf32, #tpu.memory_space<vmem>>
      %11 = tpu.memref_squeeze %10 : memref<1x32xf32, #tpu.memory_space<vmem>> -> memref<32xf32, #tpu.memory_space<vmem>>
      tpu.enqueue_dma source(%9 : memref<32xf32, #tpu.memory_space<any>>) target(%11 : memref<32xf32, #tpu.memory_space<vmem>>) target_semaphore(%arg4 : memref<!tpu.dma_semaphore, #tpu.memory_space<semaphore_mem>>)
    }
    %c64_i32_1 = arith.constant 64 : i32
    %c0_i32_2 = arith.constant 0 : i32
    %c64_i32_3 = arith.constant 64 : i32
    %2 = arith.addi %c0_i32_2, %c64_i32_3 : i32
    %c1_i32_4 = arith.constant 1 : i32
    scf.for %arg5 = %c0_i32_2 to %2 step %c1_i32_4  : i32 {
      %c1_i32_6 = arith.constant 1 : i32
      %3 = arith.muli %arg5, %c1_i32_6 : i32
      %c0_i32_7 = arith.constant 0 : i32
      %4 = arith.addi %c0_i32_7, %3 : i32
      %5 = arith.addi %0, %4 : i32
      %6 = arith.index_cast %5 : i32 to index
      %7 = memref.load %arg1[%6] : memref<64xi32, #tpu.memory_space<smem>>
      %c0_i32_8 = arith.constant 0 : i32
      %8 = tpu.memref_slice %arg2[%7, %c0_i32_8] : memref<48x32xf32, #tpu.memory_space<any>> -> memref<1x32xf32, #tpu.memory_space<any>>
      %9 = tpu.memref_squeeze %8 : memref<1x32xf32, #tpu.memory_space<any>> -> memref<32xf32, #tpu.memory_space<any>>
      %c0_i32_9 = arith.constant 0 : i32
      %10 = tpu.memref_slice %arg3[%4, %c0_i32_9] : memref<64x32xf32, #tpu.memory_space<vmem>> -> memref<1x32xf32, #tpu.memory_space<vmem>>
      %11 = tpu.memref_squeeze %10 : memref<1x32xf32, #tpu.memory_space<vmem>> -> memref<32xf32, #tpu.memory_space<vmem>>
      tpu.wait_dma2 semaphore(%arg4 : memref<!tpu.dma_semaphore, #tpu.memory_space<semaphore_mem>>) src(%9 : memref<32xf32, #tpu.memory_space<any>>) dst(%11 : memref<32xf32, #tpu.memory_space<vmem>>)
    }
    %c64_i32_5 = arith.constant 64 : i32
    return
  }
  func.func @transform_1(%arg0: i32, %arg1: memref<64xi32, #tpu.memory_space<smem>>) -> (i32, i32) {
    %c0_i32 = arith.constant 0 : i32
    %c0_i32_0 = arith.constant 0 : i32
    return %arg0, %c0_i32 : i32, i32
  }
}

module attributes {stable_mosaic.version = 11 : i64} {
  func.func @_linear_kernel(%arg0: i32, %arg1: i32, %arg2: memref<64x128xf32, #tpu.memory_space<vmem>>, %arg3: memref<128x512xf32, #tpu.memory_space<vmem>>, %arg4: memref<1x512xf32, #tpu.memory_space<vmem>>, %arg5: memref<64x512xf32, #tpu.memory_space<vmem>>) attributes {dimension_semantics = [#tpu.dimension_semantics<parallel>, #tpu.dimension_semantics<parallel>], iteration_bounds = array<i64: 1, 1>, scalar_prefetch = 0 : i64, scratch_operands = 0 : i64, tpu.core_type = #tpu.core_type<tc>, window_params = [{transform_indices = @transform_0, window_bounds = array<i64: 64, 128>}, {transform_indices = @transform_1, window_bounds = array<i64: 128, 512>}, {transform_indices = @transform_2, window_bounds = array<i64: 1, 512>}, {transform_indices = @transform_3, window_bounds = array<i64: 64, 512>}]} {
    %c0 = arith.constant 0 : index
    %c0_0 = arith.constant 0 : index
    %0 = vector.load %arg2[%c0, %c0_0] : memref<64x128xf32, #tpu.memory_space<vmem>>, vector<64x128xf32>
    %c0_1 = arith.constant 0 : index
    %c0_2 = arith.constant 0 : index
    %1 = vector.load %arg3[%c0_1, %c0_2] : memref<128x512xf32, #tpu.memory_space<vmem>>, vector<128x512xf32>
    %cst = arith.constant dense<0.000000e+00> : vector<64x512xf32>
    %2 = tpu.matmul %0, %1, %cst {dimension_numbers = #tpu.dot_dimension_numbers<[1], [0], [0], [1], [0, 0, 1, 1], [], []>} : vector<64x128xf32>, vector<128x512xf32>, vector<64x512xf32> -> vector<64x512xf32>
    %c0_3 = arith.constant 0 : index
    %c0_4 = arith.constant 0 : index
    %3 = vector.load %arg4[%c0_3, %c0_4] : memref<1x512xf32, #tpu.memory_space<vmem>>, vector<1x512xf32>
    %4 = vector.broadcast %3 : vector<1x512xf32> to vector<64x512xf32>
    %5 = arith.addf %2, %4 : vector<64x512xf32>
    %c0_5 = arith.constant 0 : index
    %c0_6 = arith.constant 0 : index
    %6 = vector.load %arg5[%c0_5, %c0_6] : memref<64x512xf32, #tpu.memory_space<vmem>>, vector<64x512xf32>
    tpu.vector_store %arg5[%c0_5, %c0_6], %5 {strides = array<i32>} : memref<64x512xf32, #tpu.memory_space<vmem>>, vector<64x512xf32>,
    return
  }
  func.func @transform_0(%arg0: i32, %arg1: i32) -> (i32, i32) {
    %c0_i32 = arith.constant 0 : i32
    %c0_i32_0 = arith.constant 0 : i32
    return %arg0, %c0_i32 : i32, i32
  }
  func.func @transform_1(%arg0: i32, %arg1: i32) -> (i32, i32) {
    %c0_i32 = arith.constant 0 : i32
    %c0_i32_0 = arith.constant 0 : i32
    return %c0_i32, %arg1 : i32, i32
  }
  func.func @transform_2(%arg0: i32, %arg1: i32) -> (i32, i32) {
    %c0_i32 = arith.constant 0 : i32
    %c0_i32_0 = arith.constant 0 : i32
    return %c0_i32, %arg1 : i32, i32
  }
  func.func @transform_3(%arg0: i32, %arg1: i32) -> (i32, i32) {
    %c0_i32 = arith.constant 0 : i32
    return %arg0, %arg1 : i32, i32
  }
}

module attributes {stable_mosaic.version = 11 : i64} {
  func.func @_lstm_recur_kernel(%arg0: i32, %arg1: memref<8x8x512xf32, #tpu.memory_space<vmem>>, %arg2: memref<128x512xf32, #tpu.memory_space<vmem>>, %arg3: memref<8x128xf32, #tpu.memory_space<vmem>>, %arg4: memref<8x128xf32, #tpu.memory_space<vmem>>, %arg5: memref<8x8x128xf32, #tpu.memory_space<vmem>>, %arg6: memref<8x128xf32, #tpu.memory_space<vmem>>, %arg7: memref<8x128xf32, #tpu.memory_space<vmem>>, %arg8: memref<8x128xf32, #tpu.memory_space<vmem>>, %arg9: memref<8x128xf32, #tpu.memory_space<vmem>>) attributes {dimension_semantics = [#tpu.dimension_semantics<arbitrary>], iteration_bounds = array<i64: 1>, scalar_prefetch = 0 : i64, scratch_operands = 2 : i64, tpu.core_type = #tpu.core_type<tc>, window_params = [{transform_indices = @transform_0, window_bounds = array<i64: 8, 8, 512>}, {pipeline_mode = #tpu.pipeline_mode<synchronous>, transform_indices = @transform_1, window_bounds = array<i64: 128, 512>}, {pipeline_mode = #tpu.pipeline_mode<synchronous>, transform_indices = @transform_2, window_bounds = array<i64: 8, 128>}, {pipeline_mode = #tpu.pipeline_mode<synchronous>, transform_indices = @transform_3, window_bounds = array<i64: 8, 128>}, {transform_indices = @transform_4, window_bounds = array<i64: 8, 8, 128>}, {pipeline_mode = #tpu.pipeline_mode<synchronous>, transform_indices = @transform_5, window_bounds = array<i64: 8, 128>}, {pipeline_mode = #tpu.pipeline_mode<synchronous>, transform_indices = @transform_6, window_bounds = array<i64: 8, 128>}]} {
    %c0_i32 = arith.constant 0 : i32
    %0 = arith.cmpi eq, %arg0, %c0_i32 : i32
    %1 = arith.extui %0 : i1 to i32
    %c0_i32_0 = arith.constant 0 : i32
    %2 = arith.cmpi ne, %1, %c0_i32_0 : i32
    scf.if %2 {
      %c0_146 = arith.constant 0 : index
      %c0_147 = arith.constant 0 : index
      %318 = vector.load %arg3[%c0_146, %c0_147] : memref<8x128xf32, #tpu.memory_space<vmem>>, vector<8x128xf32>
      %c0_148 = arith.constant 0 : index
      %c0_149 = arith.constant 0 : index
      %319 = vector.load %arg8[%c0_148, %c0_149] : memref<8x128xf32, #tpu.memory_space<vmem>>, vector<8x128xf32>
      tpu.vector_store %arg8[%c0_148, %c0_149], %318 {strides = array<i32>} : memref<8x128xf32, #tpu.memory_space<vmem>>, vector<8x128xf32>,
      %c0_150 = arith.constant 0 : index
      %c0_151 = arith.constant 0 : index
      %320 = vector.load %arg4[%c0_150, %c0_151] : memref<8x128xf32, #tpu.memory_space<vmem>>, vector<8x128xf32>
      %c0_152 = arith.constant 0 : index
      %c0_153 = arith.constant 0 : index
      %321 = vector.load %arg9[%c0_152, %c0_153] : memref<8x128xf32, #tpu.memory_space<vmem>>, vector<8x128xf32>
      tpu.vector_store %arg9[%c0_152, %c0_153], %320 {strides = array<i32>} : memref<8x128xf32, #tpu.memory_space<vmem>>, vector<8x128xf32>,
    } else {
    }
    %c0_i32_1 = arith.constant 0 : i32
    %3 = arith.index_cast %c0_i32_1 : i32 to index
    %c0 = arith.constant 0 : index
    %c0_2 = arith.constant 0 : index
    %4 = vector.load %arg1[%3, %c0, %c0_2] : memref<8x8x512xf32, #tpu.memory_space<vmem>>, vector<1x8x512xf32>
    %5 = vector.shape_cast %4 : vector<1x8x512xf32> to vector<8x512xf32>
    %c0_3 = arith.constant 0 : index
    %c0_4 = arith.constant 0 : index
    %6 = vector.load %arg8[%c0_3, %c0_4] : memref<8x128xf32, #tpu.memory_space<vmem>>, vector<8x128xf32>
    %c0_5 = arith.constant 0 : index
    %c0_6 = arith.constant 0 : index
    %7 = vector.load %arg2[%c0_5, %c0_6] : memref<128x512xf32, #tpu.memory_space<vmem>>, vector<128x512xf32>
    %cst = arith.constant dense<0.000000e+00> : vector<8x512xf32>
    %8 = tpu.matmul %6, %7, %cst {dimension_numbers = #tpu.dot_dimension_numbers<[1], [0], [0], [1], [0, 0, 1, 1], [], []>} : vector<8x128xf32>, vector<128x512xf32>, vector<8x512xf32> -> vector<8x512xf32>
    %9 = arith.addf %5, %8 : vector<8x512xf32>
    %10 = vector.extract_strided_slice %9 {offsets = [0, 0], sizes = [8, 128], strides = [1, 1]} : vector<8x512xf32> to vector<8x128xf32>
    %11 = arith.negf %10 : vector<8x128xf32>
    %12 = math.exp %11 : vector<8x128xf32>
    %cst_7 = arith.constant 1.000000e+00 : f32
    %13 = vector.broadcast %cst_7 : f32 to vector<8x128xf32>
    %14 = arith.addf %13, %12 : vector<8x128xf32>
    %15 = arith.divf %13, %14 : vector<8x128xf32>
    %16 = vector.extract_strided_slice %9 {offsets = [0, 128], sizes = [8, 128], strides = [1, 1]} : vector<8x512xf32> to vector<8x128xf32>
    %17 = arith.negf %16 : vector<8x128xf32>
    %18 = math.exp %17 : vector<8x128xf32>
    %cst_8 = arith.constant 1.000000e+00 : f32
    %19 = vector.broadcast %cst_8 : f32 to vector<8x128xf32>
    %20 = arith.addf %19, %18 : vector<8x128xf32>
    %21 = arith.divf %19, %20 : vector<8x128xf32>
    %22 = vector.extract_strided_slice %9 {offsets = [0, 256], sizes = [8, 128], strides = [1, 1]} : vector<8x512xf32> to vector<8x128xf32>
    %23 = math.tanh %22 : vector<8x128xf32>
    %24 = vector.extract_strided_slice %9 {offsets = [0, 384], sizes = [8, 128], strides = [1, 1]} : vector<8x512xf32> to vector<8x128xf32>
    %25 = arith.negf %24 : vector<8x128xf32>
    %26 = math.exp %25 : vector<8x128xf32>
    %cst_9 = arith.constant 1.000000e+00 : f32
    %27 = vector.broadcast %cst_9 : f32 to vector<8x128xf32>
    %28 = arith.addf %27, %26 : vector<8x128xf32>
    %29 = arith.divf %27, %28 : vector<8x128xf32>
    %c0_10 = arith.constant 0 : index
    %c0_11 = arith.constant 0 : index
    %30 = vector.load %arg9[%c0_10, %c0_11] : memref<8x128xf32, #tpu.memory_space<vmem>>, vector<8x128xf32>
    %31 = arith.mulf %21, %30 : vector<8x128xf32>
    %32 = arith.mulf %15, %23 : vector<8x128xf32>
    %33 = arith.addf %31, %32 : vector<8x128xf32>
    %34 = math.tanh %33 : vector<8x128xf32>
    %35 = arith.mulf %29, %34 : vector<8x128xf32>
    %c0_12 = arith.constant 0 : index
    %c0_13 = arith.constant 0 : index
    %36 = vector.load %arg8[%c0_12, %c0_13] : memref<8x128xf32, #tpu.memory_space<vmem>>, vector<8x128xf32>
    tpu.vector_store %arg8[%c0_12, %c0_13], %35 {strides = array<i32>} : memref<8x128xf32, #tpu.memory_space<vmem>>, vector<8x128xf32>,
    %c0_14 = arith.constant 0 : index
    %c0_15 = arith.constant 0 : index
    %37 = vector.load %arg9[%c0_14, %c0_15] : memref<8x128xf32, #tpu.memory_space<vmem>>, vector<8x128xf32>
    tpu.vector_store %arg9[%c0_14, %c0_15], %33 {strides = array<i32>} : memref<8x128xf32, #tpu.memory_space<vmem>>, vector<8x128xf32>,
    %38 = arith.index_cast %c0_i32_1 : i32 to index
    %c0_16 = arith.constant 0 : index
    %c0_17 = arith.constant 0 : index
    %39 = vector.load %arg5[%38, %c0_16, %c0_17] : memref<8x8x128xf32, #tpu.memory_space<vmem>>, vector<1x8x128xf32>
    %40 = vector.shape_cast %39 : vector<1x8x128xf32> to vector<8x128xf32>
    %41 = vector.shape_cast %35 : vector<8x128xf32> to vector<1x8x128xf32>
    tpu.vector_store %arg5[%38, %c0_16, %c0_17], %41 {strides = array<i32>} : memref<8x8x128xf32, #tpu.memory_space<vmem>>, vector<1x8x128xf32>,
    %c1_i32 = arith.constant 1 : i32
    %42 = arith.index_cast %c1_i32 : i32 to index
    %c0_18 = arith.constant 0 : index
    %c0_19 = arith.constant 0 : index
    %43 = vector.load %arg1[%42, %c0_18, %c0_19] : memref<8x8x512xf32, #tpu.memory_space<vmem>>, vector<1x8x512xf32>
    %44 = vector.shape_cast %43 : vector<1x8x512xf32> to vector<8x512xf32>
    %c0_20 = arith.constant 0 : index
    %c0_21 = arith.constant 0 : index
    %45 = vector.load %arg8[%c0_20, %c0_21] : memref<8x128xf32, #tpu.memory_space<vmem>>, vector<8x128xf32>
    %c0_22 = arith.constant 0 : index
    %c0_23 = arith.constant 0 : index
    %46 = vector.load %arg2[%c0_22, %c0_23] : memref<128x512xf32, #tpu.memory_space<vmem>>, vector<128x512xf32>
    %cst_24 = arith.constant dense<0.000000e+00> : vector<8x512xf32>
    %47 = tpu.matmul %45, %46, %cst_24 {dimension_numbers = #tpu.dot_dimension_numbers<[1], [0], [0], [1], [0, 0, 1, 1], [], []>} : vector<8x128xf32>, vector<128x512xf32>, vector<8x512xf32> -> vector<8x512xf32>
    %48 = arith.addf %44, %47 : vector<8x512xf32>
    %49 = vector.extract_strided_slice %48 {offsets = [0, 0], sizes = [8, 128], strides = [1, 1]} : vector<8x512xf32> to vector<8x128xf32>
    %50 = arith.negf %49 : vector<8x128xf32>
    %51 = math.exp %50 : vector<8x128xf32>
    %cst_25 = arith.constant 1.000000e+00 : f32
    %52 = vector.broadcast %cst_25 : f32 to vector<8x128xf32>
    %53 = arith.addf %52, %51 : vector<8x128xf32>
    %54 = arith.divf %52, %53 : vector<8x128xf32>
    %55 = vector.extract_strided_slice %48 {offsets = [0, 128], sizes = [8, 128], strides = [1, 1]} : vector<8x512xf32> to vector<8x128xf32>
    %56 = arith.negf %55 : vector<8x128xf32>
    %57 = math.exp %56 : vector<8x128xf32>
    %cst_26 = arith.constant 1.000000e+00 : f32
    %58 = vector.broadcast %cst_26 : f32 to vector<8x128xf32>
    %59 = arith.addf %58, %57 : vector<8x128xf32>
    %60 = arith.divf %58, %59 : vector<8x128xf32>
    %61 = vector.extract_strided_slice %48 {offsets = [0, 256], sizes = [8, 128], strides = [1, 1]} : vector<8x512xf32> to vector<8x128xf32>
    %62 = math.tanh %61 : vector<8x128xf32>
    %63 = vector.extract_strided_slice %48 {offsets = [0, 384], sizes = [8, 128], strides = [1, 1]} : vector<8x512xf32> to vector<8x128xf32>
    %64 = arith.negf %63 : vector<8x128xf32>
    %65 = math.exp %64 : vector<8x128xf32>
    %cst_27 = arith.constant 1.000000e+00 : f32
    %66 = vector.broadcast %cst_27 : f32 to vector<8x128xf32>
    %67 = arith.addf %66, %65 : vector<8x128xf32>
    %68 = arith.divf %66, %67 : vector<8x128xf32>
    %c0_28 = arith.constant 0 : index
    %c0_29 = arith.constant 0 : index
    %69 = vector.load %arg9[%c0_28, %c0_29] : memref<8x128xf32, #tpu.memory_space<vmem>>, vector<8x128xf32>
    %70 = arith.mulf %60, %69 : vector<8x128xf32>
    %71 = arith.mulf %54, %62 : vector<8x128xf32>
    %72 = arith.addf %70, %71 : vector<8x128xf32>
    %73 = math.tanh %72 : vector<8x128xf32>
    %74 = arith.mulf %68, %73 : vector<8x128xf32>
    %c0_30 = arith.constant 0 : index
    %c0_31 = arith.constant 0 : index
    %75 = vector.load %arg8[%c0_30, %c0_31] : memref<8x128xf32, #tpu.memory_space<vmem>>, vector<8x128xf32>
    tpu.vector_store %arg8[%c0_30, %c0_31], %74 {strides = array<i32>} : memref<8x128xf32, #tpu.memory_space<vmem>>, vector<8x128xf32>,
    %c0_32 = arith.constant 0 : index
    %c0_33 = arith.constant 0 : index
    %76 = vector.load %arg9[%c0_32, %c0_33] : memref<8x128xf32, #tpu.memory_space<vmem>>, vector<8x128xf32>
    tpu.vector_store %arg9[%c0_32, %c0_33], %72 {strides = array<i32>} : memref<8x128xf32, #tpu.memory_space<vmem>>, vector<8x128xf32>,
    %77 = arith.index_cast %c1_i32 : i32 to index
    %c0_34 = arith.constant 0 : index
    %c0_35 = arith.constant 0 : index
    %78 = vector.load %arg5[%77, %c0_34, %c0_35] : memref<8x8x128xf32, #tpu.memory_space<vmem>>, vector<1x8x128xf32>
    %79 = vector.shape_cast %78 : vector<1x8x128xf32> to vector<8x128xf32>
    %80 = vector.shape_cast %74 : vector<8x128xf32> to vector<1x8x128xf32>
    tpu.vector_store %arg5[%77, %c0_34, %c0_35], %80 {strides = array<i32>} : memref<8x8x128xf32, #tpu.memory_space<vmem>>, vector<1x8x128xf32>,
    %c2_i32 = arith.constant 2 : i32
    %81 = arith.index_cast %c2_i32 : i32 to index
    %c0_36 = arith.constant 0 : index
    %c0_37 = arith.constant 0 : index
    %82 = vector.load %arg1[%81, %c0_36, %c0_37] : memref<8x8x512xf32, #tpu.memory_space<vmem>>, vector<1x8x512xf32>
    %83 = vector.shape_cast %82 : vector<1x8x512xf32> to vector<8x512xf32>
    %c0_38 = arith.constant 0 : index
    %c0_39 = arith.constant 0 : index
    %84 = vector.load %arg8[%c0_38, %c0_39] : memref<8x128xf32, #tpu.memory_space<vmem>>, vector<8x128xf32>
    %c0_40 = arith.constant 0 : index
    %c0_41 = arith.constant 0 : index
    %85 = vector.load %arg2[%c0_40, %c0_41] : memref<128x512xf32, #tpu.memory_space<vmem>>, vector<128x512xf32>
    %cst_42 = arith.constant dense<0.000000e+00> : vector<8x512xf32>
    %86 = tpu.matmul %84, %85, %cst_42 {dimension_numbers = #tpu.dot_dimension_numbers<[1], [0], [0], [1], [0, 0, 1, 1], [], []>} : vector<8x128xf32>, vector<128x512xf32>, vector<8x512xf32> -> vector<8x512xf32>
    %87 = arith.addf %83, %86 : vector<8x512xf32>
    %88 = vector.extract_strided_slice %87 {offsets = [0, 0], sizes = [8, 128], strides = [1, 1]} : vector<8x512xf32> to vector<8x128xf32>
    %89 = arith.negf %88 : vector<8x128xf32>
    %90 = math.exp %89 : vector<8x128xf32>
    %cst_43 = arith.constant 1.000000e+00 : f32
    %91 = vector.broadcast %cst_43 : f32 to vector<8x128xf32>
    %92 = arith.addf %91, %90 : vector<8x128xf32>
    %93 = arith.divf %91, %92 : vector<8x128xf32>
    %94 = vector.extract_strided_slice %87 {offsets = [0, 128], sizes = [8, 128], strides = [1, 1]} : vector<8x512xf32> to vector<8x128xf32>
    %95 = arith.negf %94 : vector<8x128xf32>
    %96 = math.exp %95 : vector<8x128xf32>
    %cst_44 = arith.constant 1.000000e+00 : f32
    %97 = vector.broadcast %cst_44 : f32 to vector<8x128xf32>
    %98 = arith.addf %97, %96 : vector<8x128xf32>
    %99 = arith.divf %97, %98 : vector<8x128xf32>
    %100 = vector.extract_strided_slice %87 {offsets = [0, 256], sizes = [8, 128], strides = [1, 1]} : vector<8x512xf32> to vector<8x128xf32>
    %101 = math.tanh %100 : vector<8x128xf32>
    %102 = vector.extract_strided_slice %87 {offsets = [0, 384], sizes = [8, 128], strides = [1, 1]} : vector<8x512xf32> to vector<8x128xf32>
    %103 = arith.negf %102 : vector<8x128xf32>
    %104 = math.exp %103 : vector<8x128xf32>
    %cst_45 = arith.constant 1.000000e+00 : f32
    %105 = vector.broadcast %cst_45 : f32 to vector<8x128xf32>
    %106 = arith.addf %105, %104 : vector<8x128xf32>
    %107 = arith.divf %105, %106 : vector<8x128xf32>
    %c0_46 = arith.constant 0 : index
    %c0_47 = arith.constant 0 : index
    %108 = vector.load %arg9[%c0_46, %c0_47] : memref<8x128xf32, #tpu.memory_space<vmem>>, vector<8x128xf32>
    %109 = arith.mulf %99, %108 : vector<8x128xf32>
    %110 = arith.mulf %93, %101 : vector<8x128xf32>
    %111 = arith.addf %109, %110 : vector<8x128xf32>
    %112 = math.tanh %111 : vector<8x128xf32>
    %113 = arith.mulf %107, %112 : vector<8x128xf32>
    %c0_48 = arith.constant 0 : index
    %c0_49 = arith.constant 0 : index
    %114 = vector.load %arg8[%c0_48, %c0_49] : memref<8x128xf32, #tpu.memory_space<vmem>>, vector<8x128xf32>
    tpu.vector_store %arg8[%c0_48, %c0_49], %113 {strides = array<i32>} : memref<8x128xf32, #tpu.memory_space<vmem>>, vector<8x128xf32>,
    %c0_50 = arith.constant 0 : index
    %c0_51 = arith.constant 0 : index
    %115 = vector.load %arg9[%c0_50, %c0_51] : memref<8x128xf32, #tpu.memory_space<vmem>>, vector<8x128xf32>
    tpu.vector_store %arg9[%c0_50, %c0_51], %111 {strides = array<i32>} : memref<8x128xf32, #tpu.memory_space<vmem>>, vector<8x128xf32>,
    %116 = arith.index_cast %c2_i32 : i32 to index
    %c0_52 = arith.constant 0 : index
    %c0_53 = arith.constant 0 : index
    %117 = vector.load %arg5[%116, %c0_52, %c0_53] : memref<8x8x128xf32, #tpu.memory_space<vmem>>, vector<1x8x128xf32>
    %118 = vector.shape_cast %117 : vector<1x8x128xf32> to vector<8x128xf32>
    %119 = vector.shape_cast %113 : vector<8x128xf32> to vector<1x8x128xf32>
    tpu.vector_store %arg5[%116, %c0_52, %c0_53], %119 {strides = array<i32>} : memref<8x8x128xf32, #tpu.memory_space<vmem>>, vector<1x8x128xf32>,
    %c3_i32 = arith.constant 3 : i32
    %120 = arith.index_cast %c3_i32 : i32 to index
    %c0_54 = arith.constant 0 : index
    %c0_55 = arith.constant 0 : index
    %121 = vector.load %arg1[%120, %c0_54, %c0_55] : memref<8x8x512xf32, #tpu.memory_space<vmem>>, vector<1x8x512xf32>
    %122 = vector.shape_cast %121 : vector<1x8x512xf32> to vector<8x512xf32>
    %c0_56 = arith.constant 0 : index
    %c0_57 = arith.constant 0 : index
    %123 = vector.load %arg8[%c0_56, %c0_57] : memref<8x128xf32, #tpu.memory_space<vmem>>, vector<8x128xf32>
    %c0_58 = arith.constant 0 : index
    %c0_59 = arith.constant 0 : index
    %124 = vector.load %arg2[%c0_58, %c0_59] : memref<128x512xf32, #tpu.memory_space<vmem>>, vector<128x512xf32>
    %cst_60 = arith.constant dense<0.000000e+00> : vector<8x512xf32>
    %125 = tpu.matmul %123, %124, %cst_60 {dimension_numbers = #tpu.dot_dimension_numbers<[1], [0], [0], [1], [0, 0, 1, 1], [], []>} : vector<8x128xf32>, vector<128x512xf32>, vector<8x512xf32> -> vector<8x512xf32>
    %126 = arith.addf %122, %125 : vector<8x512xf32>
    %127 = vector.extract_strided_slice %126 {offsets = [0, 0], sizes = [8, 128], strides = [1, 1]} : vector<8x512xf32> to vector<8x128xf32>
    %128 = arith.negf %127 : vector<8x128xf32>
    %129 = math.exp %128 : vector<8x128xf32>
    %cst_61 = arith.constant 1.000000e+00 : f32
    %130 = vector.broadcast %cst_61 : f32 to vector<8x128xf32>
    %131 = arith.addf %130, %129 : vector<8x128xf32>
    %132 = arith.divf %130, %131 : vector<8x128xf32>
    %133 = vector.extract_strided_slice %126 {offsets = [0, 128], sizes = [8, 128], strides = [1, 1]} : vector<8x512xf32> to vector<8x128xf32>
    %134 = arith.negf %133 : vector<8x128xf32>
    %135 = math.exp %134 : vector<8x128xf32>
    %cst_62 = arith.constant 1.000000e+00 : f32
    %136 = vector.broadcast %cst_62 : f32 to vector<8x128xf32>
    %137 = arith.addf %136, %135 : vector<8x128xf32>
    %138 = arith.divf %136, %137 : vector<8x128xf32>
    %139 = vector.extract_strided_slice %126 {offsets = [0, 256], sizes = [8, 128], strides = [1, 1]} : vector<8x512xf32> to vector<8x128xf32>
    %140 = math.tanh %139 : vector<8x128xf32>
    %141 = vector.extract_strided_slice %126 {offsets = [0, 384], sizes = [8, 128], strides = [1, 1]} : vector<8x512xf32> to vector<8x128xf32>
    %142 = arith.negf %141 : vector<8x128xf32>
    %143 = math.exp %142 : vector<8x128xf32>
    %cst_63 = arith.constant 1.000000e+00 : f32
    %144 = vector.broadcast %cst_63 : f32 to vector<8x128xf32>
    %145 = arith.addf %144, %143 : vector<8x128xf32>
    %146 = arith.divf %144, %145 : vector<8x128xf32>
    %c0_64 = arith.constant 0 : index
    %c0_65 = arith.constant 0 : index
    %147 = vector.load %arg9[%c0_64, %c0_65] : memref<8x128xf32, #tpu.memory_space<vmem>>, vector<8x128xf32>
    %148 = arith.mulf %138, %147 : vector<8x128xf32>
    %149 = arith.mulf %132, %140 : vector<8x128xf32>
    %150 = arith.addf %148, %149 : vector<8x128xf32>
    %151 = math.tanh %150 : vector<8x128xf32>
    %152 = arith.mulf %146, %151 : vector<8x128xf32>
    %c0_66 = arith.constant 0 : index
    %c0_67 = arith.constant 0 : index
    %153 = vector.load %arg8[%c0_66, %c0_67] : memref<8x128xf32, #tpu.memory_space<vmem>>, vector<8x128xf32>
    tpu.vector_store %arg8[%c0_66, %c0_67], %152 {strides = array<i32>} : memref<8x128xf32, #tpu.memory_space<vmem>>, vector<8x128xf32>,
    %c0_68 = arith.constant 0 : index
    %c0_69 = arith.constant 0 : index
    %154 = vector.load %arg9[%c0_68, %c0_69] : memref<8x128xf32, #tpu.memory_space<vmem>>, vector<8x128xf32>
    tpu.vector_store %arg9[%c0_68, %c0_69], %150 {strides = array<i32>} : memref<8x128xf32, #tpu.memory_space<vmem>>, vector<8x128xf32>,
    %155 = arith.index_cast %c3_i32 : i32 to index
    %c0_70 = arith.constant 0 : index
    %c0_71 = arith.constant 0 : index
    %156 = vector.load %arg5[%155, %c0_70, %c0_71] : memref<8x8x128xf32, #tpu.memory_space<vmem>>, vector<1x8x128xf32>
    %157 = vector.shape_cast %156 : vector<1x8x128xf32> to vector<8x128xf32>
    %158 = vector.shape_cast %152 : vector<8x128xf32> to vector<1x8x128xf32>
    tpu.vector_store %arg5[%155, %c0_70, %c0_71], %158 {strides = array<i32>} : memref<8x8x128xf32, #tpu.memory_space<vmem>>, vector<1x8x128xf32>,
    %c4_i32 = arith.constant 4 : i32
    %159 = arith.index_cast %c4_i32 : i32 to index
    %c0_72 = arith.constant 0 : index
    %c0_73 = arith.constant 0 : index
    %160 = vector.load %arg1[%159, %c0_72, %c0_73] : memref<8x8x512xf32, #tpu.memory_space<vmem>>, vector<1x8x512xf32>
    %161 = vector.shape_cast %160 : vector<1x8x512xf32> to vector<8x512xf32>
    %c0_74 = arith.constant 0 : index
    %c0_75 = arith.constant 0 : index
    %162 = vector.load %arg8[%c0_74, %c0_75] : memref<8x128xf32, #tpu.memory_space<vmem>>, vector<8x128xf32>
    %c0_76 = arith.constant 0 : index
    %c0_77 = arith.constant 0 : index
    %163 = vector.load %arg2[%c0_76, %c0_77] : memref<128x512xf32, #tpu.memory_space<vmem>>, vector<128x512xf32>
    %cst_78 = arith.constant dense<0.000000e+00> : vector<8x512xf32>
    %164 = tpu.matmul %162, %163, %cst_78 {dimension_numbers = #tpu.dot_dimension_numbers<[1], [0], [0], [1], [0, 0, 1, 1], [], []>} : vector<8x128xf32>, vector<128x512xf32>, vector<8x512xf32> -> vector<8x512xf32>
    %165 = arith.addf %161, %164 : vector<8x512xf32>
    %166 = vector.extract_strided_slice %165 {offsets = [0, 0], sizes = [8, 128], strides = [1, 1]} : vector<8x512xf32> to vector<8x128xf32>
    %167 = arith.negf %166 : vector<8x128xf32>
    %168 = math.exp %167 : vector<8x128xf32>
    %cst_79 = arith.constant 1.000000e+00 : f32
    %169 = vector.broadcast %cst_79 : f32 to vector<8x128xf32>
    %170 = arith.addf %169, %168 : vector<8x128xf32>
    %171 = arith.divf %169, %170 : vector<8x128xf32>
    %172 = vector.extract_strided_slice %165 {offsets = [0, 128], sizes = [8, 128], strides = [1, 1]} : vector<8x512xf32> to vector<8x128xf32>
    %173 = arith.negf %172 : vector<8x128xf32>
    %174 = math.exp %173 : vector<8x128xf32>
    %cst_80 = arith.constant 1.000000e+00 : f32
    %175 = vector.broadcast %cst_80 : f32 to vector<8x128xf32>
    %176 = arith.addf %175, %174 : vector<8x128xf32>
    %177 = arith.divf %175, %176 : vector<8x128xf32>
    %178 = vector.extract_strided_slice %165 {offsets = [0, 256], sizes = [8, 128], strides = [1, 1]} : vector<8x512xf32> to vector<8x128xf32>
    %179 = math.tanh %178 : vector<8x128xf32>
    %180 = vector.extract_strided_slice %165 {offsets = [0, 384], sizes = [8, 128], strides = [1, 1]} : vector<8x512xf32> to vector<8x128xf32>
    %181 = arith.negf %180 : vector<8x128xf32>
    %182 = math.exp %181 : vector<8x128xf32>
    %cst_81 = arith.constant 1.000000e+00 : f32
    %183 = vector.broadcast %cst_81 : f32 to vector<8x128xf32>
    %184 = arith.addf %183, %182 : vector<8x128xf32>
    %185 = arith.divf %183, %184 : vector<8x128xf32>
    %c0_82 = arith.constant 0 : index
    %c0_83 = arith.constant 0 : index
    %186 = vector.load %arg9[%c0_82, %c0_83] : memref<8x128xf32, #tpu.memory_space<vmem>>, vector<8x128xf32>
    %187 = arith.mulf %177, %186 : vector<8x128xf32>
    %188 = arith.mulf %171, %179 : vector<8x128xf32>
    %189 = arith.addf %187, %188 : vector<8x128xf32>
    %190 = math.tanh %189 : vector<8x128xf32>
    %191 = arith.mulf %185, %190 : vector<8x128xf32>
    %c0_84 = arith.constant 0 : index
    %c0_85 = arith.constant 0 : index
    %192 = vector.load %arg8[%c0_84, %c0_85] : memref<8x128xf32, #tpu.memory_space<vmem>>, vector<8x128xf32>
    tpu.vector_store %arg8[%c0_84, %c0_85], %191 {strides = array<i32>} : memref<8x128xf32, #tpu.memory_space<vmem>>, vector<8x128xf32>,
    %c0_86 = arith.constant 0 : index
    %c0_87 = arith.constant 0 : index
    %193 = vector.load %arg9[%c0_86, %c0_87] : memref<8x128xf32, #tpu.memory_space<vmem>>, vector<8x128xf32>
    tpu.vector_store %arg9[%c0_86, %c0_87], %189 {strides = array<i32>} : memref<8x128xf32, #tpu.memory_space<vmem>>, vector<8x128xf32>,
    %194 = arith.index_cast %c4_i32 : i32 to index
    %c0_88 = arith.constant 0 : index
    %c0_89 = arith.constant 0 : index
    %195 = vector.load %arg5[%194, %c0_88, %c0_89] : memref<8x8x128xf32, #tpu.memory_space<vmem>>, vector<1x8x128xf32>
    %196 = vector.shape_cast %195 : vector<1x8x128xf32> to vector<8x128xf32>
    %197 = vector.shape_cast %191 : vector<8x128xf32> to vector<1x8x128xf32>
    tpu.vector_store %arg5[%194, %c0_88, %c0_89], %197 {strides = array<i32>} : memref<8x8x128xf32, #tpu.memory_space<vmem>>, vector<1x8x128xf32>,
    %c5_i32 = arith.constant 5 : i32
    %198 = arith.index_cast %c5_i32 : i32 to index
    %c0_90 = arith.constant 0 : index
    %c0_91 = arith.constant 0 : index
    %199 = vector.load %arg1[%198, %c0_90, %c0_91] : memref<8x8x512xf32, #tpu.memory_space<vmem>>, vector<1x8x512xf32>
    %200 = vector.shape_cast %199 : vector<1x8x512xf32> to vector<8x512xf32>
    %c0_92 = arith.constant 0 : index
    %c0_93 = arith.constant 0 : index
    %201 = vector.load %arg8[%c0_92, %c0_93] : memref<8x128xf32, #tpu.memory_space<vmem>>, vector<8x128xf32>
    %c0_94 = arith.constant 0 : index
    %c0_95 = arith.constant 0 : index
    %202 = vector.load %arg2[%c0_94, %c0_95] : memref<128x512xf32, #tpu.memory_space<vmem>>, vector<128x512xf32>
    %cst_96 = arith.constant dense<0.000000e+00> : vector<8x512xf32>
    %203 = tpu.matmul %201, %202, %cst_96 {dimension_numbers = #tpu.dot_dimension_numbers<[1], [0], [0], [1], [0, 0, 1, 1], [], []>} : vector<8x128xf32>, vector<128x512xf32>, vector<8x512xf32> -> vector<8x512xf32>
    %204 = arith.addf %200, %203 : vector<8x512xf32>
    %205 = vector.extract_strided_slice %204 {offsets = [0, 0], sizes = [8, 128], strides = [1, 1]} : vector<8x512xf32> to vector<8x128xf32>
    %206 = arith.negf %205 : vector<8x128xf32>
    %207 = math.exp %206 : vector<8x128xf32>
    %cst_97 = arith.constant 1.000000e+00 : f32
    %208 = vector.broadcast %cst_97 : f32 to vector<8x128xf32>
    %209 = arith.addf %208, %207 : vector<8x128xf32>
    %210 = arith.divf %208, %209 : vector<8x128xf32>
    %211 = vector.extract_strided_slice %204 {offsets = [0, 128], sizes = [8, 128], strides = [1, 1]} : vector<8x512xf32> to vector<8x128xf32>
    %212 = arith.negf %211 : vector<8x128xf32>
    %213 = math.exp %212 : vector<8x128xf32>
    %cst_98 = arith.constant 1.000000e+00 : f32
    %214 = vector.broadcast %cst_98 : f32 to vector<8x128xf32>
    %215 = arith.addf %214, %213 : vector<8x128xf32>
    %216 = arith.divf %214, %215 : vector<8x128xf32>
    %217 = vector.extract_strided_slice %204 {offsets = [0, 256], sizes = [8, 128], strides = [1, 1]} : vector<8x512xf32> to vector<8x128xf32>
    %218 = math.tanh %217 : vector<8x128xf32>
    %219 = vector.extract_strided_slice %204 {offsets = [0, 384], sizes = [8, 128], strides = [1, 1]} : vector<8x512xf32> to vector<8x128xf32>
    %220 = arith.negf %219 : vector<8x128xf32>
    %221 = math.exp %220 : vector<8x128xf32>
    %cst_99 = arith.constant 1.000000e+00 : f32
    %222 = vector.broadcast %cst_99 : f32 to vector<8x128xf32>
    %223 = arith.addf %222, %221 : vector<8x128xf32>
    %224 = arith.divf %222, %223 : vector<8x128xf32>
    %c0_100 = arith.constant 0 : index
    %c0_101 = arith.constant 0 : index
    %225 = vector.load %arg9[%c0_100, %c0_101] : memref<8x128xf32, #tpu.memory_space<vmem>>, vector<8x128xf32>
    %226 = arith.mulf %216, %225 : vector<8x128xf32>
    %227 = arith.mulf %210, %218 : vector<8x128xf32>
    %228 = arith.addf %226, %227 : vector<8x128xf32>
    %229 = math.tanh %228 : vector<8x128xf32>
    %230 = arith.mulf %224, %229 : vector<8x128xf32>
    %c0_102 = arith.constant 0 : index
    %c0_103 = arith.constant 0 : index
    %231 = vector.load %arg8[%c0_102, %c0_103] : memref<8x128xf32, #tpu.memory_space<vmem>>, vector<8x128xf32>
    tpu.vector_store %arg8[%c0_102, %c0_103], %230 {strides = array<i32>} : memref<8x128xf32, #tpu.memory_space<vmem>>, vector<8x128xf32>,
    %c0_104 = arith.constant 0 : index
    %c0_105 = arith.constant 0 : index
    %232 = vector.load %arg9[%c0_104, %c0_105] : memref<8x128xf32, #tpu.memory_space<vmem>>, vector<8x128xf32>
    tpu.vector_store %arg9[%c0_104, %c0_105], %228 {strides = array<i32>} : memref<8x128xf32, #tpu.memory_space<vmem>>, vector<8x128xf32>,
    %233 = arith.index_cast %c5_i32 : i32 to index
    %c0_106 = arith.constant 0 : index
    %c0_107 = arith.constant 0 : index
    %234 = vector.load %arg5[%233, %c0_106, %c0_107] : memref<8x8x128xf32, #tpu.memory_space<vmem>>, vector<1x8x128xf32>
    %235 = vector.shape_cast %234 : vector<1x8x128xf32> to vector<8x128xf32>
    %236 = vector.shape_cast %230 : vector<8x128xf32> to vector<1x8x128xf32>
    tpu.vector_store %arg5[%233, %c0_106, %c0_107], %236 {strides = array<i32>} : memref<8x8x128xf32, #tpu.memory_space<vmem>>, vector<1x8x128xf32>,
    %c6_i32 = arith.constant 6 : i32
    %237 = arith.index_cast %c6_i32 : i32 to index
    %c0_108 = arith.constant 0 : index
    %c0_109 = arith.constant 0 : index
    %238 = vector.load %arg1[%237, %c0_108, %c0_109] : memref<8x8x512xf32, #tpu.memory_space<vmem>>, vector<1x8x512xf32>
    %239 = vector.shape_cast %238 : vector<1x8x512xf32> to vector<8x512xf32>
    %c0_110 = arith.constant 0 : index
    %c0_111 = arith.constant 0 : index
    %240 = vector.load %arg8[%c0_110, %c0_111] : memref<8x128xf32, #tpu.memory_space<vmem>>, vector<8x128xf32>
    %c0_112 = arith.constant 0 : index
    %c0_113 = arith.constant 0 : index
    %241 = vector.load %arg2[%c0_112, %c0_113] : memref<128x512xf32, #tpu.memory_space<vmem>>, vector<128x512xf32>
    %cst_114 = arith.constant dense<0.000000e+00> : vector<8x512xf32>
    %242 = tpu.matmul %240, %241, %cst_114 {dimension_numbers = #tpu.dot_dimension_numbers<[1], [0], [0], [1], [0, 0, 1, 1], [], []>} : vector<8x128xf32>, vector<128x512xf32>, vector<8x512xf32> -> vector<8x512xf32>
    %243 = arith.addf %239, %242 : vector<8x512xf32>
    %244 = vector.extract_strided_slice %243 {offsets = [0, 0], sizes = [8, 128], strides = [1, 1]} : vector<8x512xf32> to vector<8x128xf32>
    %245 = arith.negf %244 : vector<8x128xf32>
    %246 = math.exp %245 : vector<8x128xf32>
    %cst_115 = arith.constant 1.000000e+00 : f32
    %247 = vector.broadcast %cst_115 : f32 to vector<8x128xf32>
    %248 = arith.addf %247, %246 : vector<8x128xf32>
    %249 = arith.divf %247, %248 : vector<8x128xf32>
    %250 = vector.extract_strided_slice %243 {offsets = [0, 128], sizes = [8, 128], strides = [1, 1]} : vector<8x512xf32> to vector<8x128xf32>
    %251 = arith.negf %250 : vector<8x128xf32>
    %252 = math.exp %251 : vector<8x128xf32>
    %cst_116 = arith.constant 1.000000e+00 : f32
    %253 = vector.broadcast %cst_116 : f32 to vector<8x128xf32>
    %254 = arith.addf %253, %252 : vector<8x128xf32>
    %255 = arith.divf %253, %254 : vector<8x128xf32>
    %256 = vector.extract_strided_slice %243 {offsets = [0, 256], sizes = [8, 128], strides = [1, 1]} : vector<8x512xf32> to vector<8x128xf32>
    %257 = math.tanh %256 : vector<8x128xf32>
    %258 = vector.extract_strided_slice %243 {offsets = [0, 384], sizes = [8, 128], strides = [1, 1]} : vector<8x512xf32> to vector<8x128xf32>
    %259 = arith.negf %258 : vector<8x128xf32>
    %260 = math.exp %259 : vector<8x128xf32>
    %cst_117 = arith.constant 1.000000e+00 : f32
    %261 = vector.broadcast %cst_117 : f32 to vector<8x128xf32>
    %262 = arith.addf %261, %260 : vector<8x128xf32>
    %263 = arith.divf %261, %262 : vector<8x128xf32>
    %c0_118 = arith.constant 0 : index
    %c0_119 = arith.constant 0 : index
    %264 = vector.load %arg9[%c0_118, %c0_119] : memref<8x128xf32, #tpu.memory_space<vmem>>, vector<8x128xf32>
    %265 = arith.mulf %255, %264 : vector<8x128xf32>
    %266 = arith.mulf %249, %257 : vector<8x128xf32>
    %267 = arith.addf %265, %266 : vector<8x128xf32>
    %268 = math.tanh %267 : vector<8x128xf32>
    %269 = arith.mulf %263, %268 : vector<8x128xf32>
    %c0_120 = arith.constant 0 : index
    %c0_121 = arith.constant 0 : index
    %270 = vector.load %arg8[%c0_120, %c0_121] : memref<8x128xf32, #tpu.memory_space<vmem>>, vector<8x128xf32>
    tpu.vector_store %arg8[%c0_120, %c0_121], %269 {strides = array<i32>} : memref<8x128xf32, #tpu.memory_space<vmem>>, vector<8x128xf32>,
    %c0_122 = arith.constant 0 : index
    %c0_123 = arith.constant 0 : index
    %271 = vector.load %arg9[%c0_122, %c0_123] : memref<8x128xf32, #tpu.memory_space<vmem>>, vector<8x128xf32>
    tpu.vector_store %arg9[%c0_122, %c0_123], %267 {strides = array<i32>} : memref<8x128xf32, #tpu.memory_space<vmem>>, vector<8x128xf32>,
    %272 = arith.index_cast %c6_i32 : i32 to index
    %c0_124 = arith.constant 0 : index
    %c0_125 = arith.constant 0 : index
    %273 = vector.load %arg5[%272, %c0_124, %c0_125] : memref<8x8x128xf32, #tpu.memory_space<vmem>>, vector<1x8x128xf32>
    %274 = vector.shape_cast %273 : vector<1x8x128xf32> to vector<8x128xf32>
    %275 = vector.shape_cast %269 : vector<8x128xf32> to vector<1x8x128xf32>
    tpu.vector_store %arg5[%272, %c0_124, %c0_125], %275 {strides = array<i32>} : memref<8x8x128xf32, #tpu.memory_space<vmem>>, vector<1x8x128xf32>,
    %c7_i32 = arith.constant 7 : i32
    %276 = arith.index_cast %c7_i32 : i32 to index
    %c0_126 = arith.constant 0 : index
    %c0_127 = arith.constant 0 : index
    %277 = vector.load %arg1[%276, %c0_126, %c0_127] : memref<8x8x512xf32, #tpu.memory_space<vmem>>, vector<1x8x512xf32>
    %278 = vector.shape_cast %277 : vector<1x8x512xf32> to vector<8x512xf32>
    %c0_128 = arith.constant 0 : index
    %c0_129 = arith.constant 0 : index
    %279 = vector.load %arg8[%c0_128, %c0_129] : memref<8x128xf32, #tpu.memory_space<vmem>>, vector<8x128xf32>
    %c0_130 = arith.constant 0 : index
    %c0_131 = arith.constant 0 : index
    %280 = vector.load %arg2[%c0_130, %c0_131] : memref<128x512xf32, #tpu.memory_space<vmem>>, vector<128x512xf32>
    %cst_132 = arith.constant dense<0.000000e+00> : vector<8x512xf32>
    %281 = tpu.matmul %279, %280, %cst_132 {dimension_numbers = #tpu.dot_dimension_numbers<[1], [0], [0], [1], [0, 0, 1, 1], [], []>} : vector<8x128xf32>, vector<128x512xf32>, vector<8x512xf32> -> vector<8x512xf32>
    %282 = arith.addf %278, %281 : vector<8x512xf32>
    %283 = vector.extract_strided_slice %282 {offsets = [0, 0], sizes = [8, 128], strides = [1, 1]} : vector<8x512xf32> to vector<8x128xf32>
    %284 = arith.negf %283 : vector<8x128xf32>
    %285 = math.exp %284 : vector<8x128xf32>
    %cst_133 = arith.constant 1.000000e+00 : f32
    %286 = vector.broadcast %cst_133 : f32 to vector<8x128xf32>
    %287 = arith.addf %286, %285 : vector<8x128xf32>
    %288 = arith.divf %286, %287 : vector<8x128xf32>
    %289 = vector.extract_strided_slice %282 {offsets = [0, 128], sizes = [8, 128], strides = [1, 1]} : vector<8x512xf32> to vector<8x128xf32>
    %290 = arith.negf %289 : vector<8x128xf32>
    %291 = math.exp %290 : vector<8x128xf32>
    %cst_134 = arith.constant 1.000000e+00 : f32
    %292 = vector.broadcast %cst_134 : f32 to vector<8x128xf32>
    %293 = arith.addf %292, %291 : vector<8x128xf32>
    %294 = arith.divf %292, %293 : vector<8x128xf32>
    %295 = vector.extract_strided_slice %282 {offsets = [0, 256], sizes = [8, 128], strides = [1, 1]} : vector<8x512xf32> to vector<8x128xf32>
    %296 = math.tanh %295 : vector<8x128xf32>
    %297 = vector.extract_strided_slice %282 {offsets = [0, 384], sizes = [8, 128], strides = [1, 1]} : vector<8x512xf32> to vector<8x128xf32>
    %298 = arith.negf %297 : vector<8x128xf32>
    %299 = math.exp %298 : vector<8x128xf32>
    %cst_135 = arith.constant 1.000000e+00 : f32
    %300 = vector.broadcast %cst_135 : f32 to vector<8x128xf32>
    %301 = arith.addf %300, %299 : vector<8x128xf32>
    %302 = arith.divf %300, %301 : vector<8x128xf32>
    %c0_136 = arith.constant 0 : index
    %c0_137 = arith.constant 0 : index
    %303 = vector.load %arg9[%c0_136, %c0_137] : memref<8x128xf32, #tpu.memory_space<vmem>>, vector<8x128xf32>
    %304 = arith.mulf %294, %303 : vector<8x128xf32>
    %305 = arith.mulf %288, %296 : vector<8x128xf32>
    %306 = arith.addf %304, %305 : vector<8x128xf32>
    %307 = math.tanh %306 : vector<8x128xf32>
    %308 = arith.mulf %302, %307 : vector<8x128xf32>
    %c0_138 = arith.constant 0 : index
    %c0_139 = arith.constant 0 : index
    %309 = vector.load %arg8[%c0_138, %c0_139] : memref<8x128xf32, #tpu.memory_space<vmem>>, vector<8x128xf32>
    tpu.vector_store %arg8[%c0_138, %c0_139], %308 {strides = array<i32>} : memref<8x128xf32, #tpu.memory_space<vmem>>, vector<8x128xf32>,
    %c0_140 = arith.constant 0 : index
    %c0_141 = arith.constant 0 : index
    %310 = vector.load %arg9[%c0_140, %c0_141] : memref<8x128xf32, #tpu.memory_space<vmem>>, vector<8x128xf32>
    tpu.vector_store %arg9[%c0_140, %c0_141], %306 {strides = array<i32>} : memref<8x128xf32, #tpu.memory_space<vmem>>, vector<8x128xf32>,
    %311 = arith.index_cast %c7_i32 : i32 to index
    %c0_142 = arith.constant 0 : index
    %c0_143 = arith.constant 0 : index
    %312 = vector.load %arg5[%311, %c0_142, %c0_143] : memref<8x8x128xf32, #tpu.memory_space<vmem>>, vector<1x8x128xf32>
    %313 = vector.shape_cast %312 : vector<1x8x128xf32> to vector<8x128xf32>
    %314 = vector.shape_cast %308 : vector<8x128xf32> to vector<1x8x128xf32>
    tpu.vector_store %arg5[%311, %c0_142, %c0_143], %314 {strides = array<i32>} : memref<8x8x128xf32, #tpu.memory_space<vmem>>, vector<1x8x128xf32>,
    %c8_i32 = arith.constant 8 : i32
    %c0_i32_144 = arith.constant 0 : i32
    %315 = arith.cmpi eq, %arg0, %c0_i32_144 : i32
    %316 = arith.extui %315 : i1 to i32
    %c0_i32_145 = arith.constant 0 : i32
    %317 = arith.cmpi ne, %316, %c0_i32_145 : i32
    scf.if %317 {
      %c0_146 = arith.constant 0 : index
      %c0_147 = arith.constant 0 : index
      %318 = vector.load %arg8[%c0_146, %c0_147] : memref<8x128xf32, #tpu.memory_space<vmem>>, vector<8x128xf32>
      %c0_148 = arith.constant 0 : index
      %c0_149 = arith.constant 0 : index
      %319 = vector.load %arg6[%c0_148, %c0_149] : memref<8x128xf32, #tpu.memory_space<vmem>>, vector<8x128xf32>
      tpu.vector_store %arg6[%c0_148, %c0_149], %318 {strides = array<i32>} : memref<8x128xf32, #tpu.memory_space<vmem>>, vector<8x128xf32>,
      %c0_150 = arith.constant 0 : index
      %c0_151 = arith.constant 0 : index
      %320 = vector.load %arg9[%c0_150, %c0_151] : memref<8x128xf32, #tpu.memory_space<vmem>>, vector<8x128xf32>
      %c0_152 = arith.constant 0 : index
      %c0_153 = arith.constant 0 : index
      %321 = vector.load %arg7[%c0_152, %c0_153] : memref<8x128xf32, #tpu.memory_space<vmem>>, vector<8x128xf32>
      tpu.vector_store %arg7[%c0_152, %c0_153], %320 {strides = array<i32>} : memref<8x128xf32, #tpu.memory_space<vmem>>, vector<8x128xf32>,
    } else {
    }
    return
  }
  func.func @transform_0(%arg0: i32) -> (i32, i32, i32) {
    %c0_i32 = arith.constant 0 : i32
    %c0_i32_0 = arith.constant 0 : i32
    %c0_i32_1 = arith.constant 0 : i32
    return %arg0, %c0_i32, %c0_i32_0 : i32, i32, i32
  }
  func.func @transform_1(%arg0: i32) -> (i32, i32) {
    %c0_i32 = arith.constant 0 : i32
    %c0_i32_0 = arith.constant 0 : i32
    %c0_i32_1 = arith.constant 0 : i32
    return %c0_i32, %c0_i32_0 : i32, i32
  }
  func.func @transform_2(%arg0: i32) -> (i32, i32) {
    %c0_i32 = arith.constant 0 : i32
    %c0_i32_0 = arith.constant 0 : i32
    %c0_i32_1 = arith.constant 0 : i32
    return %c0_i32, %c0_i32_0 : i32, i32
  }
  func.func @transform_3(%arg0: i32) -> (i32, i32) {
    %c0_i32 = arith.constant 0 : i32
    %c0_i32_0 = arith.constant 0 : i32
    %c0_i32_1 = arith.constant 0 : i32
    return %c0_i32, %c0_i32_0 : i32, i32
  }
  func.func @transform_4(%arg0: i32) -> (i32, i32, i32) {
    %c0_i32 = arith.constant 0 : i32
    %c0_i32_0 = arith.constant 0 : i32
    %c0_i32_1 = arith.constant 0 : i32
    return %arg0, %c0_i32, %c0_i32_0 : i32, i32, i32
  }
  func.func @transform_5(%arg0: i32) -> (i32, i32) {
    %c0_i32 = arith.constant 0 : i32
    %c0_i32_0 = arith.constant 0 : i32
    %c0_i32_1 = arith.constant 0 : i32
    return %c0_i32, %c0_i32_0 : i32, i32
  }
  func.func @transform_6(%arg0: i32) -> (i32, i32) {
    %c0_i32 = arith.constant 0 : i32
    %c0_i32_0 = arith.constant 0 : i32
    %c0_i32_1 = arith.constant 0 : i32
    return %c0_i32, %c0_i32_0 : i32, i32
  }
}

module attributes {stable_mosaic.version = 11 : i64} {
  func.func @_linear_kernel(%arg0: i32, %arg1: i32, %arg2: memref<64x128xf32, #tpu.memory_space<vmem>>, %arg3: memref<128x128xf32, #tpu.memory_space<vmem>>, %arg4: memref<1x128xf32, #tpu.memory_space<vmem>>, %arg5: memref<64x128xf32, #tpu.memory_space<vmem>>) attributes {dimension_semantics = [#tpu.dimension_semantics<parallel>, #tpu.dimension_semantics<parallel>], iteration_bounds = array<i64: 1, 1>, scalar_prefetch = 0 : i64, scratch_operands = 0 : i64, tpu.core_type = #tpu.core_type<tc>, window_params = [{transform_indices = @transform_0, window_bounds = array<i64: 64, 128>}, {transform_indices = @transform_1, window_bounds = array<i64: 128, 128>}, {transform_indices = @transform_2, window_bounds = array<i64: 1, 128>}, {transform_indices = @transform_3, window_bounds = array<i64: 64, 128>}]} {
    %c0 = arith.constant 0 : index
    %c0_0 = arith.constant 0 : index
    %0 = vector.load %arg2[%c0, %c0_0] : memref<64x128xf32, #tpu.memory_space<vmem>>, vector<64x128xf32>
    %c0_1 = arith.constant 0 : index
    %c0_2 = arith.constant 0 : index
    %1 = vector.load %arg3[%c0_1, %c0_2] : memref<128x128xf32, #tpu.memory_space<vmem>>, vector<128x128xf32>
    %cst = arith.constant dense<0.000000e+00> : vector<64x128xf32>
    %2 = tpu.matmul %0, %1, %cst {dimension_numbers = #tpu.dot_dimension_numbers<[1], [0], [0], [1], [0, 0, 1, 1], [], []>} : vector<64x128xf32>, vector<128x128xf32>, vector<64x128xf32> -> vector<64x128xf32>
    %c0_3 = arith.constant 0 : index
    %c0_4 = arith.constant 0 : index
    %3 = vector.load %arg4[%c0_3, %c0_4] : memref<1x128xf32, #tpu.memory_space<vmem>>, vector<1x128xf32>
    %4 = vector.broadcast %3 : vector<1x128xf32> to vector<64x128xf32>
    %5 = arith.addf %2, %4 : vector<64x128xf32>
    %c0_5 = arith.constant 0 : index
    %c0_6 = arith.constant 0 : index
    %6 = vector.load %arg5[%c0_5, %c0_6] : memref<64x128xf32, #tpu.memory_space<vmem>>, vector<64x128xf32>
    tpu.vector_store %arg5[%c0_5, %c0_6], %5 {strides = array<i32>} : memref<64x128xf32, #tpu.memory_space<vmem>>, vector<64x128xf32>,
    return
  }
  func.func @transform_0(%arg0: i32, %arg1: i32) -> (i32, i32) {
    %c0_i32 = arith.constant 0 : i32
    %c0_i32_0 = arith.constant 0 : i32
    return %arg0, %c0_i32 : i32, i32
  }
  func.func @transform_1(%arg0: i32, %arg1: i32) -> (i32, i32) {
    %c0_i32 = arith.constant 0 : i32
    %c0_i32_0 = arith.constant 0 : i32
    return %c0_i32, %arg1 : i32, i32
  }
  func.func @transform_2(%arg0: i32, %arg1: i32) -> (i32, i32) {
    %c0_i32 = arith.constant 0 : i32
    %c0_i32_0 = arith.constant 0 : i32
    return %c0_i32, %arg1 : i32, i32
  }
  func.func @transform_3(%arg0: i32, %arg1: i32) -> (i32, i32) {
    %c0_i32 = arith.constant 0 : i32
    return %arg0, %arg1 : i32, i32
  }
}

</mosaic_0001>

<llo_original>
// kernel: rnn_forward.6
$region0: #{rnn_forward.6}
  #allocation0 [shape = 'u32[]', space=smem, size = 0x4, offset = 0x4, fixed_abs, tag = 'smem constant byte address 0x4 - core index']
  #allocation1 [shape = 'u32[72,128]{1,0:T(1,128)}', space=vmem, size = 0x9000, scoped, tag = 'internal scratch']
  #allocation2 [shape = 's32[1]{0}', space=sflag, size = 0x4, scoped, tag = 'scratch operand']
  #allocation3 [shape = 's32[1]{0}', space=sflag, size = 0x4, scoped, tag = 'scoped memory for rnn_forward.6']
  #allocation4 [shape = 'u8[512]{0}', space=smem, size = 0x200, scoped, tag = 'prefetched SMEM operand 0']
  #allocation5 [shape = 's32[]', space=sflag, size = 0x4, offset = 0, fixed_abs, tag = 'sflag constant byte address 0x0 - dummy sync flag']
  %s0 = inlined_call_operand.vmem [shape: s32[64], index: 0, kind: input, shape index: {}]
  %s1 = inlined_call_operand.vmem [shape: f32[48,32], index: 1, kind: input, shape index: {}]
  %s2 = inlined_call_operand.vmem [shape: f32[64,32], index: 2, kind: output, shape index: {}]
  %s3 = sld [smem:[#allocation0]]
  $region54: #{rnn_forward.6} parent=0
    _
  %s5 = ssub.s32 1, %s3
  %s6 = scalar_select 0, %s5, %s3
  %s8 = sshll.u32 %s0, 4
  %s9 = int_to_ptr.vmem [resolvable:$true] %s8
  %11 = dma.vmem_to_smem %s9, 16, [#allocation4], [#allocation3]
  %13 = dma.done [#allocation3], 16
  %14 = sfence
  %s15 = smul.u32 0, 64
  loop: start=0, step=1, limit=64
  $region2: #{rnn_forward.6} parent=0 // loop_pre_header
    _
  $region3: #{rnn_forward.6} parent=0 // loop_header
    %s17 = sphi 0, %s21
    %p18 = scmp.ge.s32.totalorder %s17, 64
  $region4: #{rnn_forward.6} parent=0 // loop_header_branch
    %20 = sbr.rel (%p18) target = $region8
  $region5: #{rnn_forward.6} parent=0 // loop_body
    %s22 = sadd.s32 %s15, %s17
    %s23 = sld [smem:[#allocation4 + %s22]]
    %s24 = scalar_lea.vmem %s1, %s23
    %s25 = scalar_lea.vmem %s2, %s17
    // Predicated region
    $region9: #{rnn_forward.6} parent=5 // pred_check
      _
    $region10: #{rnn_forward.6} parent=5 // pred_check_branch
      %27 = sbr.rel target = $region12
    $region11: #{rnn_forward.6} parent=5 // pred_region
      // Predicated region
      $region24: #{rnn_forward.6} parent=11 // pred_check
        _
      $region25: #{rnn_forward.6} parent=11 // pred_check_branch
        %43 = sbr.rel (0) target = $region27
      $region26: #{rnn_forward.6} parent=11 // pred_region
        %s45 = ssub.s32 2, 1
        loop: start=0, step=1, limit=1
        $region28: #{rnn_forward.6} parent=26 // loop_pre_header
          _
        $region29: #{rnn_forward.6} parent=26 // loop_header
          %s47 = sphi 0, %s51
          %p48 = scmp.ge.s32.totalorder %s47, 1
          %s52 = sphi %s24, %s24
          %s53 = sphi %s25, %s25
        $region30: #{rnn_forward.6} parent=26 // loop_header_branch
          %50 = sbr.rel (%p48) target = $region34
        $region31: #{rnn_forward.6} parent=26 // loop_body
          %v54 = vld [vmem:[%s52] sm:%s45]
          %55 = vst [vmem:[%s53] sm:%s45] %v54
        $region32: #{rnn_forward.6} parent=26 // loop_footer
          %s51 = sadd.s32 1, %s47
        $region33: #{rnn_forward.6} parent=26 // loop_footer_branch
          %46 = sbr.rel target = $region29
        $region34: #{rnn_forward.6} parent=26 // loop_exit
          _
      $region27: #{rnn_forward.6} parent=11 // pred_fallthru
        _
    $region12: #{rnn_forward.6} parent=5 // pred_fallthru
      _
    // Predicated region
    $region13: #{rnn_forward.6} parent=5 // pred_check
      _
    $region14: #{rnn_forward.6} parent=5 // pred_check_branch
      %29 = sbr.rel (0) target = $region16
    $region15: #{rnn_forward.6} parent=5 // pred_region
      %s31 = ssub.s32 2, 1
      loop: start=0, step=1, limit=1
      $region17: #{rnn_forward.6} parent=15 // loop_pre_header
        _
      $region18: #{rnn_forward.6} parent=15 // loop_header
        %s33 = sphi 0, %s37
        %p34 = scmp.ge.s32.totalorder %s33, 1
        %s38 = sphi %s24, %s24
        %s39 = sphi %s25, %s25
      $region19: #{rnn_forward.6} parent=15 // loop_header_branch
        %36 = sbr.rel (%p34) target = $region23
      $region20: #{rnn_forward.6} parent=15 // loop_body
        %v40 = vld [vmem:[%s38] sm:%s31]
        %41 = vst [vmem:[%s39] sm:%s31] %v40
      $region21: #{rnn_forward.6} parent=15 // loop_footer
        %s37 = sadd.s32 1, %s33
      $region22: #{rnn_forward.6} parent=15 // loop_footer_branch
        %32 = sbr.rel target = $region18
      $region23: #{rnn_forward.6} parent=15 // loop_exit
        _
    $region16: #{rnn_forward.6} parent=5 // pred_fallthru
      _
    // Predicated region
    $region35: #{rnn_forward.6} parent=5 // pred_check
      _
    $region36: #{rnn_forward.6} parent=5 // pred_check_branch
      %58 = sbr.rel (0) target = $region38
    $region37: #{rnn_forward.6} parent=5 // pred_region
      %59 = vsyncadd [#allocation2], 16
    $region38: #{rnn_forward.6} parent=5 // pred_fallthru
      _
  $region6: #{rnn_forward.6} parent=0 // loop_footer
    %s21 = sadd.s32 1, %s17
  $region7: #{rnn_forward.6} parent=0 // loop_footer_branch
    %16 = sbr.rel target = $region3
  $region8: #{rnn_forward.6} parent=0 // loop_exit
    _
  loop: start=0, step=1, limit=64
  $region39: #{rnn_forward.6} parent=0 // loop_pre_header
    _
  $region40: #{rnn_forward.6} parent=0 // loop_header
    %s61 = sphi 0, %s65
    %p62 = scmp.ge.s32.totalorder %s61, 64
  $region41: #{rnn_forward.6} parent=0 // loop_header_branch
    %64 = sbr.rel (%p62) target = $region45
  $region42: #{rnn_forward.6} parent=0 // loop_body
    %s66 = sadd.s32 %s15, %s61
    %s67 = sld [smem:[#allocation4 + %s66]]
    %69 = dma.done [#allocation2], 16
  $region43: #{rnn_forward.6} parent=0 // loop_footer
    %s65 = sadd.s32 1, %s61
  $region44: #{rnn_forward.6} parent=0 // loop_footer_branch
    %60 = sbr.rel target = $region40
  $region45: #{rnn_forward.6} parent=0 // loop_exit
    _
  // Predicated region
  $region46: #{rnn_forward.6} parent=0 // pred_check
    _
  $region47: #{rnn_forward.6} parent=0 // pred_check_branch
    %71 = sbr.rel (0) target = $region49
  $region48: #{rnn_forward.6} parent=0 // pred_region
    _
  $region49: #{rnn_forward.6} parent=0 // pred_fallthru
    _
  // Predicated region
  $region50: #{rnn_forward.6} parent=0 // pred_check
    _
  $region51: #{rnn_forward.6} parent=0 // pred_check_branch
    %73 = sbr.rel (0) target = $region53
  $region52: #{rnn_forward.6} parent=0 // pred_region
    _
  $region53: #{rnn_forward.6} parent=0 // pred_fallthru
    _
  %74 = vsyncmov [#allocation2]
  %s75 = vpop.sfrf %74
  %p76 = scmp.eq.s32.totalorder %s75, 0
  %p77 = pneg %p76
  %79 = shalt.err (%p77)

// kernel: rnn_forward.7
$region0: #{rnn_forward.7}
  #allocation0 [shape = 'u32[]', space=smem, size = 0x4, offset = 0x4, fixed_abs, tag = 'smem constant byte address 0x4 - core index']
  #allocation1 [shape = 'u32[72,128]{1,0:T(1,128)}', space=vmem, size = 0x9000, scoped, tag = 'internal scratch']
  %s0 = inlined_call_operand.vmem [shape: f32[64,32], index: 0, kind: input, shape index: {}]
  %s1 = inlined_call_operand.hbm [shape: f32[32,512], index: 1, kind: input, shape index: {}]
  %s2 = inlined_call_operand.vmem [shape: f32[1,512], index: 2, kind: input, shape index: {}]
  %s3 = inlined_call_operand.vmem [shape: f32[64,512], index: 3, kind: output, shape index: {}]
  %s4 = sld [smem:[#allocation0]]
  $region26: #{rnn_forward.7} parent=0
    _
  %s6 = ssub.s32 1, %s4
  %s7 = scalar_select 0, %s6, %s4
  $region1: #{rnn_forward.7} parent=0
    #allocation2 [shape = 'u8[65536]{0}', space=vmem, size = 0x10000, scoped, tag = 'input window, operand 1, single buffered']
    #allocation3 [shape = 's32[1]{0}', space=sflag, size = 0x4, scoped, tag = 'scoped memory for rnn_forward.7']
    %8 = vsyncpa [#allocation3], 0
    // Predicated region
    $region2: #{rnn_forward.7} parent=1 // pred_check
      _
    $region3: #{rnn_forward.7} parent=1 // pred_check_branch
      %10 = sbr.rel (0) target = $region5
    $region4: #{rnn_forward.7} parent=1 // pred_region
      _
    $region5: #{rnn_forward.7} parent=1 // pred_fallthru
      _
    // Predicated region
    $region6: #{rnn_forward.7} parent=1 // pred_check
      _
    $region7: #{rnn_forward.7} parent=1 // pred_check_branch
      %12 = sbr.rel (0) target = $region9
    $region8: #{rnn_forward.7} parent=1 // pred_region
      %14 = vsyncadd [#allocation3], 0
      %s15 = sshll.u32 %s1, 4
      %s16 = int_to_ptr.hbm [resolvable:$true] %s15
      %s17 = sshll.u32 [#allocation2], 4
      %s18 = int_to_ptr.vmem [resolvable:$true] %s17
      %23 = dma.hbm_to_vmem [thread:$0]  %s16, 2048, %s18, [#allocation3], 512, 512, 32
    $region9: #{rnn_forward.7} parent=1 // pred_fallthru
      _
    // Predicated region
    $region10: #{rnn_forward.7} parent=1 // pred_check
      _
    $region11: #{rnn_forward.7} parent=1 // pred_check_branch
      %25 = sbr.rel (0) target = $region13
    $region12: #{rnn_forward.7} parent=1 // pred_region
      _
    $region13: #{rnn_forward.7} parent=1 // pred_fallthru
      _
    // Predicated region
    $region14: #{rnn_forward.7} parent=1 // pred_check
      _
    $region15: #{rnn_forward.7} parent=1 // pred_check_branch
      %27 = sbr.rel (0) target = $region17
    $region16: #{rnn_forward.7} parent=1 // pred_region
      %29 = dma.done [#allocation3], 2048
    $region17: #{rnn_forward.7} parent=1 // pred_fallthru
      _
    %v30 = vld [vmem:[%s0] sm:$0xff]
    %v31 = vld [vmem:[%s0 + $0x8] sm:$0xff]
    %v32 = vld [vmem:[%s0 + $0x10] sm:$0xff]
    %v33 = vld [vmem:[%s0 + $0x18] sm:$0xff]
    %v34 = vld [vmem:[%s0 + $0x20] sm:$0xff]
    %v35 = vld [vmem:[%s0 + $0x28] sm:$0xff]
    %v36 = vld [vmem:[%s0 + $0x30] sm:$0xff]
    %v37 = vld [vmem:[%s0 + $0x38] sm:$0xff]
    %v38 = vld [vmem:[#allocation2] sm:$0xff]
    %v39 = vld [vmem:[#allocation2 + $0x8] sm:$0xff]
    %v40 = vld [vmem:[#allocation2 + $0x10] sm:$0xff]
    %v41 = vld [vmem:[#allocation2 + $0x18] sm:$0xff]
    %v42 = vld [vmem:[#allocation2 + $0x20] sm:$0xff]
    %v43 = vld [vmem:[#allocation2 + $0x28] sm:$0xff]
    %v44 = vld [vmem:[#allocation2 + $0x30] sm:$0xff]
    %v45 = vld [vmem:[#allocation2 + $0x38] sm:$0xff]
    %v46 = vld [vmem:[#allocation2 + $0x40] sm:$0xff]
    %v47 = vld [vmem:[#allocation2 + $0x48] sm:$0xff]
    %v48 = vld [vmem:[#allocation2 + $0x50] sm:$0xff]
    %v49 = vld [vmem:[#allocation2 + $0x58] sm:$0xff]
    %v50 = vld [vmem:[#allocation2 + $0x60] sm:$0xff]
    %v51 = vld [vmem:[#allocation2 + $0x68] sm:$0xff]
    %v52 = vld [vmem:[#allocation2 + $0x70] sm:$0xff]
    %v53 = vld [vmem:[#allocation2 + $0x78] sm:$0xff]
    %v54 = vld [vmem:[%s2] sm:$0xf]
    %v56 = vperm.slane %v54, 0
    %v57 = vperm.slane %v54, 1
    %v58 = vperm.slane %v54, 2
    %v59 = vperm.slane %v54, 3
    %vm64 = vcmask 261120
    %v66 = vsel %vm64, %v30, 0
    %v69 = vsel %vm64, %v31, 0
    %v72 = vsel %vm64, %v32, 0
    %v75 = vsel %vm64, %v33, 0
    %v78 = vsel %vm64, %v34, 0
    %v81 = vsel %vm64, %v35, 0
    %v84 = vsel %vm64, %v36, 0
    %v87 = vsel %vm64, %v37, 0
    %89 = vmatpush.msra.mxu0 0.0
    %90 = vmatpush.msra.mxu0 0.0
    %91 = vmatpush.msra.mxu0 0.0
    %92 = vmatpush.msra.mxu0 0.0
    %93 = vmatpush.msra.mxu0 0.0
    %94 = vmatpush.msra.mxu0 0.0
    %95 = vmatpush.msra.mxu0 0.0
    %96 = vmatpush.msra.mxu0 0.0
    %97 = vmatpush.msra.mxu0 0.0
    %98 = vmatpush.msra.mxu0 0.0
    %99 = vmatpush.msra.mxu0 0.0
    %100 = vmatpush.msra.mxu0 0.0
    %101 = vmatpush.msra.mxu0 %v50
    %102 = vmatpush.msra.mxu0 %v46
    %103 = vmatpush.msra.mxu0 %v42
    %104 = vmatpush.msra.mxu0 %v38
    %105 = vmatmul.f32.gmra.mxu0 %v66
    %v106 = vpop.f32.mrf.mxu0
    %v107 = vadd.f32 %v56, %v106
    %108 = vmatmul.f32.gmra.mxu0 %v69
    %v109 = vpop.f32.mrf.mxu0
    %v110 = vadd.f32 %v56, %v109
    %111 = vmatmul.f32.gmra.mxu0 %v72
    %v112 = vpop.f32.mrf.mxu0
    %v113 = vadd.f32 %v56, %v112
    %114 = vmatmul.f32.gmra.mxu0 %v75
    %v115 = vpop.f32.mrf.mxu0
    %v116 = vadd.f32 %v56, %v115
    %117 = vmatmul.f32.gmra.mxu0 %v78
    %v118 = vpop.f32.mrf.mxu0
    %v119 = vadd.f32 %v56, %v118
    %120 = vmatmul.f32.gmra.mxu0 %v81
    %v121 = vpop.f32.mrf.mxu0
    %v122 = vadd.f32 %v56, %v121
    %123 = vmatmul.f32.gmra.mxu0 %v84
    %v124 = vpop.f32.mrf.mxu0
    %v125 = vadd.f32 %v56, %v124
    %126 = vmatmul.f32.gmra.mxu0 %v87
    %v127 = vpop.f32.mrf.mxu0
    %v128 = vadd.f32 %v56, %v127
    %129 = vdwg.mxu0
    %130 = vmatpush.msra.mxu0 0.0
    %131 = vmatpush.msra.mxu0 0.0
    %132 = vmatpush.msra.mxu0 0.0
    %133 = vmatpush.msra.mxu0 0.0
    %134 = vmatpush.msra.mxu0 0.0
    %135 = vmatpush.msra.mxu0 0.0
    %136 = vmatpush.msra.mxu0 0.0
    %137 = vmatpush.msra.mxu0 0.0
    %138 = vmatpush.msra.mxu0 0.0
    %139 = vmatpush.msra.mxu0 0.0
    %140 = vmatpush.msra.mxu0 0.0
    %141 = vmatpush.msra.mxu0 0.0
    %142 = vmatpush.msra.mxu0 %v51
    %143 = vmatpush.msra.mxu0 %v47
    %144 = vmatpush.msra.mxu0 %v43
    %145 = vmatpush.msra.mxu0 %v39
    %146 = vmatmul.f32.gmra.mxu0 %v66
    %v147 = vpop.f32.mrf.mxu0
    %v148 = vadd.f32 %v57, %v147
    %149 = vmatmul.f32.gmra.mxu0 %v69
    %v150 = vpop.f32.mrf.mxu0
    %v151 = vadd.f32 %v57, %v150
    %152 = vmatmul.f32.gmra.mxu0 %v72
    %v153 = vpop.f32.mrf.mxu0
    %v154 = vadd.f32 %v57, %v153
    %155 = vmatmul.f32.gmra.mxu0 %v75
    %v156 = vpop.f32.mrf.mxu0
    %v157 = vadd.f32 %v57, %v156
    %158 = vmatmul.f32.gmra.mxu0 %v78
    %v159 = vpop.f32.mrf.mxu0
    %v160 = vadd.f32 %v57, %v159
    %161 = vmatmul.f32.gmra.mxu0 %v81
    %v162 = vpop.f32.mrf.mxu0
    %v163 = vadd.f32 %v57, %v162
    %164 = vmatmul.f32.gmra.mxu0 %v84
    %v165 = vpop.f32.mrf.mxu0
    %v166 = vadd.f32 %v57, %v165
    %167 = vmatmul.f32.gmra.mxu0 %v87
    %v168 = vpop.f32.mrf.mxu0
    %v169 = vadd.f32 %v57, %v168
    %170 = vdwg.mxu0
    %171 = vmatpush.msra.mxu0 0.0
    %172 = vmatpush.msra.mxu0 0.0
    %173 = vmatpush.msra.mxu0 0.0
    %174 = vmatpush.msra.mxu0 0.0
    %175 = vmatpush.msra.mxu0 0.0
    %176 = vmatpush.msra.mxu0 0.0
    %177 = vmatpush.msra.mxu0 0.0
    %178 = vmatpush.msra.mxu0 0.0
    %179 = vmatpush.msra.mxu0 0.0
    %180 = vmatpush.msra.mxu0 0.0
    %181 = vmatpush.msra.mxu0 0.0
    %182 = vmatpush.msra.mxu0 0.0
    %183 = vmatpush.msra.mxu0 %v52
    %184 = vmatpush.msra.mxu0 %v48
    %185 = vmatpush.msra.mxu0 %v44
    %186 = vmatpush.msra.mxu0 %v40
    %187 = vmatmul.f32.gmra.mxu0 %v66
    %v188 = vpop.f32.mrf.mxu0
    %v189 = vadd.f32 %v58, %v188
    %190 = vmatmul.f32.gmra.mxu0 %v69
    %v191 = vpop.f32.mrf.mxu0
    %v192 = vadd.f32 %v58, %v191
    %193 = vmatmul.f32.gmra.mxu0 %v72
    %v194 = vpop.f32.mrf.mxu0
    %v195 = vadd.f32 %v58, %v194
    %196 = vmatmul.f32.gmra.mxu0 %v75
    %v197 = vpop.f32.mrf.mxu0
    %v198 = vadd.f32 %v58, %v197
    %199 = vmatmul.f32.gmra.mxu0 %v78
    %v200 = vpop.f32.mrf.mxu0
    %v201 = vadd.f32 %v58, %v200
    %202 = vmatmul.f32.gmra.mxu0 %v81
    %v203 = vpop.f32.mrf.mxu0
    %v204 = vadd.f32 %v58, %v203
    %205 = vmatmul.f32.gmra.mxu0 %v84
    %v206 = vpop.f32.mrf.mxu0
    %v207 = vadd.f32 %v58, %v206
    %208 = vmatmul.f32.gmra.mxu0 %v87
    %v209 = vpop.f32.mrf.mxu0
    %v210 = vadd.f32 %v58, %v209
    %211 = vdwg.mxu0
    %212 = vmatpush.msra.mxu0 0.0
    %213 = vmatpush.msra.mxu0 0.0
    %214 = vmatpush.msra.mxu0 0.0
    %215 = vmatpush.msra.mxu0 0.0
    %216 = vmatpush.msra.mxu0 0.0
    %217 = vmatpush.msra.mxu0 0.0
    %218 = vmatpush.msra.mxu0 0.0
    %219 = vmatpush.msra.mxu0 0.0
    %220 = vmatpush.msra.mxu0 0.0
    %221 = vmatpush.msra.mxu0 0.0
    %222 = vmatpush.msra.mxu0 0.0
    %223 = vmatpush.msra.mxu0 0.0
    %224 = vmatpush.msra.mxu0 %v53
    %225 = vmatpush.msra.mxu0 %v49
    %226 = vmatpush.msra.mxu0 %v45
    %227 = vmatpush.msra.mxu0 %v41
    %228 = vmatmul.f32.gmra.mxu0 %v66
    %v229 = vpop.f32.mrf.mxu0
    %v230 = vadd.f32 %v59, %v229
    %231 = vmatmul.f32.gmra.mxu0 %v69
    %v232 = vpop.f32.mrf.mxu0
    %v233 = vadd.f32 %v59, %v232
    %234 = vmatmul.f32.gmra.mxu0 %v72
    %v235 = vpop.f32.mrf.mxu0
    %v236 = vadd.f32 %v59, %v235
    %237 = vmatmul.f32.gmra.mxu0 %v75
    %v238 = vpop.f32.mrf.mxu0
    %v239 = vadd.f32 %v59, %v238
    %240 = vmatmul.f32.gmra.mxu0 %v78
    %v241 = vpop.f32.mrf.mxu0
    %v242 = vadd.f32 %v59, %v241
    %243 = vmatmul.f32.gmra.mxu0 %v81
    %v244 = vpop.f32.mrf.mxu0
    %v245 = vadd.f32 %v59, %v244
    %246 = vmatmul.f32.gmra.mxu0 %v84
    %v247 = vpop.f32.mrf.mxu0
    %v248 = vadd.f32 %v59, %v247
    %249 = vmatmul.f32.gmra.mxu0 %v87
    %v250 = vpop.f32.mrf.mxu0
    %v251 = vadd.f32 %v59, %v250
    %252 = vdwg.mxu0
    %253 = vst [vmem:[%s3] sm:$0xff] %v107
    %254 = vst [vmem:[%s3 + $0x8] sm:$0xff] %v148
    %255 = vst [vmem:[%s3 + $0x10] sm:$0xff] %v189
    %256 = vst [vmem:[%s3 + $0x18] sm:$0xff] %v230
    %257 = vst [vmem:[%s3 + $0x20] sm:$0xff] %v110
    %258 = vst [vmem:[%s3 + $0x28] sm:$0xff] %v151
    %259 = vst [vmem:[%s3 + $0x30] sm:$0xff] %v192
    %260 = vst [vmem:[%s3 + $0x38] sm:$0xff] %v233
    %261 = vst [vmem:[%s3 + $0x40] sm:$0xff] %v113
    %262 = vst [vmem:[%s3 + $0x48] sm:$0xff] %v154
    %263 = vst [vmem:[%s3 + $0x50] sm:$0xff] %v195
    %264 = vst [vmem:[%s3 + $0x58] sm:$0xff] %v236
    %265 = vst [vmem:[%s3 + $0x60] sm:$0xff] %v116
    %266 = vst [vmem:[%s3 + $0x68] sm:$0xff] %v157
    %267 = vst [vmem:[%s3 + $0x70] sm:$0xff] %v198
    %268 = vst [vmem:[%s3 + $0x78] sm:$0xff] %v239
    %269 = vst [vmem:[%s3 + $0x80] sm:$0xff] %v119
    %270 = vst [vmem:[%s3 + $0x88] sm:$0xff] %v160
    %271 = vst [vmem:[%s3 + $0x90] sm:$0xff] %v201
    %272 = vst [vmem:[%s3 + $0x98] sm:$0xff] %v242
    %273 = vst [vmem:[%s3 + $0xa0] sm:$0xff] %v122
    %274 = vst [vmem:[%s3 + $0xa8] sm:$0xff] %v163
    %275 = vst [vmem:[%s3 + $0xb0] sm:$0xff] %v204
    %276 = vst [vmem:[%s3 + $0xb8] sm:$0xff] %v245
    %277 = vst [vmem:[%s3 + $0xc0] sm:$0xff] %v125
    %278 = vst [vmem:[%s3 + $0xc8] sm:$0xff] %v166
    %279 = vst [vmem:[%s3 + $0xd0] sm:$0xff] %v207
    %280 = vst [vmem:[%s3 + $0xd8] sm:$0xff] %v248
    %281 = vst [vmem:[%s3 + $0xe0] sm:$0xff] %v128
    %282 = vst [vmem:[%s3 + $0xe8] sm:$0xff] %v169
    %283 = vst [vmem:[%s3 + $0xf0] sm:$0xff] %v210
    %284 = vst [vmem:[%s3 + $0xf8] sm:$0xff] %v251
    // Predicated region
    $region18: #{rnn_forward.7} parent=1 // pred_check
      _
    $region19: #{rnn_forward.7} parent=1 // pred_check_branch
      %286 = sbr.rel (0) target = $region21
    $region20: #{rnn_forward.7} parent=1 // pred_region
      _
    $region21: #{rnn_forward.7} parent=1 // pred_fallthru
      _
    // Predicated region
    $region22: #{rnn_forward.7} parent=1 // pred_check
      _
    $region23: #{rnn_forward.7} parent=1 // pred_check_branch
      %288 = sbr.rel (0) target = $region25
    $region24: #{rnn_forward.7} parent=1 // pred_region
      _
    $region25: #{rnn_forward.7} parent=1 // pred_fallthru
      _
    %289 = vsyncpa [#allocation3], 1

// kernel: rnn_forward.9
$region0: #{rnn_forward.9}
  #allocation0 [shape = 'u32[]', space=smem, size = 0x4, offset = 0x4, fixed_abs, tag = 'smem constant byte address 0x4 - core index']
  #allocation1 [shape = 'u32[72,128]{1,0:T(1,128)}', space=vmem, size = 0x9000, scoped, tag = 'internal scratch']
  %s0 = inlined_call_operand.vmem [shape: f32[64,128], index: 0, kind: input, shape index: {}]
  %s1 = inlined_call_operand.hbm [shape: f32[128,512], index: 1, kind: input, shape index: {}]
  %s2 = inlined_call_operand.vmem [shape: f32[1,512], index: 2, kind: input, shape index: {}]
  %s3 = inlined_call_operand.vmem [shape: f32[64,512], index: 3, kind: output, shape index: {}]
  %s4 = sld [smem:[#allocation0]]
  $region26: #{rnn_forward.9} parent=0
    _
  %s6 = ssub.s32 1, %s4
  %s7 = scalar_select 0, %s6, %s4
  $region1: #{rnn_forward.9} parent=0
    #allocation2 [shape = 'u8[262144]{0}', space=vmem, size = 0x40000, scoped, tag = 'input window, operand 1, single buffered']
    #allocation3 [shape = 's32[1]{0}', space=sflag, size = 0x4, scoped, tag = 'scoped memory for rnn_forward.9']
    %8 = vsyncpa [#allocation3], 0
    // Predicated region
    $region2: #{rnn_forward.9} parent=1 // pred_check
      _
    $region3: #{rnn_forward.9} parent=1 // pred_check_branch
      %10 = sbr.rel (0) target = $region5
    $region4: #{rnn_forward.9} parent=1 // pred_region
      _
    $region5: #{rnn_forward.9} parent=1 // pred_fallthru
      _
    // Predicated region
    $region6: #{rnn_forward.9} parent=1 // pred_check
      _
    $region7: #{rnn_forward.9} parent=1 // pred_check_branch
      %12 = sbr.rel (0) target = $region9
    $region8: #{rnn_forward.9} parent=1 // pred_region
      %14 = vsyncadd [#allocation3], 0
      %s15 = sshll.u32 %s1, 4
      %s16 = int_to_ptr.hbm [resolvable:$true] %s15
      %s17 = sshll.u32 [#allocation2], 4
      %s18 = int_to_ptr.vmem [resolvable:$true] %s17
      %23 = dma.hbm_to_vmem [thread:$0]  %s16, 8192, %s18, [#allocation3], 512, 512, 32
    $region9: #{rnn_forward.9} parent=1 // pred_fallthru
      _
    // Predicated region
    $region10: #{rnn_forward.9} parent=1 // pred_check
      _
    $region11: #{rnn_forward.9} parent=1 // pred_check_branch
      %25 = sbr.rel (0) target = $region13
    $region12: #{rnn_forward.9} parent=1 // pred_region
      _
    $region13: #{rnn_forward.9} parent=1 // pred_fallthru
      _
    // Predicated region
    $region14: #{rnn_forward.9} parent=1 // pred_check
      _
    $region15: #{rnn_forward.9} parent=1 // pred_check_branch
      %27 = sbr.rel (0) target = $region17
    $region16: #{rnn_forward.9} parent=1 // pred_region
      %29 = dma.done [#allocation3], 8192
    $region17: #{rnn_forward.9} parent=1 // pred_fallthru
      _
    %v30 = vld [vmem:[%s0] sm:$0xff]
    %v31 = vld [vmem:[%s0 + $0x8] sm:$0xff]
    %v32 = vld [vmem:[%s0 + $0x10] sm:$0xff]
    %v33 = vld [vmem:[%s0 + $0x18] sm:$0xff]
    %v34 = vld [vmem:[%s0 + $0x20] sm:$0xff]
    %v35 = vld [vmem:[%s0 + $0x28] sm:$0xff]
    %v36 = vld [vmem:[%s0 + $0x30] sm:$0xff]
    %v37 = vld [vmem:[%s0 + $0x38] sm:$0xff]
    %v38 = vld [vmem:[#allocation2] sm:$0xff]
    %v39 = vld [vmem:[#allocation2 + $0x8] sm:$0xff]
    %v40 = vld [vmem:[#allocation2 + $0x10] sm:$0xff]
    %v41 = vld [vmem:[#allocation2 + $0x18] sm:$0xff]
    %v42 = vld [vmem:[#allocation2 + $0x20] sm:$0xff]
    %v43 = vld [vmem:[#allocation2 + $0x28] sm:$0xff]
    %v44 = vld [vmem:[#allocation2 + $0x30] sm:$0xff]
    %v45 = vld [vmem:[#allocation2 + $0x38] sm:$0xff]
    %v46 = vld [vmem:[#allocation2 + $0x40] sm:$0xff]
    %v47 = vld [vmem:[#allocation2 + $0x48] sm:$0xff]
    %v48 = vld [vmem:[#allocation2 + $0x50] sm:$0xff]
    %v49 = vld [vmem:[#allocation2 + $0x58] sm:$0xff]
    %v50 = vld [vmem:[#allocation2 + $0x60] sm:$0xff]
    %v51 = vld [vmem:[#allocation2 + $0x68] sm:$0xff]
    %v52 = vld [vmem:[#allocation2 + $0x70] sm:$0xff]
    %v53 = vld [vmem:[#allocation2 + $0x78] sm:$0xff]
    %v54 = vld [vmem:[#allocation2 + $0x80] sm:$0xff]
    %v55 = vld [vmem:[#allocation2 + $0x88] sm:$0xff]
    %v56 = vld [vmem:[#allocation2 + $0x90] sm:$0xff]
    %v57 = vld [vmem:[#allocation2 + $0x98] sm:$0xff]
    %v58 = vld [vmem:[#allocation2 + $0xa0] sm:$0xff]
    %v59 = vld [vmem:[#allocation2 + $0xa8] sm:$0xff]
    %v60 = vld [vmem:[#allocation2 + $0xb0] sm:$0xff]
    %v61 = vld [vmem:[#allocation2 + $0xb8] sm:$0xff]
    %v62 = vld [vmem:[#allocation2 + $0xc0] sm:$0xff]
    %v63 = vld [vmem:[#allocation2 + $0xc8] sm:$0xff]
    %v64 = vld [vmem:[#allocation2 + $0xd0] sm:$0xff]
    %v65 = vld [vmem:[#allocation2 + $0xd8] sm:$0xff]
    %v66 = vld [vmem:[#allocation2 + $0xe0] sm:$0xff]
    %v67 = vld [vmem:[#allocation2 + $0xe8] sm:$0xff]
    %v68 = vld [vmem:[#allocation2 + $0xf0] sm:$0xff]
    %v69 = vld [vmem:[#allocation2 + $0xf8] sm:$0xff]
    %v70 = vld [vmem:[#allocation2 + $0x100] sm:$0xff]
    %v71 = vld [vmem:[#allocation2 + $0x108] sm:$0xff]
    %v72 = vld [vmem:[#allocation2 + $0x110] sm:$0xff]
    %v73 = vld [vmem:[#allocation2 + $0x118] sm:$0xff]
    %v74 = vld [vmem:[#allocation2 + $0x120] sm:$0xff]
    %v75 = vld [vmem:[#allocation2 + $0x128] sm:$0xff]
    %v76 = vld [vmem:[#allocation2 + $0x130] sm:$0xff]
    %v77 = vld [vmem:[#allocation2 + $0x138] sm:$0xff]
    %v78 = vld [vmem:[#allocation2 + $0x140] sm:$0xff]
    %v79 = vld [vmem:[#allocation2 + $0x148] sm:$0xff]
    %v80 = vld [vmem:[#allocation2 + $0x150] sm:$0xff]
    %v81 = vld [vmem:[#allocation2 + $0x158] sm:$0xff]
    %v82 = vld [vmem:[#allocation2 + $0x160] sm:$0xff]
    %v83 = vld [vmem:[#allocation2 + $0x168] sm:$0xff]
    %v84 = vld [vmem:[#allocation2 + $0x170] sm:$0xff]
    %v85 = vld [vmem:[#allocation2 + $0x178] sm:$0xff]
    %v86 = vld [vmem:[#allocation2 + $0x180] sm:$0xff]
    %v87 = vld [vmem:[#allocation2 + $0x188] sm:$0xff]
    %v88 = vld [vmem:[#allocation2 + $0x190] sm:$0xff]
    %v89 = vld [vmem:[#allocation2 + $0x198] sm:$0xff]
    %v90 = vld [vmem:[#allocation2 + $0x1a0] sm:$0xff]
    %v91 = vld [vmem:[#allocation2 + $0x1a8] sm:$0xff]
    %v92 = vld [vmem:[#allocation2 + $0x1b0] sm:$0xff]
    %v93 = vld [vmem:[#allocation2 + $0x1b8] sm:$0xff]
    %v94 = vld [vmem:[#allocation2 + $0x1c0] sm:$0xff]
    %v95 = vld [vmem:[#allocation2 + $0x1c8] sm:$0xff]
    %v96 = vld [vmem:[#allocation2 + $0x1d0] sm:$0xff]
    %v97 = vld [vmem:[#allocation2 + $0x1d8] sm:$0xff]
    %v98 = vld [vmem:[#allocation2 + $0x1e0] sm:$0xff]
    %v99 = vld [vmem:[#allocation2 + $0x1e8] sm:$0xff]
    %v100 = vld [vmem:[#allocation2 + $0x1f0] sm:$0xff]
    %v101 = vld [vmem:[#allocation2 + $0x1f8] sm:$0xff]
    %v102 = vld [vmem:[%s2] sm:$0xf]
    %v104 = vperm.slane %v102, 0
    %v105 = vperm.slane %v102, 1
    %v106 = vperm.slane %v102, 2
    %v107 = vperm.slane %v102, 3
    %112 = vmatpush.msra.mxu0 %v98
    %113 = vmatpush.msra.mxu0 %v94
    %114 = vmatpush.msra.mxu0 %v90
    %115 = vmatpush.msra.mxu0 %v86
    %116 = vmatpush.msra.mxu0 %v82
    %117 = vmatpush.msra.mxu0 %v78
    %118 = vmatpush.msra.mxu0 %v74
    %119 = vmatpush.msra.mxu0 %v70
    %120 = vmatpush.msra.mxu0 %v66
    %121 = vmatpush.msra.mxu0 %v62
    %122 = vmatpush.msra.mxu0 %v58
    %123 = vmatpush.msra.mxu0 %v54
    %124 = vmatpush.msra.mxu0 %v50
    %125 = vmatpush.msra.mxu0 %v46
    %126 = vmatpush.msra.mxu0 %v42
    %127 = vmatpush.msra.mxu0 %v38
    %128 = vmatmul.f32.gmra.mxu0 %v30
    %v129 = vpop.f32.mrf.mxu0
    %v130 = vadd.f32 %v104, %v129
    %131 = vmatmul.f32.gmra.mxu0 %v31
    %v132 = vpop.f32.mrf.mxu0
    %v133 = vadd.f32 %v104, %v132
    %134 = vmatmul.f32.gmra.mxu0 %v32
    %v135 = vpop.f32.mrf.mxu0
    %v136 = vadd.f32 %v104, %v135
    %137 = vmatmul.f32.gmra.mxu0 %v33
    %v138 = vpop.f32.mrf.mxu0
    %v139 = vadd.f32 %v104, %v138
    %140 = vmatmul.f32.gmra.mxu0 %v34
    %v141 = vpop.f32.mrf.mxu0
    %v142 = vadd.f32 %v104, %v141
    %143 = vmatmul.f32.gmra.mxu0 %v35
    %v144 = vpop.f32.mrf.mxu0
    %v145 = vadd.f32 %v104, %v144
    %146 = vmatmul.f32.gmra.mxu0 %v36
    %v147 = vpop.f32.mrf.mxu0
    %v148 = vadd.f32 %v104, %v147
    %149 = vmatmul.f32.gmra.mxu0 %v37
    %v150 = vpop.f32.mrf.mxu0
    %v151 = vadd.f32 %v104, %v150
    %152 = vdwg.mxu0
    %153 = vmatpush.msra.mxu0 %v99
    %154 = vmatpush.msra.mxu0 %v95
    %155 = vmatpush.msra.mxu0 %v91
    %156 = vmatpush.msra.mxu0 %v87
    %157 = vmatpush.msra.mxu0 %v83
    %158 = vmatpush.msra.mxu0 %v79
    %159 = vmatpush.msra.mxu0 %v75
    %160 = vmatpush.msra.mxu0 %v71
    %161 = vmatpush.msra.mxu0 %v67
    %162 = vmatpush.msra.mxu0 %v63
    %163 = vmatpush.msra.mxu0 %v59
    %164 = vmatpush.msra.mxu0 %v55
    %165 = vmatpush.msra.mxu0 %v51
    %166 = vmatpush.msra.mxu0 %v47
    %167 = vmatpush.msra.mxu0 %v43
    %168 = vmatpush.msra.mxu0 %v39
    %169 = vmatmul.f32.gmra.mxu0 %v30
    %v170 = vpop.f32.mrf.mxu0
    %v171 = vadd.f32 %v105, %v170
    %172 = vmatmul.f32.gmra.mxu0 %v31
    %v173 = vpop.f32.mrf.mxu0
    %v174 = vadd.f32 %v105, %v173
    %175 = vmatmul.f32.gmra.mxu0 %v32
    %v176 = vpop.f32.mrf.mxu0
    %v177 = vadd.f32 %v105, %v176
    %178 = vmatmul.f32.gmra.mxu0 %v33
    %v179 = vpop.f32.mrf.mxu0
    %v180 = vadd.f32 %v105, %v179
    %181 = vmatmul.f32.gmra.mxu0 %v34
    %v182 = vpop.f32.mrf.mxu0
    %v183 = vadd.f32 %v105, %v182
    %184 = vmatmul.f32.gmra.mxu0 %v35
    %v185 = vpop.f32.mrf.mxu0
    %v186 = vadd.f32 %v105, %v185
    %187 = vmatmul.f32.gmra.mxu0 %v36
    %v188 = vpop.f32.mrf.mxu0
    %v189 = vadd.f32 %v105, %v188
    %190 = vmatmul.f32.gmra.mxu0 %v37
    %v191 = vpop.f32.mrf.mxu0
    %v192 = vadd.f32 %v105, %v191
    %193 = vdwg.mxu0
    %194 = vmatpush.msra.mxu0 %v100
    %195 = vmatpush.msra.mxu0 %v96
    %196 = vmatpush.msra.mxu0 %v92
    %197 = vmatpush.msra.mxu0 %v88
    %198 = vmatpush.msra.mxu0 %v84
    %199 = vmatpush.msra.mxu0 %v80
    %200 = vmatpush.msra.mxu0 %v76
    %201 = vmatpush.msra.mxu0 %v72
    %202 = vmatpush.msra.mxu0 %v68
    %203 = vmatpush.msra.mxu0 %v64
    %204 = vmatpush.msra.mxu0 %v60
    %205 = vmatpush.msra.mxu0 %v56
    %206 = vmatpush.msra.mxu0 %v52
    %207 = vmatpush.msra.mxu0 %v48
    %208 = vmatpush.msra.mxu0 %v44
    %209 = vmatpush.msra.mxu0 %v40
    %210 = vmatmul.f32.gmra.mxu0 %v30
    %v211 = vpop.f32.mrf.mxu0
    %v212 = vadd.f32 %v106, %v211
    %213 = vmatmul.f32.gmra.mxu0 %v31
    %v214 = vpop.f32.mrf.mxu0
    %v215 = vadd.f32 %v106, %v214
    %216 = vmatmul.f32.gmra.mxu0 %v32
    %v217 = vpop.f32.mrf.mxu0
    %v218 = vadd.f32 %v106, %v217
    %219 = vmatmul.f32.gmra.mxu0 %v33
    %v220 = vpop.f32.mrf.mxu0
    %v221 = vadd.f32 %v106, %v220
    %222 = vmatmul.f32.gmra.mxu0 %v34
    %v223 = vpop.f32.mrf.mxu0
    %v224 = vadd.f32 %v106, %v223
    %225 = vmatmul.f32.gmra.mxu0 %v35
    %v226 = vpop.f32.mrf.mxu0
    %v227 = vadd.f32 %v106, %v226
    %228 = vmatmul.f32.gmra.mxu0 %v36
    %v229 = vpop.f32.mrf.mxu0
    %v230 = vadd.f32 %v106, %v229
    %231 = vmatmul.f32.gmra.mxu0 %v37
    %v232 = vpop.f32.mrf.mxu0
    %v233 = vadd.f32 %v106, %v232
    %234 = vdwg.mxu0
    %235 = vmatpush.msra.mxu0 %v101
    %236 = vmatpush.msra.mxu0 %v97
    %237 = vmatpush.msra.mxu0 %v93
    %238 = vmatpush.msra.mxu0 %v89
    %239 = vmatpush.msra.mxu0 %v85
    %240 = vmatpush.msra.mxu0 %v81
    %241 = vmatpush.msra.mxu0 %v77
    %242 = vmatpush.msra.mxu0 %v73
    %243 = vmatpush.msra.mxu0 %v69
    %244 = vmatpush.msra.mxu0 %v65
    %245 = vmatpush.msra.mxu0 %v61
    %246 = vmatpush.msra.mxu0 %v57
    %247 = vmatpush.msra.mxu0 %v53
    %248 = vmatpush.msra.mxu0 %v49
    %249 = vmatpush.msra.mxu0 %v45
    %250 = vmatpush.msra.mxu0 %v41
    %251 = vmatmul.f32.gmra.mxu0 %v30
    %v252 = vpop.f32.mrf.mxu0
    %v253 = vadd.f32 %v107, %v252
    %254 = vmatmul.f32.gmra.mxu0 %v31
    %v255 = vpop.f32.mrf.mxu0
    %v256 = vadd.f32 %v107, %v255
    %257 = vmatmul.f32.gmra.mxu0 %v32
    %v258 = vpop.f32.mrf.mxu0
    %v259 = vadd.f32 %v107, %v258
    %260 = vmatmul.f32.gmra.mxu0 %v33
    %v261 = vpop.f32.mrf.mxu0
    %v262 = vadd.f32 %v107, %v261
    %263 = vmatmul.f32.gmra.mxu0 %v34
    %v264 = vpop.f32.mrf.mxu0
    %v265 = vadd.f32 %v107, %v264
    %266 = vmatmul.f32.gmra.mxu0 %v35
    %v267 = vpop.f32.mrf.mxu0
    %v268 = vadd.f32 %v107, %v267
    %269 = vmatmul.f32.gmra.mxu0 %v36
    %v270 = vpop.f32.mrf.mxu0
    %v271 = vadd.f32 %v107, %v270
    %272 = vmatmul.f32.gmra.mxu0 %v37
    %v273 = vpop.f32.mrf.mxu0
    %v274 = vadd.f32 %v107, %v273
    %275 = vdwg.mxu0
    %276 = vst [vmem:[%s3] sm:$0xff] %v130
    %277 = vst [vmem:[%s3 + $0x8] sm:$0xff] %v171
    %278 = vst [vmem:[%s3 + $0x10] sm:$0xff] %v212
    %279 = vst [vmem:[%s3 + $0x18] sm:$0xff] %v253
    %280 = vst [vmem:[%s3 + $0x20] sm:$0xff] %v133
    %281 = vst [vmem:[%s3 + $0x28] sm:$0xff] %v174
    %282 = vst [vmem:[%s3 + $0x30] sm:$0xff] %v215
    %283 = vst [vmem:[%s3 + $0x38] sm:$0xff] %v256
    %284 = vst [vmem:[%s3 + $0x40] sm:$0xff] %v136
    %285 = vst [vmem:[%s3 + $0x48] sm:$0xff] %v177
    %286 = vst [vmem:[%s3 + $0x50] sm:$0xff] %v218
    %287 = vst [vmem:[%s3 + $0x58] sm:$0xff] %v259
    %288 = vst [vmem:[%s3 + $0x60] sm:$0xff] %v139
    %289 = vst [vmem:[%s3 + $0x68] sm:$0xff] %v180
    %290 = vst [vmem:[%s3 + $0x70] sm:$0xff] %v221
    %291 = vst [vmem:[%s3 + $0x78] sm:$0xff] %v262
    %292 = vst [vmem:[%s3 + $0x80] sm:$0xff] %v142
    %293 = vst [vmem:[%s3 + $0x88] sm:$0xff] %v183
    %294 = vst [vmem:[%s3 + $0x90] sm:$0xff] %v224
    %295 = vst [vmem:[%s3 + $0x98] sm:$0xff] %v265
    %296 = vst [vmem:[%s3 + $0xa0] sm:$0xff] %v145
    %297 = vst [vmem:[%s3 + $0xa8] sm:$0xff] %v186
    %298 = vst [vmem:[%s3 + $0xb0] sm:$0xff] %v227
    %299 = vst [vmem:[%s3 + $0xb8] sm:$0xff] %v268
    %300 = vst [vmem:[%s3 + $0xc0] sm:$0xff] %v148
    %301 = vst [vmem:[%s3 + $0xc8] sm:$0xff] %v189
    %302 = vst [vmem:[%s3 + $0xd0] sm:$0xff] %v230
    %303 = vst [vmem:[%s3 + $0xd8] sm:$0xff] %v271
    %304 = vst [vmem:[%s3 + $0xe0] sm:$0xff] %v151
    %305 = vst [vmem:[%s3 + $0xe8] sm:$0xff] %v192
    %306 = vst [vmem:[%s3 + $0xf0] sm:$0xff] %v233
    %307 = vst [vmem:[%s3 + $0xf8] sm:$0xff] %v274
    // Predicated region
    $region18: #{rnn_forward.9} parent=1 // pred_check
      _
    $region19: #{rnn_forward.9} parent=1 // pred_check_branch
      %309 = sbr.rel (0) target = $region21
    $region20: #{rnn_forward.9} parent=1 // pred_region
      _
    $region21: #{rnn_forward.9} parent=1 // pred_fallthru
      _
    // Predicated region
    $region22: #{rnn_forward.9} parent=1 // pred_check
      _
    $region23: #{rnn_forward.9} parent=1 // pred_check_branch
      %311 = sbr.rel (0) target = $region25
    $region24: #{rnn_forward.9} parent=1 // pred_region
      _
    $region25: #{rnn_forward.9} parent=1 // pred_fallthru
      _
    %312 = vsyncpa [#allocation3], 1

// kernel: rnn_forward.11
$region0: #{rnn_forward.11}
  #allocation0 [shape = 'u32[]', space=smem, size = 0x4, offset = 0x4, fixed_abs, tag = 'smem constant byte address 0x4 - core index']
  #allocation1 [shape = 'u32[72,128]{1,0:T(1,128)}', space=vmem, size = 0x9000, scoped, tag = 'internal scratch']
  %s0 = inlined_call_operand.vmem [shape: f32[64,128], index: 0, kind: input, shape index: {}]
  %s1 = inlined_call_operand.vmem [shape: f32[128,128], index: 1, kind: input, shape index: {}]
  %s2 = inlined_call_operand.vmem [shape: f32[1,128], index: 2, kind: input, shape index: {}]
  %s3 = inlined_call_operand.vmem [shape: f32[64,128], index: 3, kind: output, shape index: {}]
  %s4 = sld [smem:[#allocation0]]
  $region22: #{rnn_forward.11} parent=0
    _
  %s6 = ssub.s32 1, %s4
  %s7 = scalar_select 0, %s6, %s4
  // Predicated region
  $region2: #{rnn_forward.11} parent=0 // pred_check
    _
  $region3: #{rnn_forward.11} parent=0 // pred_check_branch
    %9 = sbr.rel (0) target = $region5
  $region4: #{rnn_forward.11} parent=0 // pred_region
    _
  $region5: #{rnn_forward.11} parent=0 // pred_fallthru
    _
  // Predicated region
  $region6: #{rnn_forward.11} parent=0 // pred_check
    _
  $region7: #{rnn_forward.11} parent=0 // pred_check_branch
    %11 = sbr.rel (0) target = $region9
  $region8: #{rnn_forward.11} parent=0 // pred_region
    _
  $region9: #{rnn_forward.11} parent=0 // pred_fallthru
    _
  // Predicated region
  $region10: #{rnn_forward.11} parent=0 // pred_check
    _
  $region11: #{rnn_forward.11} parent=0 // pred_check_branch
    %13 = sbr.rel (0) target = $region13
  $region12: #{rnn_forward.11} parent=0 // pred_region
    _
  $region13: #{rnn_forward.11} parent=0 // pred_fallthru
    _
  %v14 = vld [vmem:[%s0] sm:$0xff]
  %v15 = vld [vmem:[%s0 + $0x8] sm:$0xff]
  %v16 = vld [vmem:[%s0 + $0x10] sm:$0xff]
  %v17 = vld [vmem:[%s0 + $0x18] sm:$0xff]
  %v18 = vld [vmem:[%s0 + $0x20] sm:$0xff]
  %v19 = vld [vmem:[%s0 + $0x28] sm:$0xff]
  %v20 = vld [vmem:[%s0 + $0x30] sm:$0xff]
  %v21 = vld [vmem:[%s0 + $0x38] sm:$0xff]
  %v22 = vld [vmem:[%s1] sm:$0xff]
  %v23 = vld [vmem:[%s1 + $0x8] sm:$0xff]
  %v24 = vld [vmem:[%s1 + $0x10] sm:$0xff]
  %v25 = vld [vmem:[%s1 + $0x18] sm:$0xff]
  %v26 = vld [vmem:[%s1 + $0x20] sm:$0xff]
  %v27 = vld [vmem:[%s1 + $0x28] sm:$0xff]
  %v28 = vld [vmem:[%s1 + $0x30] sm:$0xff]
  %v29 = vld [vmem:[%s1 + $0x38] sm:$0xff]
  %v30 = vld [vmem:[%s1 + $0x40] sm:$0xff]
  %v31 = vld [vmem:[%s1 + $0x48] sm:$0xff]
  %v32 = vld [vmem:[%s1 + $0x50] sm:$0xff]
  %v33 = vld [vmem:[%s1 + $0x58] sm:$0xff]
  %v34 = vld [vmem:[%s1 + $0x60] sm:$0xff]
  %v35 = vld [vmem:[%s1 + $0x68] sm:$0xff]
  %v36 = vld [vmem:[%s1 + $0x70] sm:$0xff]
  %v37 = vld [vmem:[%s1 + $0x78] sm:$0xff]
  %v38 = vld [vmem:[%s2] sm:$0x1]
  %v40 = vperm.slane %v38, 0
  %42 = vmatpush.msra.mxu0 %v37
  %43 = vmatpush.msra.mxu0 %v36
  %44 = vmatpush.msra.mxu0 %v35
  %45 = vmatpush.msra.mxu0 %v34
  %46 = vmatpush.msra.mxu0 %v33
  %47 = vmatpush.msra.mxu0 %v32
  %48 = vmatpush.msra.mxu0 %v31
  %49 = vmatpush.msra.mxu0 %v30
  %50 = vmatpush.msra.mxu0 %v29
  %51 = vmatpush.msra.mxu0 %v28
  %52 = vmatpush.msra.mxu0 %v27
  %53 = vmatpush.msra.mxu0 %v26
  %54 = vmatpush.msra.mxu0 %v25
  %55 = vmatpush.msra.mxu0 %v24
  %56 = vmatpush.msra.mxu0 %v23
  %57 = vmatpush.msra.mxu0 %v22
  %58 = vmatmul.f32.gmra.mxu0 %v14
  %v59 = vpop.f32.mrf.mxu0
  %v60 = vadd.f32 %v40, %v59
  %61 = vmatmul.f32.gmra.mxu0 %v15
  %v62 = vpop.f32.mrf.mxu0
  %v63 = vadd.f32 %v40, %v62
  %64 = vmatmul.f32.gmra.mxu0 %v16
  %v65 = vpop.f32.mrf.mxu0
  %v66 = vadd.f32 %v40, %v65
  %67 = vmatmul.f32.gmra.mxu0 %v17
  %v68 = vpop.f32.mrf.mxu0
  %v69 = vadd.f32 %v40, %v68
  %70 = vmatmul.f32.gmra.mxu0 %v18
  %v71 = vpop.f32.mrf.mxu0
  %v72 = vadd.f32 %v40, %v71
  %73 = vmatmul.f32.gmra.mxu0 %v19
  %v74 = vpop.f32.mrf.mxu0
  %v75 = vadd.f32 %v40, %v74
  %76 = vmatmul.f32.gmra.mxu0 %v20
  %v77 = vpop.f32.mrf.mxu0
  %v78 = vadd.f32 %v40, %v77
  %79 = vmatmul.f32.gmra.mxu0 %v21
  %v80 = vpop.f32.mrf.mxu0
  %v81 = vadd.f32 %v40, %v80
  %82 = vdwg.mxu0
  %83 = vst [vmem:[%s3] sm:$0xff] %v60
  %84 = vst [vmem:[%s3 + $0x8] sm:$0xff] %v63
  %85 = vst [vmem:[%s3 + $0x10] sm:$0xff] %v66
  %86 = vst [vmem:[%s3 + $0x18] sm:$0xff] %v69
  %87 = vst [vmem:[%s3 + $0x20] sm:$0xff] %v72
  %88 = vst [vmem:[%s3 + $0x28] sm:$0xff] %v75
  %89 = vst [vmem:[%s3 + $0x30] sm:$0xff] %v78
  %90 = vst [vmem:[%s3 + $0x38] sm:$0xff] %v81
  // Predicated region
  $region14: #{rnn_forward.11} parent=0 // pred_check
    _
  $region15: #{rnn_forward.11} parent=0 // pred_check_branch
    %92 = sbr.rel (0) target = $region17
  $region16: #{rnn_forward.11} parent=0 // pred_region
    _
  $region17: #{rnn_forward.11} parent=0 // pred_fallthru
    _
  // Predicated region
  $region18: #{rnn_forward.11} parent=0 // pred_check
    _
  $region19: #{rnn_forward.11} parent=0 // pred_check_branch
    %94 = sbr.rel (0) target = $region21
  $region20: #{rnn_forward.11} parent=0 // pred_region
    _
  $region21: #{rnn_forward.11} parent=0 // pred_fallthru
    _

// kernel: rnn_forward.8
$region0: #{rnn_forward.8}
  #allocation0 [shape = 'u32[]', space=smem, size = 0x4, offset = 0x4, fixed_abs, tag = 'smem constant byte address 0x4 - core index']
  #allocation1 [shape = 'u32[72,128]{1,0:T(1,128)}', space=vmem, size = 0x9000, scoped, tag = 'internal scratch']
  #allocation2 [shape = 'f32[8,128]{1,0:T(8,128)}', space=vmem, size = 0x1000, scoped, tag = 'scratch operand']
  #allocation3 [shape = 'f32[8,128]{1,0:T(8,128)}', space=vmem, size = 0x1000, scoped, tag = 'scratch operand']
  %s0 = inlined_call_operand.vmem [shape: f32[8,8,512], index: 0, kind: input, shape index: {}]
  %s1 = inlined_call_operand.hbm [shape: f32[128,512], index: 1, kind: input, shape index: {}]
  %s2 = inlined_call_operand.vmem [shape: f32[8,128], index: 2, kind: input, shape index: {}, may-alias: {2,3}]
  %s3 = inlined_call_operand.vmem [shape: f32[8,128], index: 3, kind: input, shape index: {}, may-alias: {2,3}]
  %s4 = inlined_call_operand.vmem [shape: f32[8,8,128], index: 4, kind: output, shape index: {0}]
  %s5 = inlined_call_operand.vmem [shape: f32[8,128], index: 5, kind: output, shape index: {1}]
  %s6 = inlined_call_operand.vmem [shape: f32[8,128], index: 6, kind: output, shape index: {2}]
  %7 = xla_tuple %s4, %s5, %s6
  %s8 = sld [smem:[#allocation0]]
  $region54: #{rnn_forward.8} parent=0
    _
  %s10 = ssub.s32 1, %s8
  %s11 = scalar_select 0, %s10, %s8
  $region1: #{rnn_forward.8} parent=0
    #allocation4 [shape = 'u8[262144]{0}', space=vmem, size = 0x40000, scoped, tag = 'input window, operand 1, single buffered']
    #allocation5 [shape = 's32[1]{0}', space=sflag, size = 0x4, scoped, tag = 'scoped memory for rnn_forward.8']
    %12 = vsyncpa [#allocation5], 0
    // Predicated region
    $region2: #{rnn_forward.8} parent=1 // pred_check
      _
    $region3: #{rnn_forward.8} parent=1 // pred_check_branch
      %14 = sbr.rel (0) target = $region5
    $region4: #{rnn_forward.8} parent=1 // pred_region
      _
    $region5: #{rnn_forward.8} parent=1 // pred_fallthru
      _
    // Predicated region
    $region6: #{rnn_forward.8} parent=1 // pred_check
      _
    $region7: #{rnn_forward.8} parent=1 // pred_check_branch
      %16 = sbr.rel (0) target = $region9
    $region8: #{rnn_forward.8} parent=1 // pred_region
      %18 = vsyncadd [#allocation5], 0
      %s19 = sshll.u32 %s1, 4
      %s20 = int_to_ptr.hbm [resolvable:$true] %s19
      %s21 = sshll.u32 [#allocation4], 4
      %s22 = int_to_ptr.vmem [resolvable:$true] %s21
      %27 = dma.hbm_to_vmem [thread:$0]  %s20, 8192, %s22, [#allocation5], 512, 512, 32
    $region9: #{rnn_forward.8} parent=1 // pred_fallthru
      _
    // Predicated region
    $region10: #{rnn_forward.8} parent=1 // pred_check
      _
    $region11: #{rnn_forward.8} parent=1 // pred_check_branch
      %29 = sbr.rel (0) target = $region13
    $region12: #{rnn_forward.8} parent=1 // pred_region
      _
    $region13: #{rnn_forward.8} parent=1 // pred_fallthru
      _
    // Predicated region
    $region14: #{rnn_forward.8} parent=1 // pred_check
      _
    $region15: #{rnn_forward.8} parent=1 // pred_check_branch
      %31 = sbr.rel (0) target = $region17
    $region16: #{rnn_forward.8} parent=1 // pred_region
      _
    $region17: #{rnn_forward.8} parent=1 // pred_fallthru
      _
    // Predicated region
    $region18: #{rnn_forward.8} parent=1 // pred_check
      _
    $region19: #{rnn_forward.8} parent=1 // pred_check_branch
      %33 = sbr.rel (0) target = $region21
    $region20: #{rnn_forward.8} parent=1 // pred_region
      %35 = dma.done [#allocation5], 8192
    $region21: #{rnn_forward.8} parent=1 // pred_fallthru
      _
    %p36 = scmp.eq.s32.totalorder 0, 0
    // Predicated region
    $region22: #{rnn_forward.8} parent=1 // pred_check
      %p37 = pneg %p36
    $region23: #{rnn_forward.8} parent=1 // pred_check_branch
      %39 = sbr.rel (%p37) target = $region25
    $region24: #{rnn_forward.8} parent=1 // pred_region
      %v40 = vld [vmem:[%s2] sm:$0xff]
      %41 = vst [vmem:[#allocation2] sm:$0xff] %v40
      %v42 = vld [vmem:[%s3] sm:$0xff]
      %43 = vst [vmem:[#allocation3] sm:$0xff] %v42
    $region25: #{rnn_forward.8} parent=1 // pred_fallthru
      _
    %v44 = vld [vmem:[%s0] sm:$0xff]
    %v45 = vld [vmem:[%s0 + $0x8] sm:$0xff]
    %v46 = vld [vmem:[%s0 + $0x10] sm:$0xff]
    %v47 = vld [vmem:[%s0 + $0x18] sm:$0xff]
    %v48 = vld [vmem:[#allocation2] sm:$0xff]
    %v49 = vld [vmem:[#allocation4] sm:$0xff]
    %v50 = vld [vmem:[#allocation4 + $0x8] sm:$0xff]
    %v51 = vld [vmem:[#allocation4 + $0x10] sm:$0xff]
    %v52 = vld [vmem:[#allocation4 + $0x18] sm:$0xff]
    %v53 = vld [vmem:[#allocation4 + $0x20] sm:$0xff]
    %v54 = vld [vmem:[#allocation4 + $0x28] sm:$0xff]
    %v55 = vld [vmem:[#allocation4 + $0x30] sm:$0xff]
    %v56 = vld [vmem:[#allocation4 + $0x38] sm:$0xff]
    %v57 = vld [vmem:[#allocation4 + $0x40] sm:$0xff]
    %v58 = vld [vmem:[#allocation4 + $0x48] sm:$0xff]
    %v59 = vld [vmem:[#allocation4 + $0x50] sm:$0xff]
    %v60 = vld [vmem:[#allocation4 + $0x58] sm:$0xff]
    %v61 = vld [vmem:[#allocation4 + $0x60] sm:$0xff]
    %v62 = vld [vmem:[#allocation4 + $0x68] sm:$0xff]
    %v63 = vld [vmem:[#allocation4 + $0x70] sm:$0xff]
    %v64 = vld [vmem:[#allocation4 + $0x78] sm:$0xff]
    %v65 = vld [vmem:[#allocation4 + $0x80] sm:$0xff]
    %v66 = vld [vmem:[#allocation4 + $0x88] sm:$0xff]
    %v67 = vld [vmem:[#allocation4 + $0x90] sm:$0xff]
    %v68 = vld [vmem:[#allocation4 + $0x98] sm:$0xff]
    %v69 = vld [vmem:[#allocation4 + $0xa0] sm:$0xff]
    %v70 = vld [vmem:[#allocation4 + $0xa8] sm:$0xff]
    %v71 = vld [vmem:[#allocation4 + $0xb0] sm:$0xff]
    %v72 = vld [vmem:[#allocation4 + $0xb8] sm:$0xff]
    %v73 = vld [vmem:[#allocation4 + $0xc0] sm:$0xff]
    %v74 = vld [vmem:[#allocation4 + $0xc8] sm:$0xff]
    %v75 = vld [vmem:[#allocation4 + $0xd0] sm:$0xff]
    %v76 = vld [vmem:[#allocation4 + $0xd8] sm:$0xff]
    %v77 = vld [vmem:[#allocation4 + $0xe0] sm:$0xff]
    %v78 = vld [vmem:[#allocation4 + $0xe8] sm:$0xff]
    %v79 = vld [vmem:[#allocation4 + $0xf0] sm:$0xff]
    %v80 = vld [vmem:[#allocation4 + $0xf8] sm:$0xff]
    %v81 = vld [vmem:[#allocation4 + $0x100] sm:$0xff]
    %v82 = vld [vmem:[#allocation4 + $0x108] sm:$0xff]
    %v83 = vld [vmem:[#allocation4 + $0x110] sm:$0xff]
    %v84 = vld [vmem:[#allocation4 + $0x118] sm:$0xff]
    %v85 = vld [vmem:[#allocation4 + $0x120] sm:$0xff]
    %v86 = vld [vmem:[#allocation4 + $0x128] sm:$0xff]
    %v87 = vld [vmem:[#allocation4 + $0x130] sm:$0xff]
    %v88 = vld [vmem:[#allocation4 + $0x138] sm:$0xff]
    %v89 = vld [vmem:[#allocation4 + $0x140] sm:$0xff]
    %v90 = vld [vmem:[#allocation4 + $0x148] sm:$0xff]
    %v91 = vld [vmem:[#allocation4 + $0x150] sm:$0xff]
    %v92 = vld [vmem:[#allocation4 + $0x158] sm:$0xff]
    %v93 = vld [vmem:[#allocation4 + $0x160] sm:$0xff]
    %v94 = vld [vmem:[#allocation4 + $0x168] sm:$0xff]
    %v95 = vld [vmem:[#allocation4 + $0x170] sm:$0xff]
    %v96 = vld [vmem:[#allocation4 + $0x178] sm:$0xff]
    %v97 = vld [vmem:[#allocation4 + $0x180] sm:$0xff]
    %v98 = vld [vmem:[#allocation4 + $0x188] sm:$0xff]
    %v99 = vld [vmem:[#allocation4 + $0x190] sm:$0xff]
    %v100 = vld [vmem:[#allocation4 + $0x198] sm:$0xff]
    %v101 = vld [vmem:[#allocation4 + $0x1a0] sm:$0xff]
    %v102 = vld [vmem:[#allocation4 + $0x1a8] sm:$0xff]
    %v103 = vld [vmem:[#allocation4 + $0x1b0] sm:$0xff]
    %v104 = vld [vmem:[#allocation4 + $0x1b8] sm:$0xff]
    %v105 = vld [vmem:[#allocation4 + $0x1c0] sm:$0xff]
    %v106 = vld [vmem:[#allocation4 + $0x1c8] sm:$0xff]
    %v107 = vld [vmem:[#allocation4 + $0x1d0] sm:$0xff]
    %v108 = vld [vmem:[#allocation4 + $0x1d8] sm:$0xff]
    %v109 = vld [vmem:[#allocation4 + $0x1e0] sm:$0xff]
    %v110 = vld [vmem:[#allocation4 + $0x1e8] sm:$0xff]
    %v111 = vld [vmem:[#allocation4 + $0x1f0] sm:$0xff]
    %v112 = vld [vmem:[#allocation4 + $0x1f8] sm:$0xff]
    %113 = vmatpush.msra.mxu0 %v109
    %114 = vmatpush.msra.mxu0 %v105
    %115 = vmatpush.msra.mxu0 %v101
    %116 = vmatpush.msra.mxu0 %v97
    %117 = vmatpush.msra.mxu0 %v93
    %118 = vmatpush.msra.mxu0 %v89
    %119 = vmatpush.msra.mxu0 %v85
    %120 = vmatpush.msra.mxu0 %v81
    %121 = vmatpush.msra.mxu0 %v77
    %122 = vmatpush.msra.mxu0 %v73
    %123 = vmatpush.msra.mxu0 %v69
    %124 = vmatpush.msra.mxu0 %v65
    %125 = vmatpush.msra.mxu0 %v61
    %126 = vmatpush.msra.mxu0 %v57
    %127 = vmatpush.msra.mxu0 %v53
    %128 = vmatpush.msra.mxu0 %v49
    %129 = vmatmul.f32.gmra.mxu0 %v48
    %v130 = vpop.f32.mrf.mxu0
    %v131 = vadd.f32 0.0, %v130
    %132 = vdwg.mxu0
    %133 = vmatpush.msra.mxu0 %v110
    %134 = vmatpush.msra.mxu0 %v106
    %135 = vmatpush.msra.mxu0 %v102
    %136 = vmatpush.msra.mxu0 %v98
    %137 = vmatpush.msra.mxu0 %v94
    %138 = vmatpush.msra.mxu0 %v90
    %139 = vmatpush.msra.mxu0 %v86
    %140 = vmatpush.msra.mxu0 %v82
    %141 = vmatpush.msra.mxu0 %v78
    %142 = vmatpush.msra.mxu0 %v74
    %143 = vmatpush.msra.mxu0 %v70
    %144 = vmatpush.msra.mxu0 %v66
    %145 = vmatpush.msra.mxu0 %v62
    %146 = vmatpush.msra.mxu0 %v58
    %147 = vmatpush.msra.mxu0 %v54
    %148 = vmatpush.msra.mxu0 %v50
    %149 = vmatmul.f32.gmra.mxu0 %v48
    %v150 = vpop.f32.mrf.mxu0
    %v151 = vadd.f32 0.0, %v150
    %152 = vdwg.mxu0
    %153 = vmatpush.msra.mxu0 %v111
    %154 = vmatpush.msra.mxu0 %v107
    %155 = vmatpush.msra.mxu0 %v103
    %156 = vmatpush.msra.mxu0 %v99
    %157 = vmatpush.msra.mxu0 %v95
    %158 = vmatpush.msra.mxu0 %v91
    %159 = vmatpush.msra.mxu0 %v87
    %160 = vmatpush.msra.mxu0 %v83
    %161 = vmatpush.msra.mxu0 %v79
    %162 = vmatpush.msra.mxu0 %v75
    %163 = vmatpush.msra.mxu0 %v71
    %164 = vmatpush.msra.mxu0 %v67
    %165 = vmatpush.msra.mxu0 %v63
    %166 = vmatpush.msra.mxu0 %v59
    %167 = vmatpush.msra.mxu0 %v55
    %168 = vmatpush.msra.mxu0 %v51
    %169 = vmatmul.f32.gmra.mxu0 %v48
    %v170 = vpop.f32.mrf.mxu0
    %v171 = vadd.f32 0.0, %v170
    %172 = vdwg.mxu0
    %173 = vmatpush.msra.mxu0 %v112
    %174 = vmatpush.msra.mxu0 %v108
    %175 = vmatpush.msra.mxu0 %v104
    %176 = vmatpush.msra.mxu0 %v100
    %177 = vmatpush.msra.mxu0 %v96
    %178 = vmatpush.msra.mxu0 %v92
    %179 = vmatpush.msra.mxu0 %v88
    %180 = vmatpush.msra.mxu0 %v84
    %181 = vmatpush.msra.mxu0 %v80
    %182 = vmatpush.msra.mxu0 %v76
    %183 = vmatpush.msra.mxu0 %v72
    %184 = vmatpush.msra.mxu0 %v68
    %185 = vmatpush.msra.mxu0 %v64
    %186 = vmatpush.msra.mxu0 %v60
    %187 = vmatpush.msra.mxu0 %v56
    %188 = vmatpush.msra.mxu0 %v52
    %189 = vmatmul.f32.gmra.mxu0 %v48
    %v190 = vpop.f32.mrf.mxu0
    %v191 = vadd.f32 0.0, %v190
    %192 = vdwg.mxu0
    %v193 = vadd.f32 %v44, %v131
    %v194 = vadd.f32 %v45, %v151
    %v195 = vadd.f32 %v46, %v171
    %v196 = vadd.f32 %v47, %v191
    %v197 = vxor.u32 %v193, 2147483648
    %v198 = vmul.f32 %v197, 1.442695
    %v199 = vpow.pop %v198
    %v200 = vadd.f32 %v199, 1.0
    %v201 = vrcp.pop %v200
    %v202 = vmul.f32 %v200, %v201
    %v203 = vsub.f32 1.0, %v202
    %v204 = vmul.f32 %v201, %v203
    %v205 = vadd.f32 %v201, %v204
    %vm206 = vweird.f32 %v200
    %vm207 = vweird.f32 %v201
    %vm208 = vmor %vm206, %vm207
    %v209 = vsel %vm208, %v201, %v205
    %v210 = vand.u32 2147483647, %v200
    %vm211 = vcmp.eq.f32.partialorder %v210, 8.507059e+37
    %v212 = vand.u32 %v200, 2147483648
    %v213 = vor.u32 1.1754944e-38, %v212
    %v214 = vsel %vm211, %v213, %v209
    %v215 = vmul.f32 1.0, %v214
    %v216 = vxor.u32 %v194, 2147483648
    %v217 = vmul.f32 %v216, 1.442695
    %v218 = vpow.pop %v217
    %v219 = vadd.f32 %v218, 1.0
    %v220 = vrcp.pop %v219
    %v221 = vmul.f32 %v219, %v220
    %v222 = vsub.f32 1.0, %v221
    %v223 = vmul.f32 %v220, %v222
    %v224 = vadd.f32 %v220, %v223
    %vm225 = vweird.f32 %v219
    %vm226 = vweird.f32 %v220
    %vm227 = vmor %vm225, %vm226
    %v228 = vsel %vm227, %v220, %v224
    %v229 = vand.u32 2147483647, %v219
    %vm230 = vcmp.eq.f32.partialorder %v229, 8.507059e+37
    %v231 = vand.u32 %v219, 2147483648
    %v232 = vor.u32 1.1754944e-38, %v231
    %v233 = vsel %vm230, %v232, %v228
    %v234 = vmul.f32 1.0, %v233
    %v235 = vtanh.pop %v195
    %v236 = vxor.u32 %v196, 2147483648
    %v237 = vmul.f32 %v236, 1.442695
    %v238 = vpow.pop %v237
    %v239 = vadd.f32 %v238, 1.0
    %v240 = vrcp.pop %v239
    %v241 = vmul.f32 %v239, %v240
    %v242 = vsub.f32 1.0, %v241
    %v243 = vmul.f32 %v240, %v242
    %v244 = vadd.f32 %v240, %v243
    %vm245 = vweird.f32 %v239
    %vm246 = vweird.f32 %v240
    %vm247 = vmor %vm245, %vm246
    %v248 = vsel %vm247, %v240, %v244
    %v249 = vand.u32 2147483647, %v239
    %vm250 = vcmp.eq.f32.partialorder %v249, 8.507059e+37
    %v251 = vand.u32 %v239, 2147483648
    %v252 = vor.u32 1.1754944e-38, %v251
    %v253 = vsel %vm250, %v252, %v248
    %v254 = vmul.f32 1.0, %v253
    %v255 = vld [vmem:[#allocation3] sm:$0xff]
    %v256 = vmul.f32 %v234, %v255
    %v257 = vmul.f32 %v215, %v235
    %v258 = vadd.f32 %v256, %v257
    %v259 = vtanh.pop %v258
    %v260 = vmul.f32 %v254, %v259
    %261 = vst [vmem:[#allocation2] sm:$0xff] %v260
    %262 = vst [vmem:[#allocation3] sm:$0xff] %v258
    %263 = vst [vmem:[%s4] sm:$0xff] %v260
    %s264 = scalar_lea.vmem %s0, 32
    %v265 = vld [vmem:[%s264] sm:$0xff]
    %v266 = vld [vmem:[%s264 + $0x8] sm:$0xff]
    %v267 = vld [vmem:[%s264 + $0x10] sm:$0xff]
    %v268 = vld [vmem:[%s264 + $0x18] sm:$0xff]
    %v269 = vld [vmem:[#allocation2] sm:$0xff]
    %v270 = vld [vmem:[#allocation4] sm:$0xff]
    %v271 = vld [vmem:[#allocation4 + $0x8] sm:$0xff]
    %v272 = vld [vmem:[#allocation4 + $0x10] sm:$0xff]
    %v273 = vld [vmem:[#allocation4 + $0x18] sm:$0xff]
    %v274 = vld [vmem:[#allocation4 + $0x20] sm:$0xff]
    %v275 = vld [vmem:[#allocation4 + $0x28] sm:$0xff]
    %v276 = vld [vmem:[#allocation4 + $0x30] sm:$0xff]
    %v277 = vld [vmem:[#allocation4 + $0x38] sm:$0xff]
    %v278 = vld [vmem:[#allocation4 + $0x40] sm:$0xff]
    %v279 = vld [vmem:[#allocation4 + $0x48] sm:$0xff]
    %v280 = vld [vmem:[#allocation4 + $0x50] sm:$0xff]
    %v281 = vld [vmem:[#allocation4 + $0x58] sm:$0xff]
    %v282 = vld [vmem:[#allocation4 + $0x60] sm:$0xff]
    %v283 = vld [vmem:[#allocation4 + $0x68] sm:$0xff]
    %v284 = vld [vmem:[#allocation4 + $0x70] sm:$0xff]
    %v285 = vld [vmem:[#allocation4 + $0x78] sm:$0xff]
    %v286 = vld [vmem:[#allocation4 + $0x80] sm:$0xff]
    %v287 = vld [vmem:[#allocation4 + $0x88] sm:$0xff]
    %v288 = vld [vmem:[#allocation4 + $0x90] sm:$0xff]
    %v289 = vld [vmem:[#allocation4 + $0x98] sm:$0xff]
    %v290 = vld [vmem:[#allocation4 + $0xa0] sm:$0xff]
    %v291 = vld [vmem:[#allocation4 + $0xa8] sm:$0xff]
    %v292 = vld [vmem:[#allocation4 + $0xb0] sm:$0xff]
    %v293 = vld [vmem:[#allocation4 + $0xb8] sm:$0xff]
    %v294 = vld [vmem:[#allocation4 + $0xc0] sm:$0xff]
    %v295 = vld [vmem:[#allocation4 + $0xc8] sm:$0xff]
    %v296 = vld [vmem:[#allocation4 + $0xd0] sm:$0xff]
    %v297 = vld [vmem:[#allocation4 + $0xd8] sm:$0xff]
    %v298 = vld [vmem:[#allocation4 + $0xe0] sm:$0xff]
    %v299 = vld [vmem:[#allocation4 + $0xe8] sm:$0xff]
    %v300 = vld [vmem:[#allocation4 + $0xf0] sm:$0xff]
    %v301 = vld [vmem:[#allocation4 + $0xf8] sm:$0xff]
    %v302 = vld [vmem:[#allocation4 + $0x100] sm:$0xff]
    %v303 = vld [vmem:[#allocation4 + $0x108] sm:$0xff]
    %v304 = vld [vmem:[#allocation4 + $0x110] sm:$0xff]
    %v305 = vld [vmem:[#allocation4 + $0x118] sm:$0xff]
    %v306 = vld [vmem:[#allocation4 + $0x120] sm:$0xff]
    %v307 = vld [vmem:[#allocation4 + $0x128] sm:$0xff]
    %v308 = vld [vmem:[#allocation4 + $0x130] sm:$0xff]
    %v309 = vld [vmem:[#allocation4 + $0x138] sm:$0xff]
    %v310 = vld [vmem:[#allocation4 + $0x140] sm:$0xff]
    %v311 = vld [vmem:[#allocation4 + $0x148] sm:$0xff]
    %v312 = vld [vmem:[#allocation4 + $0x150] sm:$0xff]
    %v313 = vld [vmem:[#allocation4 + $0x158] sm:$0xff]
    %v314 = vld [vmem:[#allocation4 + $0x160] sm:$0xff]
    %v315 = vld [vmem:[#allocation4 + $0x168] sm:$0xff]
    %v316 = vld [vmem:[#allocation4 + $0x170] sm:$0xff]
    %v317 = vld [vmem:[#allocation4 + $0x178] sm:$0xff]
    %v318 = vld [vmem:[#allocation4 + $0x180] sm:$0xff]
    %v319 = vld [vmem:[#allocation4 + $0x188] sm:$0xff]
    %v320 = vld [vmem:[#allocation4 + $0x190] sm:$0xff]
    %v321 = vld [vmem:[#allocation4 + $0x198] sm:$0xff]
    %v322 = vld [vmem:[#allocation4 + $0x1a0] sm:$0xff]
    %v323 = vld [vmem:[#allocation4 + $0x1a8] sm:$0xff]
    %v324 = vld [vmem:[#allocation4 + $0x1b0] sm:$0xff]
    %v325 = vld [vmem:[#allocation4 + $0x1b8] sm:$0xff]
    %v326 = vld [vmem:[#allocation4 + $0x1c0] sm:$0xff]
    %v327 = vld [vmem:[#allocation4 + $0x1c8] sm:$0xff]
    %v328 = vld [vmem:[#allocation4 + $0x1d0] sm:$0xff]
    %v329 = vld [vmem:[#allocation4 + $0x1d8] sm:$0xff]
    %v330 = vld [vmem:[#allocation4 + $0x1e0] sm:$0xff]
    %v331 = vld [vmem:[#allocation4 + $0x1e8] sm:$0xff]
    %v332 = vld [vmem:[#allocation4 + $0x1f0] sm:$0xff]
    %v333 = vld [vmem:[#allocation4 + $0x1f8] sm:$0xff]
    %334 = vmatpush.msra.mxu0 %v330
    %335 = vmatpush.msra.mxu0 %v326
    %336 = vmatpush.msra.mxu0 %v322
    %337 = vmatpush.msra.mxu0 %v318
    %338 = vmatpush.msra.mxu0 %v314
    %339 = vmatpush.msra.mxu0 %v310
    %340 = vmatpush.msra.mxu0 %v306
    %341 = vmatpush.msra.mxu0 %v302
    %342 = vmatpush.msra.mxu0 %v298
    %343 = vmatpush.msra.mxu0 %v294
    %344 = vmatpush.msra.mxu0 %v290
    %345 = vmatpush.msra.mxu0 %v286
    %346 = vmatpush.msra.mxu0 %v282
    %347 = vmatpush.msra.mxu0 %v278
    %348 = vmatpush.msra.mxu0 %v274
    %349 = vmatpush.msra.mxu0 %v270
    %350 = vmatmul.f32.gmra.mxu0 %v269
    %v351 = vpop.f32.mrf.mxu0
    %v352 = vadd.f32 0.0, %v351
    %353 = vdwg.mxu0
    %354 = vmatpush.msra.mxu0 %v331
    %355 = vmatpush.msra.mxu0 %v327
    %356 = vmatpush.msra.mxu0 %v323
    %357 = vmatpush.msra.mxu0 %v319
    %358 = vmatpush.msra.mxu0 %v315
    %359 = vmatpush.msra.mxu0 %v311
    %360 = vmatpush.msra.mxu0 %v307
    %361 = vmatpush.msra.mxu0 %v303
    %362 = vmatpush.msra.mxu0 %v299
    %363 = vmatpush.msra.mxu0 %v295
    %364 = vmatpush.msra.mxu0 %v291
    %365 = vmatpush.msra.mxu0 %v287
    %366 = vmatpush.msra.mxu0 %v283
    %367 = vmatpush.msra.mxu0 %v279
    %368 = vmatpush.msra.mxu0 %v275
    %369 = vmatpush.msra.mxu0 %v271
    %370 = vmatmul.f32.gmra.mxu0 %v269
    %v371 = vpop.f32.mrf.mxu0
    %v372 = vadd.f32 0.0, %v371
    %373 = vdwg.mxu0
    %374 = vmatpush.msra.mxu0 %v332
    %375 = vmatpush.msra.mxu0 %v328
    %376 = vmatpush.msra.mxu0 %v324
    %377 = vmatpush.msra.mxu0 %v320
    %378 = vmatpush.msra.mxu0 %v316
    %379 = vmatpush.msra.mxu0 %v312
    %380 = vmatpush.msra.mxu0 %v308
    %381 = vmatpush.msra.mxu0 %v304
    %382 = vmatpush.msra.mxu0 %v300
    %383 = vmatpush.msra.mxu0 %v296
    %384 = vmatpush.msra.mxu0 %v292
    %385 = vmatpush.msra.mxu0 %v288
    %386 = vmatpush.msra.mxu0 %v284
    %387 = vmatpush.msra.mxu0 %v280
    %388 = vmatpush.msra.mxu0 %v276
    %389 = vmatpush.msra.mxu0 %v272
    %390 = vmatmul.f32.gmra.mxu0 %v269
    %v391 = vpop.f32.mrf.mxu0
    %v392 = vadd.f32 0.0, %v391
    %393 = vdwg.mxu0
    %394 = vmatpush.msra.mxu0 %v333
    %395 = vmatpush.msra.mxu0 %v329
    %396 = vmatpush.msra.mxu0 %v325
    %397 = vmatpush.msra.mxu0 %v321
    %398 = vmatpush.msra.mxu0 %v317
    %399 = vmatpush.msra.mxu0 %v313
    %400 = vmatpush.msra.mxu0 %v309
    %401 = vmatpush.msra.mxu0 %v305
    %402 = vmatpush.msra.mxu0 %v301
    %403 = vmatpush.msra.mxu0 %v297
    %404 = vmatpush.msra.mxu0 %v293
    %405 = vmatpush.msra.mxu0 %v289
    %406 = vmatpush.msra.mxu0 %v285
    %407 = vmatpush.msra.mxu0 %v281
    %408 = vmatpush.msra.mxu0 %v277
    %409 = vmatpush.msra.mxu0 %v273
    %410 = vmatmul.f32.gmra.mxu0 %v269
    %v411 = vpop.f32.mrf.mxu0
    %v412 = vadd.f32 0.0, %v411
    %413 = vdwg.mxu0
    %v414 = vadd.f32 %v265, %v352
    %v415 = vadd.f32 %v266, %v372
    %v416 = vadd.f32 %v267, %v392
    %v417 = vadd.f32 %v268, %v412
    %v418 = vxor.u32 %v414, 2147483648
    %v419 = vmul.f32 %v418, 1.442695
    %v420 = vpow.pop %v419
    %v421 = vadd.f32 %v420, 1.0
    %v422 = vrcp.pop %v421
    %v423 = vmul.f32 %v421, %v422
    %v424 = vsub.f32 1.0, %v423
    %v425 = vmul.f32 %v422, %v424
    %v426 = vadd.f32 %v422, %v425
    %vm427 = vweird.f32 %v421
    %vm428 = vweird.f32 %v422
    %vm429 = vmor %vm427, %vm428
    %v430 = vsel %vm429, %v422, %v426
    %v431 = vand.u32 2147483647, %v421
    %vm432 = vcmp.eq.f32.partialorder %v431, 8.507059e+37
    %v433 = vand.u32 %v421, 2147483648
    %v434 = vor.u32 1.1754944e-38, %v433
    %v435 = vsel %vm432, %v434, %v430
    %v436 = vmul.f32 1.0, %v435
    %v437 = vxor.u32 %v415, 2147483648
    %v438 = vmul.f32 %v437, 1.442695
    %v439 = vpow.pop %v438
    %v440 = vadd.f32 %v439, 1.0
    %v441 = vrcp.pop %v440
    %v442 = vmul.f32 %v440, %v441
    %v443 = vsub.f32 1.0, %v442
    %v444 = vmul.f32 %v441, %v443
    %v445 = vadd.f32 %v441, %v444
    %vm446 = vweird.f32 %v440
    %vm447 = vweird.f32 %v441
    %vm448 = vmor %vm446, %vm447
    %v449 = vsel %vm448, %v441, %v445
    %v450 = vand.u32 2147483647, %v440
    %vm451 = vcmp.eq.f32.partialorder %v450, 8.507059e+37
    %v452 = vand.u32 %v440, 2147483648
    %v453 = vor.u32 1.1754944e-38, %v452
    %v454 = vsel %vm451, %v453, %v449
    %v455 = vmul.f32 1.0, %v454
    %v456 = vtanh.pop %v416
    %v457 = vxor.u32 %v417, 2147483648
    %v458 = vmul.f32 %v457, 1.442695
    %v459 = vpow.pop %v458
    %v460 = vadd.f32 %v459, 1.0
    %v461 = vrcp.pop %v460
    %v462 = vmul.f32 %v460, %v461
    %v463 = vsub.f32 1.0, %v462
    %v464 = vmul.f32 %v461, %v463
    %v465 = vadd.f32 %v461, %v464
    %vm466 = vweird.f32 %v460
    %vm467 = vweird.f32 %v461
    %vm468 = vmor %vm466, %vm467
    %v469 = vsel %vm468, %v461, %v465
    %v470 = vand.u32 2147483647, %v460
    %vm471 = vcmp.eq.f32.partialorder %v470, 8.507059e+37
    %v472 = vand.u32 %v460, 2147483648
    %v473 = vor.u32 1.1754944e-38, %v472
    %v474 = vsel %vm471, %v473, %v469
    %v475 = vmul.f32 1.0, %v474
    %v476 = vld [vmem:[#allocation3] sm:$0xff]
    %v477 = vmul.f32 %v455, %v476
    %v478 = vmul.f32 %v436, %v456
    %v479 = vadd.f32 %v477, %v478
    %v480 = vtanh.pop %v479
    %v481 = vmul.f32 %v475, %v480
    %482 = vst [vmem:[#allocation2] sm:$0xff] %v481
    %483 = vst [vmem:[#allocation3] sm:$0xff] %v479
    %s484 = scalar_lea.vmem %s4, 8
    %485 = vst [vmem:[%s484] sm:$0xff] %v481
    %s486 = scalar_lea.vmem %s0, 64
    %v487 = vld [vmem:[%s486] sm:$0xff]
    %v488 = vld [vmem:[%s486 + $0x8] sm:$0xff]
    %v489 = vld [vmem:[%s486 + $0x10] sm:$0xff]
    %v490 = vld [vmem:[%s486 + $0x18] sm:$0xff]
    %v491 = vld [vmem:[#allocation2] sm:$0xff]
    %v492 = vld [vmem:[#allocation4] sm:$0xff]
    %v493 = vld [vmem:[#allocation4 + $0x8] sm:$0xff]
    %v494 = vld [vmem:[#allocation4 + $0x10] sm:$0xff]
    %v495 = vld [vmem:[#allocation4 + $0x18] sm:$0xff]
    %v496 = vld [vmem:[#allocation4 + $0x20] sm:$0xff]
    %v497 = vld [vmem:[#allocation4 + $0x28] sm:$0xff]
    %v498 = vld [vmem:[#allocation4 + $0x30] sm:$0xff]
    %v499 = vld [vmem:[#allocation4 + $0x38] sm:$0xff]
    %v500 = vld [vmem:[#allocation4 + $0x40] sm:$0xff]
    %v501 = vld [vmem:[#allocation4 + $0x48] sm:$0xff]
    %v502 = vld [vmem:[#allocation4 + $0x50] sm:$0xff]
    %v503 = vld [vmem:[#allocation4 + $0x58] sm:$0xff]
    %v504 = vld [vmem:[#allocation4 + $0x60] sm:$0xff]
    %v505 = vld [vmem:[#allocation4 + $0x68] sm:$0xff]
    %v506 = vld [vmem:[#allocation4 + $0x70] sm:$0xff]
    %v507 = vld [vmem:[#allocation4 + $0x78] sm:$0xff]
    %v508 = vld [vmem:[#allocation4 + $0x80] sm:$0xff]
    %v509 = vld [vmem:[#allocation4 + $0x88] sm:$0xff]
    %v510 = vld [vmem:[#allocation4 + $0x90] sm:$0xff]
    %v511 = vld [vmem:[#allocation4 + $0x98] sm:$0xff]
    %v512 = vld [vmem:[#allocation4 + $0xa0] sm:$0xff]
    %v513 = vld [vmem:[#allocation4 + $0xa8] sm:$0xff]
    %v514 = vld [vmem:[#allocation4 + $0xb0] sm:$0xff]
    %v515 = vld [vmem:[#allocation4 + $0xb8] sm:$0xff]
    %v516 = vld [vmem:[#allocation4 + $0xc0] sm:$0xff]
    %v517 = vld [vmem:[#allocation4 + $0xc8] sm:$0xff]
    %v518 = vld [vmem:[#allocation4 + $0xd0] sm:$0xff]
    %v519 = vld [vmem:[#allocation4 + $0xd8] sm:$0xff]
    %v520 = vld [vmem:[#allocation4 + $0xe0] sm:$0xff]
    %v521 = vld [vmem:[#allocation4 + $0xe8] sm:$0xff]
    %v522 = vld [vmem:[#allocation4 + $0xf0] sm:$0xff]
    %v523 = vld [vmem:[#allocation4 + $0xf8] sm:$0xff]
    %v524 = vld [vmem:[#allocation4 + $0x100] sm:$0xff]
    %v525 = vld [vmem:[#allocation4 + $0x108] sm:$0xff]
    %v526 = vld [vmem:[#allocation4 + $0x110] sm:$0xff]
    %v527 = vld [vmem:[#allocation4 + $0x118] sm:$0xff]
    %v528 = vld [vmem:[#allocation4 + $0x120] sm:$0xff]
    %v529 = vld [vmem:[#allocation4 + $0x128] sm:$0xff]
    %v530 = vld [vmem:[#allocation4 + $0x130] sm:$0xff]
    %v531 = vld [vmem:[#allocation4 + $0x138] sm:$0xff]
    %v532 = vld [vmem:[#allocation4 + $0x140] sm:$0xff]
    %v533 = vld [vmem:[#allocation4 + $0x148] sm:$0xff]
    %v534 = vld [vmem:[#allocation4 + $0x150] sm:$0xff]
    %v535 = vld [vmem:[#allocation4 + $0x158] sm:$0xff]
    %v536 = vld [vmem:[#allocation4 + $0x160] sm:$0xff]
    %v537 = vld [vmem:[#allocation4 + $0x168] sm:$0xff]
    %v538 = vld [vmem:[#allocation4 + $0x170] sm:$0xff]
    %v539 = vld [vmem:[#allocation4 + $0x178] sm:$0xff]
    %v540 = vld [vmem:[#allocation4 + $0x180] sm:$0xff]
    %v541 = vld [vmem:[#allocation4 + $0x188] sm:$0xff]
    %v542 = vld [vmem:[#allocation4 + $0x190] sm:$0xff]
    %v543 = vld [vmem:[#allocation4 + $0x198] sm:$0xff]
    %v544 = vld [vmem:[#allocation4 + $0x1a0] sm:$0xff]
    %v545 = vld [vmem:[#allocation4 + $0x1a8] sm:$0xff]
    %v546 = vld [vmem:[#allocation4 + $0x1b0] sm:$0xff]
    %v547 = vld [vmem:[#allocation4 + $0x1b8] sm:$0xff]
    %v548 = vld [vmem:[#allocation4 + $0x1c0] sm:$0xff]
    %v549 = vld [vmem:[#allocation4 + $0x1c8] sm:$0xff]
    %v550 = vld [vmem:[#allocation4 + $0x1d0] sm:$0xff]
    %v551 = vld [vmem:[#allocation4 + $0x1d8] sm:$0xff]
    %v552 = vld [vmem:[#allocation4 + $0x1e0] sm:$0xff]
    %v553 = vld [vmem:[#allocation4 + $0x1e8] sm:$0xff]
    %v554 = vld [vmem:[#allocation4 + $0x1f0] sm:$0xff]
    %v555 = vld [vmem:[#allocation4 + $0x1f8] sm:$0xff]
    %556 = vmatpush.msra.mxu0 %v552
    %557 = vmatpush.msra.mxu0 %v548
    %558 = vmatpush.msra.mxu0 %v544
    %559 = vmatpush.msra.mxu0 %v540
    %560 = vmatpush.msra.mxu0 %v536
    %561 = vmatpush.msra.mxu0 %v532
    %562 = vmatpush.msra.mxu0 %v528
    %563 = vmatpush.msra.mxu0 %v524
    %564 = vmatpush.msra.mxu0 %v520
    %565 = vmatpush.msra.mxu0 %v516
    %566 = vmatpush.msra.mxu0 %v512
    %567 = vmatpush.msra.mxu0 %v508
    %568 = vmatpush.msra.mxu0 %v504
    %569 = vmatpush.msra.mxu0 %v500
    %570 = vmatpush.msra.mxu0 %v496
    %571 = vmatpush.msra.mxu0 %v492
    %572 = vmatmul.f32.gmra.mxu0 %v491
    %v573 = vpop.f32.mrf.mxu0
    %v574 = vadd.f32 0.0, %v573
    %575 = vdwg.mxu0
    %576 = vmatpush.msra.mxu0 %v553
    %577 = vmatpush.msra.mxu0 %v549
    %578 = vmatpush.msra.mxu0 %v545
    %579 = vmatpush.msra.mxu0 %v541
    %580 = vmatpush.msra.mxu0 %v537
    %581 = vmatpush.msra.mxu0 %v533
    %582 = vmatpush.msra.mxu0 %v529
    %583 = vmatpush.msra.mxu0 %v525
    %584 = vmatpush.msra.mxu0 %v521
    %585 = vmatpush.msra.mxu0 %v517
    %586 = vmatpush.msra.mxu0 %v513
    %587 = vmatpush.msra.mxu0 %v509
    %588 = vmatpush.msra.mxu0 %v505
    %589 = vmatpush.msra.mxu0 %v501
    %590 = vmatpush.msra.mxu0 %v497
    %591 = vmatpush.msra.mxu0 %v493
    %592 = vmatmul.f32.gmra.mxu0 %v491
    %v593 = vpop.f32.mrf.mxu0
    %v594 = vadd.f32 0.0, %v593
    %595 = vdwg.mxu0
    %596 = vmatpush.msra.mxu0 %v554
    %597 = vmatpush.msra.mxu0 %v550
    %598 = vmatpush.msra.mxu0 %v546
    %599 = vmatpush.msra.mxu0 %v542
    %600 = vmatpush.msra.mxu0 %v538
    %601 = vmatpush.msra.mxu0 %v534
    %602 = vmatpush.msra.mxu0 %v530
    %603 = vmatpush.msra.mxu0 %v526
    %604 = vmatpush.msra.mxu0 %v522
    %605 = vmatpush.msra.mxu0 %v518
    %606 = vmatpush.msra.mxu0 %v514
    %607 = vmatpush.msra.mxu0 %v510
    %608 = vmatpush.msra.mxu0 %v506
    %609 = vmatpush.msra.mxu0 %v502
    %610 = vmatpush.msra.mxu0 %v498
    %611 = vmatpush.msra.mxu0 %v494
    %612 = vmatmul.f32.gmra.mxu0 %v491
    %v613 = vpop.f32.mrf.mxu0
    %v614 = vadd.f32 0.0, %v613
    %615 = vdwg.mxu0
    %616 = vmatpush.msra.mxu0 %v555
    %617 = vmatpush.msra.mxu0 %v551
    %618 = vmatpush.msra.mxu0 %v547
    %619 = vmatpush.msra.mxu0 %v543
    %620 = vmatpush.msra.mxu0 %v539
    %621 = vmatpush.msra.mxu0 %v535
    %622 = vmatpush.msra.mxu0 %v531
    %623 = vmatpush.msra.mxu0 %v527
    %624 = vmatpush.msra.mxu0 %v523
    %625 = vmatpush.msra.mxu0 %v519
    %626 = vmatpush.msra.mxu0 %v515
    %627 = vmatpush.msra.mxu0 %v511
    %628 = vmatpush.msra.mxu0 %v507
    %629 = vmatpush.msra.mxu0 %v503
    %630 = vmatpush.msra.mxu0 %v499
    %631 = vmatpush.msra.mxu0 %v495
    %632 = vmatmul.f32.gmra.mxu0 %v491
    %v633 = vpop.f32.mrf.mxu0
    %v634 = vadd.f32 0.0, %v633
    %635 = vdwg.mxu0
    %v636 = vadd.f32 %v487, %v574
    %v637 = vadd.f32 %v488, %v594
    %v638 = vadd.f32 %v489, %v614
    %v639 = vadd.f32 %v490, %v634
    %v640 = vxor.u32 %v636, 2147483648
    %v641 = vmul.f32 %v640, 1.442695
    %v642 = vpow.pop %v641
    %v643 = vadd.f32 %v642, 1.0
    %v644 = vrcp.pop %v643
    %v645 = vmul.f32 %v643, %v644
    %v646 = vsub.f32 1.0, %v645
    %v647 = vmul.f32 %v644, %v646
    %v648 = vadd.f32 %v644, %v647
    %vm649 = vweird.f32 %v643
    %vm650 = vweird.f32 %v644
    %vm651 = vmor %vm649, %vm650
    %v652 = vsel %vm651, %v644, %v648
    %v653 = vand.u32 2147483647, %v643
    %vm654 = vcmp.eq.f32.partialorder %v653, 8.507059e+37
    %v655 = vand.u32 %v643, 2147483648
    %v656 = vor.u32 1.1754944e-38, %v655
    %v657 = vsel %vm654, %v656, %v652
    %v658 = vmul.f32 1.0, %v657
    %v659 = vxor.u32 %v637, 2147483648
    %v660 = vmul.f32 %v659, 1.442695
    %v661 = vpow.pop %v660
    %v662 = vadd.f32 %v661, 1.0
    %v663 = vrcp.pop %v662
    %v664 = vmul.f32 %v662, %v663
    %v665 = vsub.f32 1.0, %v664
    %v666 = vmul.f32 %v663, %v665
    %v667 = vadd.f32 %v663, %v666
    %vm668 = vweird.f32 %v662
    %vm669 = vweird.f32 %v663
    %vm670 = vmor %vm668, %vm669
    %v671 = vsel %vm670, %v663, %v667
    %v672 = vand.u32 2147483647, %v662
    %vm673 = vcmp.eq.f32.partialorder %v672, 8.507059e+37
    %v674 = vand.u32 %v662, 2147483648
    %v675 = vor.u32 1.1754944e-38, %v674
    %v676 = vsel %vm673, %v675, %v671
    %v677 = vmul.f32 1.0, %v676
    %v678 = vtanh.pop %v638
    %v679 = vxor.u32 %v639, 2147483648
    %v680 = vmul.f32 %v679, 1.442695
    %v681 = vpow.pop %v680
    %v682 = vadd.f32 %v681, 1.0
    %v683 = vrcp.pop %v682
    %v684 = vmul.f32 %v682, %v683
    %v685 = vsub.f32 1.0, %v684
    %v686 = vmul.f32 %v683, %v685
    %v687 = vadd.f32 %v683, %v686
    %vm688 = vweird.f32 %v682
    %vm689 = vweird.f32 %v683
    %vm690 = vmor %vm688, %vm689
    %v691 = vsel %vm690, %v683, %v687
    %v692 = vand.u32 2147483647, %v682
    %vm693 = vcmp.eq.f32.partialorder %v692, 8.507059e+37
    %v694 = vand.u32 %v682, 2147483648
    %v695 = vor.u32 1.1754944e-38, %v694
    %v696 = vsel %vm693, %v695, %v691
    %v697 = vmul.f32 1.0, %v696
    %v698 = vld [vmem:[#allocation3] sm:$0xff]
    %v699 = vmul.f32 %v677, %v698
    %v700 = vmul.f32 %v658, %v678
    %v701 = vadd.f32 %v699, %v700
    %v702 = vtanh.pop %v701
    %v703 = vmul.f32 %v697, %v702
    %704 = vst [vmem:[#allocation2] sm:$0xff] %v703
    %705 = vst [vmem:[#allocation3] sm:$0xff] %v701
    %s706 = scalar_lea.vmem %s4, 16
    %707 = vst [vmem:[%s706] sm:$0xff] %v703
    %s708 = scalar_lea.vmem %s0, 96
    %v709 = vld [vmem:[%s708] sm:$0xff]
    %v710 = vld [vmem:[%s708 + $0x8] sm:$0xff]
    %v711 = vld [vmem:[%s708 + $0x10] sm:$0xff]
    %v712 = vld [vmem:[%s708 + $0x18] sm:$0xff]
    %v713 = vld [vmem:[#allocation2] sm:$0xff]
    %v714 = vld [vmem:[#allocation4] sm:$0xff]
    %v715 = vld [vmem:[#allocation4 + $0x8] sm:$0xff]
    %v716 = vld [vmem:[#allocation4 + $0x10] sm:$0xff]
    %v717 = vld [vmem:[#allocation4 + $0x18] sm:$0xff]
    %v718 = vld [vmem:[#allocation4 + $0x20] sm:$0xff]
    %v719 = vld [vmem:[#allocation4 + $0x28] sm:$0xff]
    %v720 = vld [vmem:[#allocation4 + $0x30] sm:$0xff]
    %v721 = vld [vmem:[#allocation4 + $0x38] sm:$0xff]
    %v722 = vld [vmem:[#allocation4 + $0x40] sm:$0xff]
    %v723 = vld [vmem:[#allocation4 + $0x48] sm:$0xff]
    %v724 = vld [vmem:[#allocation4 + $0x50] sm:$0xff]
    %v725 = vld [vmem:[#allocation4 + $0x58] sm:$0xff]
    %v726 = vld [vmem:[#allocation4 + $0x60] sm:$0xff]
    %v727 = vld [vmem:[#allocation4 + $0x68] sm:$0xff]
    %v728 = vld [vmem:[#allocation4 + $0x70] sm:$0xff]
    %v729 = vld [vmem:[#allocation4 + $0x78] sm:$0xff]
    %v730 = vld [vmem:[#allocation4 + $0x80] sm:$0xff]
    %v731 = vld [vmem:[#allocation4 + $0x88] sm:$0xff]
    %v732 = vld [vmem:[#allocation4 + $0x90] sm:$0xff]
    %v733 = vld [vmem:[#allocation4 + $0x98] sm:$0xff]
    %v734 = vld [vmem:[#allocation4 + $0xa0] sm:$0xff]
    %v735 = vld [vmem:[#allocation4 + $0xa8] sm:$0xff]
    %v736 = vld [vmem:[#allocation4 + $0xb0] sm:$0xff]
    %v737 = vld [vmem:[#allocation4 + $0xb8] sm:$0xff]
    %v738 = vld [vmem:[#allocation4 + $0xc0] sm:$0xff]
    %v739 = vld [vmem:[#allocation4 + $0xc8] sm:$0xff]
    %v740 = vld [vmem:[#allocation4 + $0xd0] sm:$0xff]
    %v741 = vld [vmem:[#allocation4 + $0xd8] sm:$0xff]
    %v742 = vld [vmem:[#allocation4 + $0xe0] sm:$0xff]
    %v743 = vld [vmem:[#allocation4 + $0xe8] sm:$0xff]
    %v744 = vld [vmem:[#allocation4 + $0xf0] sm:$0xff]
    %v745 = vld [vmem:[#allocation4 + $0xf8] sm:$0xff]
    %v746 = vld [vmem:[#allocation4 + $0x100] sm:$0xff]
    %v747 = vld [vmem:[#allocation4 + $0x108] sm:$0xff]
    %v748 = vld [vmem:[#allocation4 + $0x110] sm:$0xff]
    %v749 = vld [vmem:[#allocation4 + $0x118] sm:$0xff]
    %v750 = vld [vmem:[#allocation4 + $0x120] sm:$0xff]
    %v751 = vld [vmem:[#allocation4 + $0x128] sm:$0xff]
    %v752 = vld [vmem:[#allocation4 + $0x130] sm:$0xff]
    %v753 = vld [vmem:[#allocation4 + $0x138] sm:$0xff]
    %v754 = vld [vmem:[#allocation4 + $0x140] sm:$0xff]
    %v755 = vld [vmem:[#allocation4 + $0x148] sm:$0xff]
    %v756 = vld [vmem:[#allocation4 + $0x150] sm:$0xff]
    %v757 = vld [vmem:[#allocation4 + $0x158] sm:$0xff]
    %v758 = vld [vmem:[#allocation4 + $0x160] sm:$0xff]
    %v759 = vld [vmem:[#allocation4 + $0x168] sm:$0xff]
    %v760 = vld [vmem:[#allocation4 + $0x170] sm:$0xff]
    %v761 = vld [vmem:[#allocation4 + $0x178] sm:$0xff]
    %v762 = vld [vmem:[#allocation4 + $0x180] sm:$0xff]
    %v763 = vld [vmem:[#allocation4 + $0x188] sm:$0xff]
    %v764 = vld [vmem:[#allocation4 + $0x190] sm:$0xff]
    %v765 = vld [vmem:[#allocation4 + $0x198] sm:$0xff]
    %v766 = vld [vmem:[#allocation4 + $0x1a0] sm:$0xff]
    %v767 = vld [vmem:[#allocation4 + $0x1a8] sm:$0xff]
    %v768 = vld [vmem:[#allocation4 + $0x1b0] sm:$0xff]
    %v769 = vld [vmem:[#allocation4 + $0x1b8] sm:$0xff]
    %v770 = vld [vmem:[#allocation4 + $0x1c0] sm:$0xff]
    %v771 = vld [vmem:[#allocation4 + $0x1c8] sm:$0xff]
    %v772 = vld [vmem:[#allocation4 + $0x1d0] sm:$0xff]
    %v773 = vld [vmem:[#allocation4 + $0x1d8] sm:$0xff]
    %v774 = vld [vmem:[#allocation4 + $0x1e0] sm:$0xff]
    %v775 = vld [vmem:[#allocation4 + $0x1e8] sm:$0xff]
    %v776 = vld [vmem:[#allocation4 + $0x1f0] sm:$0xff]
    %v777 = vld [vmem:[#allocation4 + $0x1f8] sm:$0xff]
    %778 = vmatpush.msra.mxu0 %v774
    %779 = vmatpush.msra.mxu0 %v770
    %780 = vmatpush.msra.mxu0 %v766
    %781 = vmatpush.msra.mxu0 %v762
    %782 = vmatpush.msra.mxu0 %v758
    %783 = vmatpush.msra.mxu0 %v754
    %784 = vmatpush.msra.mxu0 %v750
    %785 = vmatpush.msra.mxu0 %v746
    %786 = vmatpush.msra.mxu0 %v742
    %787 = vmatpush.msra.mxu0 %v738
    %788 = vmatpush.msra.mxu0 %v734
    %789 = vmatpush.msra.mxu0 %v730
    %790 = vmatpush.msra.mxu0 %v726
    %791 = vmatpush.msra.mxu0 %v722
    %792 = vmatpush.msra.mxu0 %v718
    %793 = vmatpush.msra.mxu0 %v714
    %794 = vmatmul.f32.gmra.mxu0 %v713
    %v795 = vpop.f32.mrf.mxu0
    %v796 = vadd.f32 0.0, %v795
    %797 = vdwg.mxu0
    %798 = vmatpush.msra.mxu0 %v775
    %799 = vmatpush.msra.mxu0 %v771
    %800 = vmatpush.msra.mxu0 %v767
    %801 = vmatpush.msra.mxu0 %v763
    %802 = vmatpush.msra.mxu0 %v759
    %803 = vmatpush.msra.mxu0 %v755
    %804 = vmatpush.msra.mxu0 %v751
    %805 = vmatpush.msra.mxu0 %v747
    %806 = vmatpush.msra.mxu0 %v743
    %807 = vmatpush.msra.mxu0 %v739
    %808 = vmatpush.msra.mxu0 %v735
    %809 = vmatpush.msra.mxu0 %v731
    %810 = vmatpush.msra.mxu0 %v727
    %811 = vmatpush.msra.mxu0 %v723
    %812 = vmatpush.msra.mxu0 %v719
    %813 = vmatpush.msra.mxu0 %v715
    %814 = vmatmul.f32.gmra.mxu0 %v713
    %v815 = vpop.f32.mrf.mxu0
    %v816 = vadd.f32 0.0, %v815
    %817 = vdwg.mxu0
    %818 = vmatpush.msra.mxu0 %v776
    %819 = vmatpush.msra.mxu0 %v772
    %820 = vmatpush.msra.mxu0 %v768
    %821 = vmatpush.msra.mxu0 %v764
    %822 = vmatpush.msra.mxu0 %v760
    %823 = vmatpush.msra.mxu0 %v756
    %824 = vmatpush.msra.mxu0 %v752
    %825 = vmatpush.msra.mxu0 %v748
    %826 = vmatpush.msra.mxu0 %v744
    %827 = vmatpush.msra.mxu0 %v740
    %828 = vmatpush.msra.mxu0 %v736
    %829 = vmatpush.msra.mxu0 %v732
    %830 = vmatpush.msra.mxu0 %v728
    %831 = vmatpush.msra.mxu0 %v724
    %832 = vmatpush.msra.mxu0 %v720
    %833 = vmatpush.msra.mxu0 %v716
    %834 = vmatmul.f32.gmra.mxu0 %v713
    %v835 = vpop.f32.mrf.mxu0
    %v836 = vadd.f32 0.0, %v835
    %837 = vdwg.mxu0
    %838 = vmatpush.msra.mxu0 %v777
    %839 = vmatpush.msra.mxu0 %v773
    %840 = vmatpush.msra.mxu0 %v769
    %841 = vmatpush.msra.mxu0 %v765
    %842 = vmatpush.msra.mxu0 %v761
    %843 = vmatpush.msra.mxu0 %v757
    %844 = vmatpush.msra.mxu0 %v753
    %845 = vmatpush.msra.mxu0 %v749
    %846 = vmatpush.msra.mxu0 %v745
    %847 = vmatpush.msra.mxu0 %v741
    %848 = vmatpush.msra.mxu0 %v737
    %849 = vmatpush.msra.mxu0 %v733
    %850 = vmatpush.msra.mxu0 %v729
    %851 = vmatpush.msra.mxu0 %v725
    %852 = vmatpush.msra.mxu0 %v721
    %853 = vmatpush.msra.mxu0 %v717
    %854 = vmatmul.f32.gmra.mxu0 %v713
    %v855 = vpop.f32.mrf.mxu0
    %v856 = vadd.f32 0.0, %v855
    %857 = vdwg.mxu0
    %v858 = vadd.f32 %v709, %v796
    %v859 = vadd.f32 %v710, %v816
    %v860 = vadd.f32 %v711, %v836
    %v861 = vadd.f32 %v712, %v856
    %v862 = vxor.u32 %v858, 2147483648
    %v863 = vmul.f32 %v862, 1.442695
    %v864 = vpow.pop %v863
    %v865 = vadd.f32 %v864, 1.0
    %v866 = vrcp.pop %v865
    %v867 = vmul.f32 %v865, %v866
    %v868 = vsub.f32 1.0, %v867
    %v869 = vmul.f32 %v866, %v868
    %v870 = vadd.f32 %v866, %v869
    %vm871 = vweird.f32 %v865
    %vm872 = vweird.f32 %v866
    %vm873 = vmor %vm871, %vm872
    %v874 = vsel %vm873, %v866, %v870
    %v875 = vand.u32 2147483647, %v865
    %vm876 = vcmp.eq.f32.partialorder %v875, 8.507059e+37
    %v877 = vand.u32 %v865, 2147483648
    %v878 = vor.u32 1.1754944e-38, %v877
    %v879 = vsel %vm876, %v878, %v874
    %v880 = vmul.f32 1.0, %v879
    %v881 = vxor.u32 %v859, 2147483648
    %v882 = vmul.f32 %v881, 1.442695
    %v883 = vpow.pop %v882
    %v884 = vadd.f32 %v883, 1.0
    %v885 = vrcp.pop %v884
    %v886 = vmul.f32 %v884, %v885
    %v887 = vsub.f32 1.0, %v886
    %v888 = vmul.f32 %v885, %v887
    %v889 = vadd.f32 %v885, %v888
    %vm890 = vweird.f32 %v884
    %vm891 = vweird.f32 %v885
    %vm892 = vmor %vm890, %vm891
    %v893 = vsel %vm892, %v885, %v889
    %v894 = vand.u32 2147483647, %v884
    %vm895 = vcmp.eq.f32.partialorder %v894, 8.507059e+37
    %v896 = vand.u32 %v884, 2147483648
    %v897 = vor.u32 1.1754944e-38, %v896
    %v898 = vsel %vm895, %v897, %v893
    %v899 = vmul.f32 1.0, %v898
    %v900 = vtanh.pop %v860
    %v901 = vxor.u32 %v861, 2147483648
    %v902 = vmul.f32 %v901, 1.442695
    %v903 = vpow.pop %v902
    %v904 = vadd.f32 %v903, 1.0
    %v905 = vrcp.pop %v904
    %v906 = vmul.f32 %v904, %v905
    %v907 = vsub.f32 1.0, %v906
    %v908 = vmul.f32 %v905, %v907
    %v909 = vadd.f32 %v905, %v908
    %vm910 = vweird.f32 %v904
    %vm911 = vweird.f32 %v905
    %vm912 = vmor %vm910, %vm911
    %v913 = vsel %vm912, %v905, %v909
    %v914 = vand.u32 2147483647, %v904
    %vm915 = vcmp.eq.f32.partialorder %v914, 8.507059e+37
    %v916 = vand.u32 %v904, 2147483648
    %v917 = vor.u32 1.1754944e-38, %v916
    %v918 = vsel %vm915, %v917, %v913
    %v919 = vmul.f32 1.0, %v918
    %v920 = vld [vmem:[#allocation3] sm:$0xff]
    %v921 = vmul.f32 %v899, %v920
    %v922 = vmul.f32 %v880, %v900
    %v923 = vadd.f32 %v921, %v922
    %v924 = vtanh.pop %v923
    %v925 = vmul.f32 %v919, %v924
    %926 = vst [vmem:[#allocation2] sm:$0xff] %v925
    %927 = vst [vmem:[#allocation3] sm:$0xff] %v923
    %s928 = scalar_lea.vmem %s4, 24
    %929 = vst [vmem:[%s928] sm:$0xff] %v925
    %s930 = scalar_lea.vmem %s0, 128
    %v931 = vld [vmem:[%s930] sm:$0xff]
    %v932 = vld [vmem:[%s930 + $0x8] sm:$0xff]
    %v933 = vld [vmem:[%s930 + $0x10] sm:$0xff]
    %v934 = vld [vmem:[%s930 + $0x18] sm:$0xff]
    %v935 = vld [vmem:[#allocation2] sm:$0xff]
    %v936 = vld [vmem:[#allocation4] sm:$0xff]
    %v937 = vld [vmem:[#allocation4 + $0x8] sm:$0xff]
    %v938 = vld [vmem:[#allocation4 + $0x10] sm:$0xff]
    %v939 = vld [vmem:[#allocation4 + $0x18] sm:$0xff]
    %v940 = vld [vmem:[#allocation4 + $0x20] sm:$0xff]
    %v941 = vld [vmem:[#allocation4 + $0x28] sm:$0xff]
    %v942 = vld [vmem:[#allocation4 + $0x30] sm:$0xff]
    %v943 = vld [vmem:[#allocation4 + $0x38] sm:$0xff]
    %v944 = vld [vmem:[#allocation4 + $0x40] sm:$0xff]
    %v945 = vld [vmem:[#allocation4 + $0x48] sm:$0xff]
    %v946 = vld [vmem:[#allocation4 + $0x50] sm:$0xff]
    %v947 = vld [vmem:[#allocation4 + $0x58] sm:$0xff]
    %v948 = vld [vmem:[#allocation4 + $0x60] sm:$0xff]
    %v949 = vld [vmem:[#allocation4 + $0x68] sm:$0xff]
    %v950 = vld [vmem:[#allocation4 + $0x70] sm:$0xff]
    %v951 = vld [vmem:[#allocation4 + $0x78] sm:$0xff]
    %v952 = vld [vmem:[#allocation4 + $0x80] sm:$0xff]
    %v953 = vld [vmem:[#allocation4 + $0x88] sm:$0xff]
    %v954 = vld [vmem:[#allocation4 + $0x90] sm:$0xff]
    %v955 = vld [vmem:[#allocation4 + $0x98] sm:$0xff]
    %v956 = vld [vmem:[#allocation4 + $0xa0] sm:$0xff]
    %v957 = vld [vmem:[#allocation4 + $0xa8] sm:$0xff]
    %v958 = vld [vmem:[#allocation4 + $0xb0] sm:$0xff]
    %v959 = vld [vmem:[#allocation4 + $0xb8] sm:$0xff]
    %v960 = vld [vmem:[#allocation4 + $0xc0] sm:$0xff]
    %v961 = vld [vmem:[#allocation4 + $0xc8] sm:$0xff]
    %v962 = vld [vmem:[#allocation4 + $0xd0] sm:$0xff]
    %v963 = vld [vmem:[#allocation4 + $0xd8] sm:$0xff]
    %v964 = vld [vmem:[#allocation4 + $0xe0] sm:$0xff]
    %v965 = vld [vmem:[#allocation4 + $0xe8] sm:$0xff]
    %v966 = vld [vmem:[#allocation4 + $0xf0] sm:$0xff]
    %v967 = vld [vmem:[#allocation4 + $0xf8] sm:$0xff]
    %v968 = vld [vmem:[#allocation4 + $0x100] sm:$0xff]
    %v969 = vld [vmem:[#allocation4 + $0x108] sm:$0xff]
    %v970 = vld [vmem:[#allocation4 + $0x110] sm:$0xff]
    %v971 = vld [vmem:[#allocation4 + $0x118] sm:$0xff]
    %v972 = vld [vmem:[#allocation4 + $0x120] sm:$0xff]
    %v973 = vld [vmem:[#allocation4 + $0x128] sm:$0xff]
    %v974 = vld [vmem:[#allocation4 + $0x130] sm:$0xff]
    %v975 = vld [vmem:[#allocation4 + $0x138] sm:$0xff]
    %v976 = vld [vmem:[#allocation4 + $0x140] sm:$0xff]
    %v977 = vld [vmem:[#allocation4 + $0x148] sm:$0xff]
    %v978 = vld [vmem:[#allocation4 + $0x150] sm:$0xff]
    %v979 = vld [vmem:[#allocation4 + $0x158] sm:$0xff]
    %v980 = vld [vmem:[#allocation4 + $0x160] sm:$0xff]
    %v981 = vld [vmem:[#allocation4 + $0x168] sm:$0xff]
    %v982 = vld [vmem:[#allocation4 + $0x170] sm:$0xff]
    %v983 = vld [vmem:[#allocation4 + $0x178] sm:$0xff]
    %v984 = vld [vmem:[#allocation4 + $0x180] sm:$0xff]
    %v985 = vld [vmem:[#allocation4 + $0x188] sm:$0xff]
    %v986 = vld [vmem:[#allocation4 + $0x190] sm:$0xff]
    %v987 = vld [vmem:[#allocation4 + $0x198] sm:$0xff]
    %v988 = vld [vmem:[#allocation4 + $0x1a0] sm:$0xff]
    %v989 = vld [vmem:[#allocation4 + $0x1a8] sm:$0xff]
    %v990 = vld [vmem:[#allocation4 + $0x1b0] sm:$0xff]
    %v991 = vld [vmem:[#allocation4 + $0x1b8] sm:$0xff]
    %v992 = vld [vmem:[#allocation4 + $0x1c0] sm:$0xff]
    %v993 = vld [vmem:[#allocation4 + $0x1c8] sm:$0xff]
    %v994 = vld [vmem:[#allocation4 + $0x1d0] sm:$0xff]
    %v995 = vld [vmem:[#allocation4 + $0x1d8] sm:$0xff]
    %v996 = vld [vmem:[#allocation4 + $0x1e0] sm:$0xff]
    %v997 = vld [vmem:[#allocation4 + $0x1e8] sm:$0xff]
    %v998 = vld [vmem:[#allocation4 + $0x1f0] sm:$0xff]
    %v999 = vld [vmem:[#allocation4 + $0x1f8] sm:$0xff]
    %1000 = vmatpush.msra.mxu0 %v996
    %1001 = vmatpush.msra.mxu0 %v992
    %1002 = vmatpush.msra.mxu0 %v988
    %1003 = vmatpush.msra.mxu0 %v984
    %1004 = vmatpush.msra.mxu0 %v980
    %1005 = vmatpush.msra.mxu0 %v976
    %1006 = vmatpush.msra.mxu0 %v972
    %1007 = vmatpush.msra.mxu0 %v968
    %1008 = vmatpush.msra.mxu0 %v964
    %1009 = vmatpush.msra.mxu0 %v960
    %1010 = vmatpush.msra.mxu0 %v956
    %1011 = vmatpush.msra.mxu0 %v952
    %1012 = vmatpush.msra.mxu0 %v948
    %1013 = vmatpush.msra.mxu0 %v944
    %1014 = vmatpush.msra.mxu0 %v940
    %1015 = vmatpush.msra.mxu0 %v936
    %1016 = vmatmul.f32.gmra.mxu0 %v935
    %v1017 = vpop.f32.mrf.mxu0
    %v1018 = vadd.f32 0.0, %v1017
    %1019 = vdwg.mxu0
    %1020 = vmatpush.msra.mxu0 %v997
    %1021 = vmatpush.msra.mxu0 %v993
    %1022 = vmatpush.msra.mxu0 %v989
    %1023 = vmatpush.msra.mxu0 %v985
    %1024 = vmatpush.msra.mxu0 %v981
    %1025 = vmatpush.msra.mxu0 %v977
    %1026 = vmatpush.msra.mxu0 %v973
    %1027 = vmatpush.msra.mxu0 %v969
    %1028 = vmatpush.msra.mxu0 %v965
    %1029 = vmatpush.msra.mxu0 %v961
    %1030 = vmatpush.msra.mxu0 %v957
    %1031 = vmatpush.msra.mxu0 %v953
    %1032 = vmatpush.msra.mxu0 %v949
    %1033 = vmatpush.msra.mxu0 %v945
    %1034 = vmatpush.msra.mxu0 %v941
    %1035 = vmatpush.msra.mxu0 %v937
    %1036 = vmatmul.f32.gmra.mxu0 %v935
    %v1037 = vpop.f32.mrf.mxu0
    %v1038 = vadd.f32 0.0, %v1037
    %1039 = vdwg.mxu0
    %1040 = vmatpush.msra.mxu0 %v998
    %1041 = vmatpush.msra.mxu0 %v994
    %1042 = vmatpush.msra.mxu0 %v990
    %1043 = vmatpush.msra.mxu0 %v986
    %1044 = vmatpush.msra.mxu0 %v982
    %1045 = vmatpush.msra.mxu0 %v978
    %1046 = vmatpush.msra.mxu0 %v974
    %1047 = vmatpush.msra.mxu0 %v970
    %1048 = vmatpush.msra.mxu0 %v966
    %1049 = vmatpush.msra.mxu0 %v962
    %1050 = vmatpush.msra.mxu0 %v958
    %1051 = vmatpush.msra.mxu0 %v954
    %1052 = vmatpush.msra.mxu0 %v950
    %1053 = vmatpush.msra.mxu0 %v946
    %1054 = vmatpush.msra.mxu0 %v942
    %1055 = vmatpush.msra.mxu0 %v938
    %1056 = vmatmul.f32.gmra.mxu0 %v935
    %v1057 = vpop.f32.mrf.mxu0
    %v1058 = vadd.f32 0.0, %v1057
    %1059 = vdwg.mxu0
    %1060 = vmatpush.msra.mxu0 %v999
    %1061 = vmatpush.msra.mxu0 %v995
    %1062 = vmatpush.msra.mxu0 %v991
    %1063 = vmatpush.msra.mxu0 %v987
    %1064 = vmatpush.msra.mxu0 %v983
    %1065 = vmatpush.msra.mxu0 %v979
    %1066 = vmatpush.msra.mxu0 %v975
    %1067 = vmatpush.msra.mxu0 %v971
    %1068 = vmatpush.msra.mxu0 %v967
    %1069 = vmatpush.msra.mxu0 %v963
    %1070 = vmatpush.msra.mxu0 %v959
    %1071 = vmatpush.msra.mxu0 %v955
    %1072 = vmatpush.msra.mxu0 %v951
    %1073 = vmatpush.msra.mxu0 %v947
    %1074 = vmatpush.msra.mxu0 %v943
    %1075 = vmatpush.msra.mxu0 %v939
    %1076 = vmatmul.f32.gmra.mxu0 %v935
    %v1077 = vpop.f32.mrf.mxu0
    %v1078 = vadd.f32 0.0, %v1077
    %1079 = vdwg.mxu0
    %v1080 = vadd.f32 %v931, %v1018
    %v1081 = vadd.f32 %v932, %v1038
    %v1082 = vadd.f32 %v933, %v1058
    %v1083 = vadd.f32 %v934, %v1078
    %v1084 = vxor.u32 %v1080, 2147483648
    %v1085 = vmul.f32 %v1084, 1.442695
    %v1086 = vpow.pop %v1085
    %v1087 = vadd.f32 %v1086, 1.0
    %v1088 = vrcp.pop %v1087
    %v1089 = vmul.f32 %v1087, %v1088
    %v1090 = vsub.f32 1.0, %v1089
    %v1091 = vmul.f32 %v1088, %v1090
    %v1092 = vadd.f32 %v1088, %v1091
    %vm1093 = vweird.f32 %v1087
    %vm1094 = vweird.f32 %v1088
    %vm1095 = vmor %vm1093, %vm1094
    %v1096 = vsel %vm1095, %v1088, %v1092
    %v1097 = vand.u32 2147483647, %v1087
    %vm1098 = vcmp.eq.f32.partialorder %v1097, 8.507059e+37
    %v1099 = vand.u32 %v1087, 2147483648
    %v1100 = vor.u32 1.1754944e-38, %v1099
    %v1101 = vsel %vm1098, %v1100, %v1096
    %v1102 = vmul.f32 1.0, %v1101
    %v1103 = vxor.u32 %v1081, 2147483648
    %v1104 = vmul.f32 %v1103, 1.442695
    %v1105 = vpow.pop %v1104
    %v1106 = vadd.f32 %v1105, 1.0
    %v1107 = vrcp.pop %v1106
    %v1108 = vmul.f32 %v1106, %v1107
    %v1109 = vsub.f32 1.0, %v1108
    %v1110 = vmul.f32 %v1107, %v1109
    %v1111 = vadd.f32 %v1107, %v1110
    %vm1112 = vweird.f32 %v1106
    %vm1113 = vweird.f32 %v1107
    %vm1114 = vmor %vm1112, %vm1113
    %v1115 = vsel %vm1114, %v1107, %v1111
    %v1116 = vand.u32 2147483647, %v1106
    %vm1117 = vcmp.eq.f32.partialorder %v1116, 8.507059e+37
    %v1118 = vand.u32 %v1106, 2147483648
    %v1119 = vor.u32 1.1754944e-38, %v1118
    %v1120 = vsel %vm1117, %v1119, %v1115
    %v1121 = vmul.f32 1.0, %v1120
    %v1122 = vtanh.pop %v1082
    %v1123 = vxor.u32 %v1083, 2147483648
    %v1124 = vmul.f32 %v1123, 1.442695
    %v1125 = vpow.pop %v1124
    %v1126 = vadd.f32 %v1125, 1.0
    %v1127 = vrcp.pop %v1126
    %v1128 = vmul.f32 %v1126, %v1127
    %v1129 = vsub.f32 1.0, %v1128
    %v1130 = vmul.f32 %v1127, %v1129
    %v1131 = vadd.f32 %v1127, %v1130
    %vm1132 = vweird.f32 %v1126
    %vm1133 = vweird.f32 %v1127
    %vm1134 = vmor %vm1132, %vm1133
    %v1135 = vsel %vm1134, %v1127, %v1131
    %v1136 = vand.u32 2147483647, %v1126
    %vm1137 = vcmp.eq.f32.partialorder %v1136, 8.507059e+37
    %v1138 = vand.u32 %v1126, 2147483648
    %v1139 = vor.u32 1.1754944e-38, %v1138
    %v1140 = vsel %vm1137, %v1139, %v1135
    %v1141 = vmul.f32 1.0, %v1140
    %v1142 = vld [vmem:[#allocation3] sm:$0xff]
    %v1143 = vmul.f32 %v1121, %v1142
    %v1144 = vmul.f32 %v1102, %v1122
    %v1145 = vadd.f32 %v1143, %v1144
    %v1146 = vtanh.pop %v1145
    %v1147 = vmul.f32 %v1141, %v1146
    %1148 = vst [vmem:[#allocation2] sm:$0xff] %v1147
    %1149 = vst [vmem:[#allocation3] sm:$0xff] %v1145
    %s1150 = scalar_lea.vmem %s4, 32
    %1151 = vst [vmem:[%s1150] sm:$0xff] %v1147
    %s1152 = scalar_lea.vmem %s0, 160
    %v1153 = vld [vmem:[%s1152] sm:$0xff]
    %v1154 = vld [vmem:[%s1152 + $0x8] sm:$0xff]
    %v1155 = vld [vmem:[%s1152 + $0x10] sm:$0xff]
    %v1156 = vld [vmem:[%s1152 + $0x18] sm:$0xff]
    %v1157 = vld [vmem:[#allocation2] sm:$0xff]
    %v1158 = vld [vmem:[#allocation4] sm:$0xff]
    %v1159 = vld [vmem:[#allocation4 + $0x8] sm:$0xff]
    %v1160 = vld [vmem:[#allocation4 + $0x10] sm:$0xff]
    %v1161 = vld [vmem:[#allocation4 + $0x18] sm:$0xff]
    %v1162 = vld [vmem:[#allocation4 + $0x20] sm:$0xff]
    %v1163 = vld [vmem:[#allocation4 + $0x28] sm:$0xff]
    %v1164 = vld [vmem:[#allocation4 + $0x30] sm:$0xff]
    %v1165 = vld [vmem:[#allocation4 + $0x38] sm:$0xff]
    %v1166 = vld [vmem:[#allocation4 + $0x40] sm:$0xff]
    %v1167 = vld [vmem:[#allocation4 + $0x48] sm:$0xff]
    %v1168 = vld [vmem:[#allocation4 + $0x50] sm:$0xff]
    %v1169 = vld [vmem:[#allocation4 + $0x58] sm:$0xff]
    %v1170 = vld [vmem:[#allocation4 + $0x60] sm:$0xff]
    %v1171 = vld [vmem:[#allocation4 + $0x68] sm:$0xff]
    %v1172 = vld [vmem:[#allocation4 + $0x70] sm:$0xff]
    %v1173 = vld [vmem:[#allocation4 + $0x78] sm:$0xff]
    %v1174 = vld [vmem:[#allocation4 + $0x80] sm:$0xff]
    %v1175 = vld [vmem:[#allocation4 + $0x88] sm:$0xff]
    %v1176 = vld [vmem:[#allocation4 + $0x90] sm:$0xff]
    %v1177 = vld [vmem:[#allocation4 + $0x98] sm:$0xff]
    %v1178 = vld [vmem:[#allocation4 + $0xa0] sm:$0xff]
    %v1179 = vld [vmem:[#allocation4 + $0xa8] sm:$0xff]
    %v1180 = vld [vmem:[#allocation4 + $0xb0] sm:$0xff]
    %v1181 = vld [vmem:[#allocation4 + $0xb8] sm:$0xff]
    %v1182 = vld [vmem:[#allocation4 + $0xc0] sm:$0xff]
    %v1183 = vld [vmem:[#allocation4 + $0xc8] sm:$0xff]
    %v1184 = vld [vmem:[#allocation4 + $0xd0] sm:$0xff]
    %v1185 = vld [vmem:[#allocation4 + $0xd8] sm:$0xff]
    %v1186 = vld [vmem:[#allocation4 + $0xe0] sm:$0xff]
    %v1187 = vld [vmem:[#allocation4 + $0xe8] sm:$0xff]
    %v1188 = vld [vmem:[#allocation4 + $0xf0] sm:$0xff]
    %v1189 = vld [vmem:[#allocation4 + $0xf8] sm:$0xff]
    %v1190 = vld [vmem:[#allocation4 + $0x100] sm:$0xff]
    %v1191 = vld [vmem:[#allocation4 + $0x108] sm:$0xff]
    %v1192 = vld [vmem:[#allocation4 + $0x110] sm:$0xff]
    %v1193 = vld [vmem:[#allocation4 + $0x118] sm:$0xff]
    %v1194 = vld [vmem:[#allocation4 + $0x120] sm:$0xff]
    %v1195 = vld [vmem:[#allocation4 + $0x128] sm:$0xff]
    %v1196 = vld [vmem:[#allocation4 + $0x130] sm:$0xff]
    %v1197 = vld [vmem:[#allocation4 + $0x138] sm:$0xff]
    %v1198 = vld [vmem:[#allocation4 + $0x140] sm:$0xff]
    %v1199 = vld [vmem:[#allocation4 + $0x148] sm:$0xff]
    %v1200 = vld [vmem:[#allocation4 + $0x150] sm:$0xff]
    %v1201 = vld [vmem:[#allocation4 + $0x158] sm:$0xff]
    %v1202 = vld [vmem:[#allocation4 + $0x160] sm:$0xff]
    %v1203 = vld [vmem:[#allocation4 + $0x168] sm:$0xff]
    %v1204 = vld [vmem:[#allocation4 + $0x170] sm:$0xff]
    %v1205 = vld [vmem:[#allocation4 + $0x178] sm:$0xff]
    %v1206 = vld [vmem:[#allocation4 + $0x180] sm:$0xff]
    %v1207 = vld [vmem:[#allocation4 + $0x188] sm:$0xff]
    %v1208 = vld [vmem:[#allocation4 + $0x190] sm:$0xff]
    %v1209 = vld [vmem:[#allocation4 + $0x198] sm:$0xff]
    %v1210 = vld [vmem:[#allocation4 + $0x1a0] sm:$0xff]
    %v1211 = vld [vmem:[#allocation4 + $0x1a8] sm:$0xff]
    %v1212 = vld [vmem:[#allocation4 + $0x1b0] sm:$0xff]
    %v1213 = vld [vmem:[#allocation4 + $0x1b8] sm:$0xff]
    %v1214 = vld [vmem:[#allocation4 + $0x1c0] sm:$0xff]
    %v1215 = vld [vmem:[#allocation4 + $0x1c8] sm:$0xff]
    %v1216 = vld [vmem:[#allocation4 + $0x1d0] sm:$0xff]
    %v1217 = vld [vmem:[#allocation4 + $0x1d8] sm:$0xff]
    %v1218 = vld [vmem:[#allocation4 + $0x1e0] sm:$0xff]
    %v1219 = vld [vmem:[#allocation4 + $0x1e8] sm:$0xff]
    %v1220 = vld [vmem:[#allocation4 + $0x1f0] sm:$0xff]
    %v1221 = vld [vmem:[#allocation4 + $0x1f8] sm:$0xff]
    %1222 = vmatpush.msra.mxu0 %v1218
    %1223 = vmatpush.msra.mxu0 %v1214
    %1224 = vmatpush.msra.mxu0 %v1210
    %1225 = vmatpush.msra.mxu0 %v1206
    %1226 = vmatpush.msra.mxu0 %v1202
    %1227 = vmatpush.msra.mxu0 %v1198
    %1228 = vmatpush.msra.mxu0 %v1194
    %1229 = vmatpush.msra.mxu0 %v1190
    %1230 = vmatpush.msra.mxu0 %v1186
    %1231 = vmatpush.msra.mxu0 %v1182
    %1232 = vmatpush.msra.mxu0 %v1178
    %1233 = vmatpush.msra.mxu0 %v1174
    %1234 = vmatpush.msra.mxu0 %v1170
    %1235 = vmatpush.msra.mxu0 %v1166
    %1236 = vmatpush.msra.mxu0 %v1162
    %1237 = vmatpush.msra.mxu0 %v1158
    %1238 = vmatmul.f32.gmra.mxu0 %v1157
    %v1239 = vpop.f32.mrf.mxu0
    %v1240 = vadd.f32 0.0, %v1239
    %1241 = vdwg.mxu0
    %1242 = vmatpush.msra.mxu0 %v1219
    %1243 = vmatpush.msra.mxu0 %v1215
    %1244 = vmatpush.msra.mxu0 %v1211
    %1245 = vmatpush.msra.mxu0 %v1207
    %1246 = vmatpush.msra.mxu0 %v1203
    %1247 = vmatpush.msra.mxu0 %v1199
    %1248 = vmatpush.msra.mxu0 %v1195
    %1249 = vmatpush.msra.mxu0 %v1191
    %1250 = vmatpush.msra.mxu0 %v1187
    %1251 = vmatpush.msra.mxu0 %v1183
    %1252 = vmatpush.msra.mxu0 %v1179
    %1253 = vmatpush.msra.mxu0 %v1175
    %1254 = vmatpush.msra.mxu0 %v1171
    %1255 = vmatpush.msra.mxu0 %v1167
    %1256 = vmatpush.msra.mxu0 %v1163
    %1257 = vmatpush.msra.mxu0 %v1159
    %1258 = vmatmul.f32.gmra.mxu0 %v1157
    %v1259 = vpop.f32.mrf.mxu0
    %v1260 = vadd.f32 0.0, %v1259
    %1261 = vdwg.mxu0
    %1262 = vmatpush.msra.mxu0 %v1220
    %1263 = vmatpush.msra.mxu0 %v1216
    %1264 = vmatpush.msra.mxu0 %v1212
    %1265 = vmatpush.msra.mxu0 %v1208
    %1266 = vmatpush.msra.mxu0 %v1204
    %1267 = vmatpush.msra.mxu0 %v1200
    %1268 = vmatpush.msra.mxu0 %v1196
    %1269 = vmatpush.msra.mxu0 %v1192
    %1270 = vmatpush.msra.mxu0 %v1188
    %1271 = vmatpush.msra.mxu0 %v1184
    %1272 = vmatpush.msra.mxu0 %v1180
    %1273 = vmatpush.msra.mxu0 %v1176
    %1274 = vmatpush.msra.mxu0 %v1172
    %1275 = vmatpush.msra.mxu0 %v1168
    %1276 = vmatpush.msra.mxu0 %v1164
    %1277 = vmatpush.msra.mxu0 %v1160
    %1278 = vmatmul.f32.gmra.mxu0 %v1157
    %v1279 = vpop.f32.mrf.mxu0
    %v1280 = vadd.f32 0.0, %v1279
    %1281 = vdwg.mxu0
    %1282 = vmatpush.msra.mxu0 %v1221
    %1283 = vmatpush.msra.mxu0 %v1217
    %1284 = vmatpush.msra.mxu0 %v1213
    %1285 = vmatpush.msra.mxu0 %v1209
    %1286 = vmatpush.msra.mxu0 %v1205
    %1287 = vmatpush.msra.mxu0 %v1201
    %1288 = vmatpush.msra.mxu0 %v1197
    %1289 = vmatpush.msra.mxu0 %v1193
    %1290 = vmatpush.msra.mxu0 %v1189
    %1291 = vmatpush.msra.mxu0 %v1185
    %1292 = vmatpush.msra.mxu0 %v1181
    %1293 = vmatpush.msra.mxu0 %v1177
    %1294 = vmatpush.msra.mxu0 %v1173
    %1295 = vmatpush.msra.mxu0 %v1169
    %1296 = vmatpush.msra.mxu0 %v1165
    %1297 = vmatpush.msra.mxu0 %v1161
    %1298 = vmatmul.f32.gmra.mxu0 %v1157
    %v1299 = vpop.f32.mrf.mxu0
    %v1300 = vadd.f32 0.0, %v1299
    %1301 = vdwg.mxu0
    %v1302 = vadd.f32 %v1153, %v1240
    %v1303 = vadd.f32 %v1154, %v1260
    %v1304 = vadd.f32 %v1155, %v1280
    %v1305 = vadd.f32 %v1156, %v1300
    %v1306 = vxor.u32 %v1302, 2147483648
    %v1307 = vmul.f32 %v1306, 1.442695
    %v1308 = vpow.pop %v1307
    %v1309 = vadd.f32 %v1308, 1.0
    %v1310 = vrcp.pop %v1309
    %v1311 = vmul.f32 %v1309, %v1310
    %v1312 = vsub.f32 1.0, %v1311
    %v1313 = vmul.f32 %v1310, %v1312
    %v1314 = vadd.f32 %v1310, %v1313
    %vm1315 = vweird.f32 %v1309
    %vm1316 = vweird.f32 %v1310
    %vm1317 = vmor %vm1315, %vm1316
    %v1318 = vsel %vm1317, %v1310, %v1314
    %v1319 = vand.u32 2147483647, %v1309
    %vm1320 = vcmp.eq.f32.partialorder %v1319, 8.507059e+37
    %v1321 = vand.u32 %v1309, 2147483648
    %v1322 = vor.u32 1.1754944e-38, %v1321
    %v1323 = vsel %vm1320, %v1322, %v1318
    %v1324 = vmul.f32 1.0, %v1323
    %v1325 = vxor.u32 %v1303, 2147483648
    %v1326 = vmul.f32 %v1325, 1.442695
    %v1327 = vpow.pop %v1326
    %v1328 = vadd.f32 %v1327, 1.0
    %v1329 = vrcp.pop %v1328
    %v1330 = vmul.f32 %v1328, %v1329
    %v1331 = vsub.f32 1.0, %v1330
    %v1332 = vmul.f32 %v1329, %v1331
    %v1333 = vadd.f32 %v1329, %v1332
    %vm1334 = vweird.f32 %v1328
    %vm1335 = vweird.f32 %v1329
    %vm1336 = vmor %vm1334, %vm1335
    %v1337 = vsel %vm1336, %v1329, %v1333
    %v1338 = vand.u32 2147483647, %v1328
    %vm1339 = vcmp.eq.f32.partialorder %v1338, 8.507059e+37
    %v1340 = vand.u32 %v1328, 2147483648
    %v1341 = vor.u32 1.1754944e-38, %v1340
    %v1342 = vsel %vm1339, %v1341, %v1337
    %v1343 = vmul.f32 1.0, %v1342
    %v1344 = vtanh.pop %v1304
    %v1345 = vxor.u32 %v1305, 2147483648
    %v1346 = vmul.f32 %v1345, 1.442695
    %v1347 = vpow.pop %v1346
    %v1348 = vadd.f32 %v1347, 1.0
    %v1349 = vrcp.pop %v1348
    %v1350 = vmul.f32 %v1348, %v1349
    %v1351 = vsub.f32 1.0, %v1350
    %v1352 = vmul.f32 %v1349, %v1351
    %v1353 = vadd.f32 %v1349, %v1352
    %vm1354 = vweird.f32 %v1348
    %vm1355 = vweird.f32 %v1349
    %vm1356 = vmor %vm1354, %vm1355
    %v1357 = vsel %vm1356, %v1349, %v1353
    %v1358 = vand.u32 2147483647, %v1348
    %vm1359 = vcmp.eq.f32.partialorder %v1358, 8.507059e+37
    %v1360 = vand.u32 %v1348, 2147483648
    %v1361 = vor.u32 1.1754944e-38, %v1360
    %v1362 = vsel %vm1359, %v1361, %v1357
    %v1363 = vmul.f32 1.0, %v1362
    %v1364 = vld [vmem:[#allocation3] sm:$0xff]
    %v1365 = vmul.f32 %v1343, %v1364
    %v1366 = vmul.f32 %v1324, %v1344
    %v1367 = vadd.f32 %v1365, %v1366
    %v1368 = vtanh.pop %v1367
    %v1369 = vmul.f32 %v1363, %v1368
    %1370 = vst [vmem:[#allocation2] sm:$0xff] %v1369
    %1371 = vst [vmem:[#allocation3] sm:$0xff] %v1367
    %s1372 = scalar_lea.vmem %s4, 40
    %1373 = vst [vmem:[%s1372] sm:$0xff] %v1369
    %s1374 = scalar_lea.vmem %s0, 192
    %v1375 = vld [vmem:[%s1374] sm:$0xff]
    %v1376 = vld [vmem:[%s1374 + $0x8] sm:$0xff]
    %v1377 = vld [vmem:[%s1374 + $0x10] sm:$0xff]
    %v1378 = vld [vmem:[%s1374 + $0x18] sm:$0xff]
    %v1379 = vld [vmem:[#allocation2] sm:$0xff]
    %v1380 = vld [vmem:[#allocation4] sm:$0xff]
    %v1381 = vld [vmem:[#allocation4 + $0x8] sm:$0xff]
    %v1382 = vld [vmem:[#allocation4 + $0x10] sm:$0xff]
    %v1383 = vld [vmem:[#allocation4 + $0x18] sm:$0xff]
    %v1384 = vld [vmem:[#allocation4 + $0x20] sm:$0xff]
    %v1385 = vld [vmem:[#allocation4 + $0x28] sm:$0xff]
    %v1386 = vld [vmem:[#allocation4 + $0x30] sm:$0xff]
    %v1387 = vld [vmem:[#allocation4 + $0x38] sm:$0xff]
    %v1388 = vld [vmem:[#allocation4 + $0x40] sm:$0xff]
    %v1389 = vld [vmem:[#allocation4 + $0x48] sm:$0xff]
    %v1390 = vld [vmem:[#allocation4 + $0x50] sm:$0xff]
    %v1391 = vld [vmem:[#allocation4 + $0x58] sm:$0xff]
    %v1392 = vld [vmem:[#allocation4 + $0x60] sm:$0xff]
    %v1393 = vld [vmem:[#allocation4 + $0x68] sm:$0xff]
    %v1394 = vld [vmem:[#allocation4 + $0x70] sm:$0xff]
    %v1395 = vld [vmem:[#allocation4 + $0x78] sm:$0xff]
    %v1396 = vld [vmem:[#allocation4 + $0x80] sm:$0xff]
    %v1397 = vld [vmem:[#allocation4 + $0x88] sm:$0xff]
    %v1398 = vld [vmem:[#allocation4 + $0x90] sm:$0xff]
    %v1399 = vld [vmem:[#allocation4 + $0x98] sm:$0xff]
    %v1400 = vld [vmem:[#allocation4 + $0xa0] sm:$0xff]
    %v1401 = vld [vmem:[#allocation4 + $0xa8] sm:$0xff]
    %v1402 = vld [vmem:[#allocation4 + $0xb0] sm:$0xff]
    %v1403 = vld [vmem:[#allocation4 + $0xb8] sm:$0xff]
    %v1404 = vld [vmem:[#allocation4 + $0xc0] sm:$0xff]
    %v1405 = vld [vmem:[#allocation4 + $0xc8] sm:$0xff]
    %v1406 = vld [vmem:[#allocation4 + $0xd0] sm:$0xff]
    %v1407 = vld [vmem:[#allocation4 + $0xd8] sm:$0xff]
    %v1408 = vld [vmem:[#allocation4 + $0xe0] sm:$0xff]
    %v1409 = vld [vmem:[#allocation4 + $0xe8] sm:$0xff]
    %v1410 = vld [vmem:[#allocation4 + $0xf0] sm:$0xff]
    %v1411 = vld [vmem:[#allocation4 + $0xf8] sm:$0xff]
    %v1412 = vld [vmem:[#allocation4 + $0x100] sm:$0xff]
    %v1413 = vld [vmem:[#allocation4 + $0x108] sm:$0xff]
    %v1414 = vld [vmem:[#allocation4 + $0x110] sm:$0xff]
    %v1415 = vld [vmem:[#allocation4 + $0x118] sm:$0xff]
    %v1416 = vld [vmem:[#allocation4 + $0x120] sm:$0xff]
    %v1417 = vld [vmem:[#allocation4 + $0x128] sm:$0xff]
    %v1418 = vld [vmem:[#allocation4 + $0x130] sm:$0xff]
    %v1419 = vld [vmem:[#allocation4 + $0x138] sm:$0xff]
    %v1420 = vld [vmem:[#allocation4 + $0x140] sm:$0xff]
    %v1421 = vld [vmem:[#allocation4 + $0x148] sm:$0xff]
    %v1422 = vld [vmem:[#allocation4 + $0x150] sm:$0xff]
    %v1423 = vld [vmem:[#allocation4 + $0x158] sm:$0xff]
    %v1424 = vld [vmem:[#allocation4 + $0x160] sm:$0xff]
    %v1425 = vld [vmem:[#allocation4 + $0x168] sm:$0xff]
    %v1426 = vld [vmem:[#allocation4 + $0x170] sm:$0xff]
    %v1427 = vld [vmem:[#allocation4 + $0x178] sm:$0xff]
    %v1428 = vld [vmem:[#allocation4 + $0x180] sm:$0xff]
    %v1429 = vld [vmem:[#allocation4 + $0x188] sm:$0xff]
    %v1430 = vld [vmem:[#allocation4 + $0x190] sm:$0xff]
    %v1431 = vld [vmem:[#allocation4 + $0x198] sm:$0xff]
    %v1432 = vld [vmem:[#allocation4 + $0x1a0] sm:$0xff]
    %v1433 = vld [vmem:[#allocation4 + $0x1a8] sm:$0xff]
    %v1434 = vld [vmem:[#allocation4 + $0x1b0] sm:$0xff]
    %v1435 = vld [vmem:[#allocation4 + $0x1b8] sm:$0xff]
    %v1436 = vld [vmem:[#allocation4 + $0x1c0] sm:$0xff]
    %v1437 = vld [vmem:[#allocation4 + $0x1c8] sm:$0xff]
    %v1438 = vld [vmem:[#allocation4 + $0x1d0] sm:$0xff]
    %v1439 = vld [vmem:[#allocation4 + $0x1d8] sm:$0xff]
    %v1440 = vld [vmem:[#allocation4 + $0x1e0] sm:$0xff]
    %v1441 = vld [vmem:[#allocation4 + $0x1e8] sm:$0xff]
    %v1442 = vld [vmem:[#allocation4 + $0x1f0] sm:$0xff]
    %v1443 = vld [vmem:[#allocation4 + $0x1f8] sm:$0xff]
    %1444 = vmatpush.msra.mxu0 %v1440
    %1445 = vmatpush.msra.mxu0 %v1436
    %1446 = vmatpush.msra.mxu0 %v1432
    %1447 = vmatpush.msra.mxu0 %v1428
    %1448 = vmatpush.msra.mxu0 %v1424
    %1449 = vmatpush.msra.mxu0 %v1420
    %1450 = vmatpush.msra.mxu0 %v1416
    %1451 = vmatpush.msra.mxu0 %v1412
    %1452 = vmatpush.msra.mxu0 %v1408
    %1453 = vmatpush.msra.mxu0 %v1404
    %1454 = vmatpush.msra.mxu0 %v1400
    %1455 = vmatpush.msra.mxu0 %v1396
    %1456 = vmatpush.msra.mxu0 %v1392
    %1457 = vmatpush.msra.mxu0 %v1388
    %1458 = vmatpush.msra.mxu0 %v1384
    %1459 = vmatpush.msra.mxu0 %v1380
    %1460 = vmatmul.f32.gmra.mxu0 %v1379
    %v1461 = vpop.f32.mrf.mxu0
    %v1462 = vadd.f32 0.0, %v1461
    %1463 = vdwg.mxu0
    %1464 = vmatpush.msra.mxu0 %v1441
    %1465 = vmatpush.msra.mxu0 %v1437
    %1466 = vmatpush.msra.mxu0 %v1433
    %1467 = vmatpush.msra.mxu0 %v1429
    %1468 = vmatpush.msra.mxu0 %v1425
    %1469 = vmatpush.msra.mxu0 %v1421
    %1470 = vmatpush.msra.mxu0 %v1417
    %1471 = vmatpush.msra.mxu0 %v1413
    %1472 = vmatpush.msra.mxu0 %v1409
    %1473 = vmatpush.msra.mxu0 %v1405
    %1474 = vmatpush.msra.mxu0 %v1401
    %1475 = vmatpush.msra.mxu0 %v1397
    %1476 = vmatpush.msra.mxu0 %v1393
    %1477 = vmatpush.msra.mxu0 %v1389
    %1478 = vmatpush.msra.mxu0 %v1385
    %1479 = vmatpush.msra.mxu0 %v1381
    %1480 = vmatmul.f32.gmra.mxu0 %v1379
    %v1481 = vpop.f32.mrf.mxu0
    %v1482 = vadd.f32 0.0, %v1481
    %1483 = vdwg.mxu0
    %1484 = vmatpush.msra.mxu0 %v1442
    %1485 = vmatpush.msra.mxu0 %v1438
    %1486 = vmatpush.msra.mxu0 %v1434
    %1487 = vmatpush.msra.mxu0 %v1430
    %1488 = vmatpush.msra.mxu0 %v1426
    %1489 = vmatpush.msra.mxu0 %v1422
    %1490 = vmatpush.msra.mxu0 %v1418
    %1491 = vmatpush.msra.mxu0 %v1414
    %1492 = vmatpush.msra.mxu0 %v1410
    %1493 = vmatpush.msra.mxu0 %v1406
    %1494 = vmatpush.msra.mxu0 %v1402
    %1495 = vmatpush.msra.mxu0 %v1398
    %1496 = vmatpush.msra.mxu0 %v1394
    %1497 = vmatpush.msra.mxu0 %v1390
    %1498 = vmatpush.msra.mxu0 %v1386
    %1499 = vmatpush.msra.mxu0 %v1382
    %1500 = vmatmul.f32.gmra.mxu0 %v1379
    %v1501 = vpop.f32.mrf.mxu0
    %v1502 = vadd.f32 0.0, %v1501
    %1503 = vdwg.mxu0
    %1504 = vmatpush.msra.mxu0 %v1443
    %1505 = vmatpush.msra.mxu0 %v1439
    %1506 = vmatpush.msra.mxu0 %v1435
    %1507 = vmatpush.msra.mxu0 %v1431
    %1508 = vmatpush.msra.mxu0 %v1427
    %1509 = vmatpush.msra.mxu0 %v1423
    %1510 = vmatpush.msra.mxu0 %v1419
    %1511 = vmatpush.msra.mxu0 %v1415
    %1512 = vmatpush.msra.mxu0 %v1411
    %1513 = vmatpush.msra.mxu0 %v1407
    %1514 = vmatpush.msra.mxu0 %v1403
    %1515 = vmatpush.msra.mxu0 %v1399
    %1516 = vmatpush.msra.mxu0 %v1395
    %1517 = vmatpush.msra.mxu0 %v1391
    %1518 = vmatpush.msra.mxu0 %v1387
    %1519 = vmatpush.msra.mxu0 %v1383
    %1520 = vmatmul.f32.gmra.mxu0 %v1379
    %v1521 = vpop.f32.mrf.mxu0
    %v1522 = vadd.f32 0.0, %v1521
    %1523 = vdwg.mxu0
    %v1524 = vadd.f32 %v1375, %v1462
    %v1525 = vadd.f32 %v1376, %v1482
    %v1526 = vadd.f32 %v1377, %v1502
    %v1527 = vadd.f32 %v1378, %v1522
    %v1528 = vxor.u32 %v1524, 2147483648
    %v1529 = vmul.f32 %v1528, 1.442695
    %v1530 = vpow.pop %v1529
    %v1531 = vadd.f32 %v1530, 1.0
    %v1532 = vrcp.pop %v1531
    %v1533 = vmul.f32 %v1531, %v1532
    %v1534 = vsub.f32 1.0, %v1533
    %v1535 = vmul.f32 %v1532, %v1534
    %v1536 = vadd.f32 %v1532, %v1535
    %vm1537 = vweird.f32 %v1531
    %vm1538 = vweird.f32 %v1532
    %vm1539 = vmor %vm1537, %vm1538
    %v1540 = vsel %vm1539, %v1532, %v1536
    %v1541 = vand.u32 2147483647, %v1531
    %vm1542 = vcmp.eq.f32.partialorder %v1541, 8.507059e+37
    %v1543 = vand.u32 %v1531, 2147483648
    %v1544 = vor.u32 1.1754944e-38, %v1543
    %v1545 = vsel %vm1542, %v1544, %v1540
    %v1546 = vmul.f32 1.0, %v1545
    %v1547 = vxor.u32 %v1525, 2147483648
    %v1548 = vmul.f32 %v1547, 1.442695
    %v1549 = vpow.pop %v1548
    %v1550 = vadd.f32 %v1549, 1.0
    %v1551 = vrcp.pop %v1550
    %v1552 = vmul.f32 %v1550, %v1551
    %v1553 = vsub.f32 1.0, %v1552
    %v1554 = vmul.f32 %v1551, %v1553
    %v1555 = vadd.f32 %v1551, %v1554
    %vm1556 = vweird.f32 %v1550
    %vm1557 = vweird.f32 %v1551
    %vm1558 = vmor %vm1556, %vm1557
    %v1559 = vsel %vm1558, %v1551, %v1555
    %v1560 = vand.u32 2147483647, %v1550
    %vm1561 = vcmp.eq.f32.partialorder %v1560, 8.507059e+37
    %v1562 = vand.u32 %v1550, 2147483648
    %v1563 = vor.u32 1.1754944e-38, %v1562
    %v1564 = vsel %vm1561, %v1563, %v1559
    %v1565 = vmul.f32 1.0, %v1564
    %v1566 = vtanh.pop %v1526
    %v1567 = vxor.u32 %v1527, 2147483648
    %v1568 = vmul.f32 %v1567, 1.442695
    %v1569 = vpow.pop %v1568
    %v1570 = vadd.f32 %v1569, 1.0
    %v1571 = vrcp.pop %v1570
    %v1572 = vmul.f32 %v1570, %v1571
    %v1573 = vsub.f32 1.0, %v1572
    %v1574 = vmul.f32 %v1571, %v1573
    %v1575 = vadd.f32 %v1571, %v1574
    %vm1576 = vweird.f32 %v1570
    %vm1577 = vweird.f32 %v1571
    %vm1578 = vmor %vm1576, %vm1577
    %v1579 = vsel %vm1578, %v1571, %v1575
    %v1580 = vand.u32 2147483647, %v1570
    %vm1581 = vcmp.eq.f32.partialorder %v1580, 8.507059e+37
    %v1582 = vand.u32 %v1570, 2147483648
    %v1583 = vor.u32 1.1754944e-38, %v1582
    %v1584 = vsel %vm1581, %v1583, %v1579
    %v1585 = vmul.f32 1.0, %v1584
    %v1586 = vld [vmem:[#allocation3] sm:$0xff]
    %v1587 = vmul.f32 %v1565, %v1586
    %v1588 = vmul.f32 %v1546, %v1566
    %v1589 = vadd.f32 %v1587, %v1588
    %v1590 = vtanh.pop %v1589
    %v1591 = vmul.f32 %v1585, %v1590
    %1592 = vst [vmem:[#allocation2] sm:$0xff] %v1591
    %1593 = vst [vmem:[#allocation3] sm:$0xff] %v1589
    %s1594 = scalar_lea.vmem %s4, 48
    %1595 = vst [vmem:[%s1594] sm:$0xff] %v1591
    %s1596 = scalar_lea.vmem %s0, 224
    %v1597 = vld [vmem:[%s1596] sm:$0xff]
    %v1598 = vld [vmem:[%s1596 + $0x8] sm:$0xff]
    %v1599 = vld [vmem:[%s1596 + $0x10] sm:$0xff]
    %v1600 = vld [vmem:[%s1596 + $0x18] sm:$0xff]
    %v1601 = vld [vmem:[#allocation2] sm:$0xff]
    %v1602 = vld [vmem:[#allocation4] sm:$0xff]
    %v1603 = vld [vmem:[#allocation4 + $0x8] sm:$0xff]
    %v1604 = vld [vmem:[#allocation4 + $0x10] sm:$0xff]
    %v1605 = vld [vmem:[#allocation4 + $0x18] sm:$0xff]
    %v1606 = vld [vmem:[#allocation4 + $0x20] sm:$0xff]
    %v1607 = vld [vmem:[#allocation4 + $0x28] sm:$0xff]
    %v1608 = vld [vmem:[#allocation4 + $0x30] sm:$0xff]
    %v1609 = vld [vmem:[#allocation4 + $0x38] sm:$0xff]
    %v1610 = vld [vmem:[#allocation4 + $0x40] sm:$0xff]
    %v1611 = vld [vmem:[#allocation4 + $0x48] sm:$0xff]
    %v1612 = vld [vmem:[#allocation4 + $0x50] sm:$0xff]
    %v1613 = vld [vmem:[#allocation4 + $0x58] sm:$0xff]
    %v1614 = vld [vmem:[#allocation4 + $0x60] sm:$0xff]
    %v1615 = vld [vmem:[#allocation4 + $0x68] sm:$0xff]
    %v1616 = vld [vmem:[#allocation4 + $0x70] sm:$0xff]
    %v1617 = vld [vmem:[#allocation4 + $0x78] sm:$0xff]
    %v1618 = vld [vmem:[#allocation4 + $0x80] sm:$0xff]
    %v1619 = vld [vmem:[#allocation4 + $0x88] sm:$0xff]
    %v1620 = vld [vmem:[#allocation4 + $0x90] sm:$0xff]
    %v1621 = vld [vmem:[#allocation4 + $0x98] sm:$0xff]
    %v1622 = vld [vmem:[#allocation4 + $0xa0] sm:$0xff]
    %v1623 = vld [vmem:[#allocation4 + $0xa8] sm:$0xff]
    %v1624 = vld [vmem:[#allocation4 + $0xb0] sm:$0xff]
    %v1625 = vld [vmem:[#allocation4 + $0xb8] sm:$0xff]
    %v1626 = vld [vmem:[#allocation4 + $0xc0] sm:$0xff]
    %v1627 = vld [vmem:[#allocation4 + $0xc8] sm:$0xff]
    %v1628 = vld [vmem:[#allocation4 + $0xd0] sm:$0xff]
    %v1629 = vld [vmem:[#allocation4 + $0xd8] sm:$0xff]
    %v1630 = vld [vmem:[#allocation4 + $0xe0] sm:$0xff]
    %v1631 = vld [vmem:[#allocation4 + $0xe8] sm:$0xff]
    %v1632 = vld [vmem:[#allocation4 + $0xf0] sm:$0xff]
    %v1633 = vld [vmem:[#allocation4 + $0xf8] sm:$0xff]
    %v1634 = vld [vmem:[#allocation4 + $0x100] sm:$0xff]
    %v1635 = vld [vmem:[#allocation4 + $0x108] sm:$0xff]
    %v1636 = vld [vmem:[#allocation4 + $0x110] sm:$0xff]
    %v1637 = vld [vmem:[#allocation4 + $0x118] sm:$0xff]
    %v1638 = vld [vmem:[#allocation4 + $0x120] sm:$0xff]
    %v1639 = vld [vmem:[#allocation4 + $0x128] sm:$0xff]
    %v1640 = vld [vmem:[#allocation4 + $0x130] sm:$0xff]
    %v1641 = vld [vmem:[#allocation4 + $0x138] sm:$0xff]
    %v1642 = vld [vmem:[#allocation4 + $0x140] sm:$0xff]
    %v1643 = vld [vmem:[#allocation4 + $0x148] sm:$0xff]
    %v1644 = vld [vmem:[#allocation4 + $0x150] sm:$0xff]
    %v1645 = vld [vmem:[#allocation4 + $0x158] sm:$0xff]
    %v1646 = vld [vmem:[#allocation4 + $0x160] sm:$0xff]
    %v1647 = vld [vmem:[#allocation4 + $0x168] sm:$0xff]
    %v1648 = vld [vmem:[#allocation4 + $0x170] sm:$0xff]
    %v1649 = vld [vmem:[#allocation4 + $0x178] sm:$0xff]
    %v1650 = vld [vmem:[#allocation4 + $0x180] sm:$0xff]
    %v1651 = vld [vmem:[#allocation4 + $0x188] sm:$0xff]
    %v1652 = vld [vmem:[#allocation4 + $0x190] sm:$0xff]
    %v1653 = vld [vmem:[#allocation4 + $0x198] sm:$0xff]
    %v1654 = vld [vmem:[#allocation4 + $0x1a0] sm:$0xff]
    %v1655 = vld [vmem:[#allocation4 + $0x1a8] sm:$0xff]
    %v1656 = vld [vmem:[#allocation4 + $0x1b0] sm:$0xff]
    %v1657 = vld [vmem:[#allocation4 + $0x1b8] sm:$0xff]
    %v1658 = vld [vmem:[#allocation4 + $0x1c0] sm:$0xff]
    %v1659 = vld [vmem:[#allocation4 + $0x1c8] sm:$0xff]
    %v1660 = vld [vmem:[#allocation4 + $0x1d0] sm:$0xff]
    %v1661 = vld [vmem:[#allocation4 + $0x1d8] sm:$0xff]
    %v1662 = vld [vmem:[#allocation4 + $0x1e0] sm:$0xff]
    %v1663 = vld [vmem:[#allocation4 + $0x1e8] sm:$0xff]
    %v1664 = vld [vmem:[#allocation4 + $0x1f0] sm:$0xff]
    %v1665 = vld [vmem:[#allocation4 + $0x1f8] sm:$0xff]
    %1666 = vmatpush.msra.mxu0 %v1662
    %1667 = vmatpush.msra.mxu0 %v1658
    %1668 = vmatpush.msra.mxu0 %v1654
    %1669 = vmatpush.msra.mxu0 %v1650
    %1670 = vmatpush.msra.mxu0 %v1646
    %1671 = vmatpush.msra.mxu0 %v1642
    %1672 = vmatpush.msra.mxu0 %v1638
    %1673 = vmatpush.msra.mxu0 %v1634
    %1674 = vmatpush.msra.mxu0 %v1630
    %1675 = vmatpush.msra.mxu0 %v1626
    %1676 = vmatpush.msra.mxu0 %v1622
    %1677 = vmatpush.msra.mxu0 %v1618
    %1678 = vmatpush.msra.mxu0 %v1614
    %1679 = vmatpush.msra.mxu0 %v1610
    %1680 = vmatpush.msra.mxu0 %v1606
    %1681 = vmatpush.msra.mxu0 %v1602
    %1682 = vmatmul.f32.gmra.mxu0 %v1601
    %v1683 = vpop.f32.mrf.mxu0
    %v1684 = vadd.f32 0.0, %v1683
    %1685 = vdwg.mxu0
    %1686 = vmatpush.msra.mxu0 %v1663
    %1687 = vmatpush.msra.mxu0 %v1659
    %1688 = vmatpush.msra.mxu0 %v1655
    %1689 = vmatpush.msra.mxu0 %v1651
    %1690 = vmatpush.msra.mxu0 %v1647
    %1691 = vmatpush.msra.mxu0 %v1643
    %1692 = vmatpush.msra.mxu0 %v1639
    %1693 = vmatpush.msra.mxu0 %v1635
    %1694 = vmatpush.msra.mxu0 %v1631
    %1695 = vmatpush.msra.mxu0 %v1627
    %1696 = vmatpush.msra.mxu0 %v1623
    %1697 = vmatpush.msra.mxu0 %v1619
    %1698 = vmatpush.msra.mxu0 %v1615
    %1699 = vmatpush.msra.mxu0 %v1611
    %1700 = vmatpush.msra.mxu0 %v1607
    %1701 = vmatpush.msra.mxu0 %v1603
    %1702 = vmatmul.f32.gmra.mxu0 %v1601
    %v1703 = vpop.f32.mrf.mxu0
    %v1704 = vadd.f32 0.0, %v1703
    %1705 = vdwg.mxu0
    %1706 = vmatpush.msra.mxu0 %v1664
    %1707 = vmatpush.msra.mxu0 %v1660
    %1708 = vmatpush.msra.mxu0 %v1656
    %1709 = vmatpush.msra.mxu0 %v1652
    %1710 = vmatpush.msra.mxu0 %v1648
    %1711 = vmatpush.msra.mxu0 %v1644
    %1712 = vmatpush.msra.mxu0 %v1640
    %1713 = vmatpush.msra.mxu0 %v1636
    %1714 = vmatpush.msra.mxu0 %v1632
    %1715 = vmatpush.msra.mxu0 %v1628
    %1716 = vmatpush.msra.mxu0 %v1624
    %1717 = vmatpush.msra.mxu0 %v1620
    %1718 = vmatpush.msra.mxu0 %v1616
    %1719 = vmatpush.msra.mxu0 %v1612
    %1720 = vmatpush.msra.mxu0 %v1608
    %1721 = vmatpush.msra.mxu0 %v1604
    %1722 = vmatmul.f32.gmra.mxu0 %v1601
    %v1723 = vpop.f32.mrf.mxu0
    %v1724 = vadd.f32 0.0, %v1723
    %1725 = vdwg.mxu0
    %1726 = vmatpush.msra.mxu0 %v1665
    %1727 = vmatpush.msra.mxu0 %v1661
    %1728 = vmatpush.msra.mxu0 %v1657
    %1729 = vmatpush.msra.mxu0 %v1653
    %1730 = vmatpush.msra.mxu0 %v1649
    %1731 = vmatpush.msra.mxu0 %v1645
    %1732 = vmatpush.msra.mxu0 %v1641
    %1733 = vmatpush.msra.mxu0 %v1637
    %1734 = vmatpush.msra.mxu0 %v1633
    %1735 = vmatpush.msra.mxu0 %v1629
    %1736 = vmatpush.msra.mxu0 %v1625
    %1737 = vmatpush.msra.mxu0 %v1621
    %1738 = vmatpush.msra.mxu0 %v1617
    %1739 = vmatpush.msra.mxu0 %v1613
    %1740 = vmatpush.msra.mxu0 %v1609
    %1741 = vmatpush.msra.mxu0 %v1605
    %1742 = vmatmul.f32.gmra.mxu0 %v1601
    %v1743 = vpop.f32.mrf.mxu0
    %v1744 = vadd.f32 0.0, %v1743
    %1745 = vdwg.mxu0
    %v1746 = vadd.f32 %v1597, %v1684
    %v1747 = vadd.f32 %v1598, %v1704
    %v1748 = vadd.f32 %v1599, %v1724
    %v1749 = vadd.f32 %v1600, %v1744
    %v1750 = vxor.u32 %v1746, 2147483648
    %v1751 = vmul.f32 %v1750, 1.442695
    %v1752 = vpow.pop %v1751
    %v1753 = vadd.f32 %v1752, 1.0
    %v1754 = vrcp.pop %v1753
    %v1755 = vmul.f32 %v1753, %v1754
    %v1756 = vsub.f32 1.0, %v1755
    %v1757 = vmul.f32 %v1754, %v1756
    %v1758 = vadd.f32 %v1754, %v1757
    %vm1759 = vweird.f32 %v1753
    %vm1760 = vweird.f32 %v1754
    %vm1761 = vmor %vm1759, %vm1760
    %v1762 = vsel %vm1761, %v1754, %v1758
    %v1763 = vand.u32 2147483647, %v1753
    %vm1764 = vcmp.eq.f32.partialorder %v1763, 8.507059e+37
    %v1765 = vand.u32 %v1753, 2147483648
    %v1766 = vor.u32 1.1754944e-38, %v1765
    %v1767 = vsel %vm1764, %v1766, %v1762
    %v1768 = vmul.f32 1.0, %v1767
    %v1769 = vxor.u32 %v1747, 2147483648
    %v1770 = vmul.f32 %v1769, 1.442695
    %v1771 = vpow.pop %v1770
    %v1772 = vadd.f32 %v1771, 1.0
    %v1773 = vrcp.pop %v1772
    %v1774 = vmul.f32 %v1772, %v1773
    %v1775 = vsub.f32 1.0, %v1774
    %v1776 = vmul.f32 %v1773, %v1775
    %v1777 = vadd.f32 %v1773, %v1776
    %vm1778 = vweird.f32 %v1772
    %vm1779 = vweird.f32 %v1773
    %vm1780 = vmor %vm1778, %vm1779
    %v1781 = vsel %vm1780, %v1773, %v1777
    %v1782 = vand.u32 2147483647, %v1772
    %vm1783 = vcmp.eq.f32.partialorder %v1782, 8.507059e+37
    %v1784 = vand.u32 %v1772, 2147483648
    %v1785 = vor.u32 1.1754944e-38, %v1784
    %v1786 = vsel %vm1783, %v1785, %v1781
    %v1787 = vmul.f32 1.0, %v1786
    %v1788 = vtanh.pop %v1748
    %v1789 = vxor.u32 %v1749, 2147483648
    %v1790 = vmul.f32 %v1789, 1.442695
    %v1791 = vpow.pop %v1790
    %v1792 = vadd.f32 %v1791, 1.0
    %v1793 = vrcp.pop %v1792
    %v1794 = vmul.f32 %v1792, %v1793
    %v1795 = vsub.f32 1.0, %v1794
    %v1796 = vmul.f32 %v1793, %v1795
    %v1797 = vadd.f32 %v1793, %v1796
    %vm1798 = vweird.f32 %v1792
    %vm1799 = vweird.f32 %v1793
    %vm1800 = vmor %vm1798, %vm1799
    %v1801 = vsel %vm1800, %v1793, %v1797
    %v1802 = vand.u32 2147483647, %v1792
    %vm1803 = vcmp.eq.f32.partialorder %v1802, 8.507059e+37
    %v1804 = vand.u32 %v1792, 2147483648
    %v1805 = vor.u32 1.1754944e-38, %v1804
    %v1806 = vsel %vm1803, %v1805, %v1801
    %v1807 = vmul.f32 1.0, %v1806
    %v1808 = vld [vmem:[#allocation3] sm:$0xff]
    %v1809 = vmul.f32 %v1787, %v1808
    %v1810 = vmul.f32 %v1768, %v1788
    %v1811 = vadd.f32 %v1809, %v1810
    %v1812 = vtanh.pop %v1811
    %v1813 = vmul.f32 %v1807, %v1812
    %1814 = vst [vmem:[#allocation2] sm:$0xff] %v1813
    %1815 = vst [vmem:[#allocation3] sm:$0xff] %v1811
    %s1816 = scalar_lea.vmem %s4, 56
    %1817 = vst [vmem:[%s1816] sm:$0xff] %v1813
    // Predicated region
    $region26: #{rnn_forward.8} parent=1 // pred_check
      %p1818 = pneg %p36
    $region27: #{rnn_forward.8} parent=1 // pred_check_branch
      %1820 = sbr.rel (%p1818) target = $region29
    $region28: #{rnn_forward.8} parent=1 // pred_region
      %v1821 = vld [vmem:[#allocation2] sm:$0xff]
      %1822 = vst [vmem:[%s5] sm:$0xff] %v1821
      %v1823 = vld [vmem:[#allocation3] sm:$0xff]
      %1824 = vst [vmem:[%s6] sm:$0xff] %v1823
    $region29: #{rnn_forward.8} parent=1 // pred_fallthru
      _
    // Predicated region
    $region30: #{rnn_forward.8} parent=1 // pred_check
      _
    $region31: #{rnn_forward.8} parent=1 // pred_check_branch
      %1826 = sbr.rel (0) target = $region33
    $region32: #{rnn_forward.8} parent=1 // pred_region
      _
    $region33: #{rnn_forward.8} parent=1 // pred_fallthru
      _
    // Predicated region
    $region34: #{rnn_forward.8} parent=1 // pred_check
      _
    $region35: #{rnn_forward.8} parent=1 // pred_check_branch
      %1828 = sbr.rel (0) target = $region37
    $region36: #{rnn_forward.8} parent=1 // pred_region
      _
    $region37: #{rnn_forward.8} parent=1 // pred_fallthru
      _
    // Predicated region
    $region38: #{rnn_forward.8} parent=1 // pred_check
      _
    $region39: #{rnn_forward.8} parent=1 // pred_check_branch
      %1830 = sbr.rel (0) target = $region41
    $region40: #{rnn_forward.8} parent=1 // pred_region
      _
    $region41: #{rnn_forward.8} parent=1 // pred_fallthru
      _
    // Predicated region
    $region42: #{rnn_forward.8} parent=1 // pred_check
      _
    $region43: #{rnn_forward.8} parent=1 // pred_check_branch
      %1832 = sbr.rel (0) target = $region45
    $region44: #{rnn_forward.8} parent=1 // pred_region
      _
    $region45: #{rnn_forward.8} parent=1 // pred_fallthru
      _
    // Predicated region
    $region46: #{rnn_forward.8} parent=1 // pred_check
      _
    $region47: #{rnn_forward.8} parent=1 // pred_check_branch
      %1834 = sbr.rel (0) target = $region49
    $region48: #{rnn_forward.8} parent=1 // pred_region
      _
    $region49: #{rnn_forward.8} parent=1 // pred_fallthru
      _
    // Predicated region
    $region50: #{rnn_forward.8} parent=1 // pred_check
      _
    $region51: #{rnn_forward.8} parent=1 // pred_check_branch
      %1836 = sbr.rel (0) target = $region53
    $region52: #{rnn_forward.8} parent=1 // pred_region
      _
    $region53: #{rnn_forward.8} parent=1 // pred_fallthru
      _
    %1837 = vsyncpa [#allocation5], 1

</llo_original>
